<compile_context>
chip_gen: v7x
topology: tpu7x:2x2x1
jax: 0.10.0
libtpu: 0.0.40
codegen_flags: <defaults>
</compile_context>

<pallas_src>
import functools
import math

import jax
import jax.numpy as jnp
from jax.experimental import pallas as pl
from jax.experimental.pallas import tpu as pltpu


# ------------------------------ Pallas kernels ------------------------------

def _conv_kernel(x_ref, w_ref, b_ref, o_ref, *, kh, stride, Wo, TM, relu):
    """Implicit-GEMM conv + folded-BN bias (+ ReLU).

    x_ref: (1, stride, Hs*Wo, kw*Cin) bf16 -- full per-image row-gather block
    w_ref: (kh, kw*Cin, Cout)         bf16 -- one weight matrix per H-tap
    b_ref: (1, Cout)                  f32  -- folded BN (+ normalisation) bias
    o_ref: (1, TM, Cout)              bf16
    """
    m0 = pl.program_id(1) * TM
    cout = o_ref.shape[-1]
    acc = jnp.zeros((TM, cout), jnp.float32)
    for i in range(kh):                       # unrolled tap loop (kh <= 7)
        p = i % stride
        q = i // stride
        lhs = x_ref[0, p, pl.ds(m0 + q * Wo, TM), :]
        acc = acc + jnp.dot(lhs, w_ref[i], preferred_element_type=jnp.float32)
    acc = acc + b_ref[...]
    if relu:
        acc = jnp.maximum(acc, 0.0)
    o_ref[0] = acc.astype(o_ref.dtype)


def _conv_res_kernel(x_ref, w_ref, b_ref, r_ref, o_ref, *, kh, stride, Wo, TM, relu):
    """Same as _conv_kernel, plus fused residual add before the final ReLU."""
    m0 = pl.program_id(1) * TM
    cout = o_ref.shape[-1]
    acc = jnp.zeros((TM, cout), jnp.float32)
    for i in range(kh):
        p = i % stride
        q = i // stride
        lhs = x_ref[0, p, pl.ds(m0 + q * Wo, TM), :]
        acc = acc + jnp.dot(lhs, w_ref[i], preferred_element_type=jnp.float32)
    acc = acc + b_ref[...] + r_ref[0].astype(jnp.float32)
    if relu:
        acc = jnp.maximum(acc, 0.0)
    o_ref[0] = acc.astype(o_ref.dtype)


def _maxpool_kernel(x_ref, o_ref, *, kh, kw, stride, Wo, TM):
    """MaxPool(kernel=3, stride=2, pad=1) on the row-gather layout."""
    m0 = pl.program_id(1) * TM
    C = o_ref.shape[-1]
    res = None
    for i in range(kh):
        p = i % stride
        q = i // stride
        v = x_ref[0, p, pl.ds(m0 + q * Wo, TM), :]      # (TM, kw*C)
        t = v[:, 0:C]
        for j in range(1, kw):
            t = jnp.maximum(t, v[:, j * C:(j + 1) * C])
        res = t if res is None else jnp.maximum(res, t)
    o_ref[0] = res


# ------------------------------ glue helpers --------------------------------

def _pick_tm(m, cap=512):
    """Largest tile <= cap dividing m that keeps the (8,128) block rule."""
    if m <= cap:
        return m
    for t in range(cap, 7, -1):
        if m % t == 0 and t % 8 == 0:
            return t
    return m      # fallback: single tile (block == full dim is always legal)


def _build_rows(x, kh, kw, stride, padding, pad_value):
    """Row-gather layout for implicit-GEMM conv / pooling.

    x: (N, H, W, C)  ->  R: (N, stride, Hs*Wo, kw*C) with
       R[n, p, hs*Wo + wo, j*C + c] = xpad[n, hs*stride + p, wo*stride + j, c]
    so H-tap i of output index m = ho*Wo+wo is row m + (i//stride)*Wo of
    phase i % stride.  Only a kw-fold (<=3x) materialisation, no full im2col.
    """
    N, H, W, C = x.shape
    Ho = (H + 2 * padding - kh) // stride + 1
    Wo = (W + 2 * padding - kw) // stride + 1
    if padding > 0:
        x = jnp.pad(x, ((0, 0), (padding, padding), (padding, padding), (0, 0)),
                    constant_values=pad_value)
    Hp, Wp = H + 2 * padding, W + 2 * padding
    assert Hp % stride == 0
    Hs = Hp // stride
    assert (kh - 1) // stride + Ho <= Hs
    assert (kw - 1) + stride * (Wo - 1) <= Wp - 1
    phases = []
    for p in range(stride):
        rows_p = x[:, p::stride, :, :]                               # (N, Hs, Wp, C)
        cols = [rows_p[:, :, j:j + stride * (Wo - 1) + 1:stride, :]
                for j in range(kw)]                                  # kw x (N, Hs, Wo, C)
        phases.append(cols[0] if kw == 1 else jnp.concatenate(cols, axis=-1))
    R = jnp.stack(phases, axis=1)                                    # (N, stride, Hs, Wo, kw*C)
    return R.reshape(N, stride, Hs * Wo, kw * C), Ho, Wo, Hs


def conv_bn(x_flat, hw, w, bn, *, stride, padding, relu,
            residual=None, fold_norm=False):
    """Conv2d(bias=False) + BatchNorm2d(eval) [+ residual] [+ ReLU].

    x_flat: (N, H*W, Cin) bf16.  Returns ((N, Ho*Wo, Cout) bf16, (Ho, Wo)).
    BN scale (and optionally the input normalisation) is folded into the weights.
    """
    N, M, cin_x = x_flat.shape
    H, W = hw
    cout, cin, kh, kw = w.shape
    assert cin == cin_x and M == H * W

    s = bn['gamma'] * jax.lax.rsqrt(bn['var'] + 1e-5)
    w_f = w * s[:, None, None, None]
    b_f = bn['beta'] - bn['mean'] * s
    if fold_norm:
        # conv((x-0.45)/0.225) == conv_{w/0.225}(x padded with 0.45) - 0.45*sum(w/0.225)
        w_f = w_f / 0.225
        b_f = b_f - 0.45 * jnp.sum(w_f, axis=(1, 2, 3))
    wk = jnp.transpose(w_f, (2, 3, 1, 0)).reshape(kh, kw * cin, cout)
    wk = wk.astype(jnp.bfloat16)
    bias = b_f.reshape(1, cout).astype(jnp.float32)

    pad_value = 0.45 if fold_norm else 0.0
    x4 = x_flat.reshape(N, H, W, cin)
    R, Ho, Wo, Hs = _build_rows(x4, kh, kw, stride, padding, pad_value)
    Mout = Ho * Wo
    K = kw * cin
    TM = _pick_tm(Mout)
    grid = (N, Mout // TM)

    in_specs = [
        pl.BlockSpec((1, stride, Hs * Wo, K), lambda n, m: (n, 0, 0, 0)),
        pl.BlockSpec((kh, K, cout), lambda n, m: (0, 0, 0)),
        pl.BlockSpec((1, cout), lambda n, m: (0, 0)),
    ]
    args = [R, wk, bias]
    if residual is not None:
        in_specs.append(pl.BlockSpec((1, TM, cout), lambda n, m: (n, m, 0)))
        args.append(residual)
        kernel = functools.partial(_conv_res_kernel, kh=kh, stride=stride,
                                   Wo=Wo, TM=TM, relu=relu)
    else:
        kernel = functools.partial(_conv_kernel, kh=kh, stride=stride,
                                   Wo=Wo, TM=TM, relu=relu)

    y = pl.pallas_call(
        kernel,
        out_shape=jax.ShapeDtypeStruct((N, Mout, cout), jnp.bfloat16),
        grid=grid,
        in_specs=in_specs,
        out_specs=pl.BlockSpec((1, TM, cout), lambda n, m: (n, m, 0)),
        compiler_params=pltpu.CompilerParams(
            dimension_semantics=("parallel", "parallel")),
    )(*args)
    return y, (Ho, Wo)


def maxpool_3x3_s2(x_flat, hw):
    """MaxPool2d(kernel_size=3, stride=2, padding=1), padding value = -inf."""
    N, M, C = x_flat.shape
    H, W = hw
    x4 = x_flat.reshape(N, H, W, C)
    R, Ho, Wo, Hs = _build_rows(x4, 3, 3, 2, 1, -jnp.inf)
    Mout = Ho * Wo
    TM = _pick_tm(Mout)
    y = pl.pallas_call(
        functools.partial(_maxpool_kernel, kh=3, kw=3, stride=2, Wo=Wo, TM=TM),
        out_shape=jax.ShapeDtypeStruct((N, Mout, C), x_flat.dtype),
        grid=(N, Mout // TM),
        in_specs=[pl.BlockSpec((1, 2, Hs * Wo, 3 * C), lambda n, m: (n, 0, 0, 0))],
        out_specs=pl.BlockSpec((1, TM, C), lambda n, m: (n, m, 0)),
        compiler_params=pltpu.CompilerParams(
            dimension_semantics=("parallel", "parallel")),
    )(R)
    return y, (Ho, Wo)


# ------------------------------- parameters ---------------------------------

def _init_conv(key, cout, cin, kh, kw):
    # kaiming_normal_(mode='fan_out', nonlinearity='relu')
    fan_out = cout * kh * kw
    std = math.sqrt(2.0 / fan_out)
    return std * jax.random.normal(key, (cout, cin, kh, kw), jnp.float32)


def _init_bn(c):
    # nn.init.constant_(weight, 1); constant_(bias, 0); fresh running stats
    return dict(gamma=jnp.ones((c,), jnp.float32),
                beta=jnp.zeros((c,), jnp.float32),
                mean=jnp.zeros((c,), jnp.float32),
                var=jnp.ones((c,), jnp.float32))


def init_params(key, num_rgb_in=1):
    keys = iter(jax.random.split(key, 64))
    params = {}
    params['conv1'] = _init_conv(next(keys), 64, 3 * num_rgb_in, 7, 7)
    params['bn1'] = _init_bn(64)
    layers = []
    inplanes = 64
    # ResNet-18: BasicBlock, [2, 2, 2, 2]
    for planes, layer_stride in [(64, 1), (128, 2), (256, 2), (512, 2)]:
        blocks = []
        for b in range(2):
            stride = layer_stride if b == 0 else 1
            blk = {
                'stride': stride,
                'conv1': _init_conv(next(keys), planes, inplanes, 3, 3),
                'bn1': _init_bn(planes),
                'conv2': _init_conv(next(keys), planes, planes, 3, 3),
                'bn2': _init_bn(planes),
            }
            if stride != 1 or inplanes != planes:
                blk['down_conv'] = _init_conv(next(keys), planes, inplanes, 1, 1)
                blk['down_bn'] = _init_bn(planes)
            blocks.append(blk)
            inplanes = planes
        layers.append(blocks)
    params['layers'] = layers
    return params


# --------------------------------- forward ----------------------------------

def basic_block(x, hw, blk):
    stride = blk['stride']
    if 'down_conv' in blk:
        identity, _ = conv_bn(x, hw, blk['down_conv'], blk['down_bn'],
                              stride=stride, padding=0, relu=False)
    else:
        identity = x
    y, hw1 = conv_bn(x, hw, blk['conv1'], blk['bn1'],
                     stride=stride, padding=1, relu=True)
    y, hw2 = conv_bn(y, hw1, blk['conv2'], blk['bn2'],
                     stride=1, padding=1, relu=True, residual=identity)
    return y, hw2


def resnet_encoder_forward(params, input_image_nchw):
    """Mirrors ResNetEncoder.forward; returns 5 NCHW float32 feature maps."""
    x = jnp.transpose(input_image_nchw, (0, 2, 3, 1)).astype(jnp.bfloat16)
    N, H, W, C = x.shape
    x_flat = x.reshape(N, H * W, C)
    # conv1 + bn1 + relu, with (x - 0.45) / 0.225 folded into the weights/bias
    f, hw = conv_bn(x_flat, (H, W), params['conv1'], params['bn1'],
                    stride=2, padding=3, relu=True, fold_norm=True)
    feats = [(f, hw)]
    y, hw = maxpool_3x3_s2(f, hw)
    for blocks in params['layers']:                    # layer1 .. layer4
        for blk in blocks:
            y, hw = basic_block(y, hw, blk)
        feats.append((y, hw))
    outs = []
    for f, (h, w) in feats:
        c = f.shape[-1]
        outs.append(jnp.transpose(f.reshape(N, h, w, c), (0, 3, 1, 2))
                    .astype(jnp.float32))
    return outs


# ----------------------------------- main ------------------------------------

if __name__ == "__main__":
    key = jax.random.PRNGKey(0)
    k_params, k_x = jax.random.split(key)
    params = init_params(k_params, num_rgb_in=1)
    # small deterministic input: batch=2, 3 RGB channels, 64x64 spatial
    x = jax.random.uniform(k_x, (2, 3, 64, 64), jnp.float32)

    feats = resnet_encoder_forward(params, x)
    for f in feats:
        jax.block_until_ready(f)

    expected = [(2, 64, 32, 32), (2, 64, 16, 16), (2, 128, 8, 8),
                (2, 256, 4, 4), (2, 512, 2, 2)]
    got = [tuple(f.shape) for f in feats]
    assert got == expected, got
    assert all(bool(jnp.isfinite(f).all()) for f in feats)
    print("KERNEL_OK")
</pallas_src>

<mosaic_0001>
module attributes {stable_mosaic.version = 11 : i64} {
  func.func @_conv_kernel(%arg0: i32, %arg1: i32, %arg2: memref<1x2x1120x21xbf16, #tpu.memory_space<vmem>>, %arg3: memref<7x21x64xbf16, #tpu.memory_space<vmem>>, %arg4: memref<1x64xf32, #tpu.memory_space<vmem>>, %arg5: memref<1x512x64xbf16, #tpu.memory_space<vmem>>) attributes {dimension_semantics = [#tpu.dimension_semantics<parallel>, #tpu.dimension_semantics<parallel>], iteration_bounds = array<i64: 2, 2>, scalar_prefetch = 0 : i64, scratch_operands = 0 : i64, tpu.core_type = #tpu.core_type<tc>, window_params = [{transform_indices = @transform_0, window_bounds = array<i64: 1, 2, 1120, 21>}, {pipeline_mode = #tpu.pipeline_mode<synchronous>, transform_indices = @transform_1, window_bounds = array<i64: 7, 21, 64>}, {pipeline_mode = #tpu.pipeline_mode<synchronous>, transform_indices = @transform_2, window_bounds = array<i64: 1, 64>}, {transform_indices = @transform_3, window_bounds = array<i64: 1, 512, 64>}]} {
    %c512_i32 = arith.constant 512 : i32
    %0 = arith.muli %arg1, %c512_i32 : i32
    %cst = arith.constant 0.000000e+00 : f32
    %1 = vector.broadcast %cst : f32 to vector<512x64xf32>
    %c0_i32 = arith.constant 0 : i32
    %2 = arith.addi %0, %c0_i32 : i32
    %c0 = arith.constant 0 : index
    %c0_0 = arith.constant 0 : index
    %3 = arith.index_cast %2 : i32 to index
    %c0_1 = arith.constant 0 : index
    %4 = vector.load %arg2[%c0, %c0_0, %3, %c0_1] : memref<1x2x1120x21xbf16, #tpu.memory_space<vmem>>, vector<1x1x512x21xbf16>
    %5 = vector.shape_cast %4 : vector<1x1x512x21xbf16> to vector<512x21xbf16>
    %c0_2 = arith.constant 0 : index
    %c0_3 = arith.constant 0 : index
    %c0_4 = arith.constant 0 : index
    %6 = vector.load %arg3[%c0_2, %c0_3, %c0_4] : memref<7x21x64xbf16, #tpu.memory_space<vmem>>, vector<1x21x64xbf16>
    %7 = vector.shape_cast %6 : vector<1x21x64xbf16> to vector<21x64xbf16>
    %cst_5 = arith.constant dense<0.000000e+00> : vector<512x64xf32>
    %8 = tpu.matmul %5, %7, %cst_5 {dimension_numbers = #tpu.dot_dimension_numbers<[1], [0], [0], [1], [0, 0, 1, 1], [], []>} : vector<512x21xbf16>, vector<21x64xbf16>, vector<512x64xf32> -> vector<512x64xf32>
    %9 = arith.addf %1, %8 : vector<512x64xf32>
    %c0_i32_6 = arith.constant 0 : i32
    %10 = arith.addi %0, %c0_i32_6 : i32
    %c0_7 = arith.constant 0 : index
    %c1 = arith.constant 1 : index
    %11 = arith.index_cast %10 : i32 to index
    %c0_8 = arith.constant 0 : index
    %12 = vector.load %arg2[%c0_7, %c1, %11, %c0_8] : memref<1x2x1120x21xbf16, #tpu.memory_space<vmem>>, vector<1x1x512x21xbf16>
    %13 = vector.shape_cast %12 : vector<1x1x512x21xbf16> to vector<512x21xbf16>
    %c1_9 = arith.constant 1 : index
    %c0_10 = arith.constant 0 : index
    %c0_11 = arith.constant 0 : index
    %14 = vector.load %arg3[%c1_9, %c0_10, %c0_11] : memref<7x21x64xbf16, #tpu.memory_space<vmem>>, vector<1x21x64xbf16>
    %15 = vector.shape_cast %14 : vector<1x21x64xbf16> to vector<21x64xbf16>
    %cst_12 = arith.constant dense<0.000000e+00> : vector<512x64xf32>
    %16 = tpu.matmul %13, %15, %cst_12 {dimension_numbers = #tpu.dot_dimension_numbers<[1], [0], [0], [1], [0, 0, 1, 1], [], []>} : vector<512x21xbf16>, vector<21x64xbf16>, vector<512x64xf32> -> vector<512x64xf32>
    %17 = arith.addf %9, %16 : vector<512x64xf32>
    %c32_i32 = arith.constant 32 : i32
    %18 = arith.addi %0, %c32_i32 : i32
    %c0_13 = arith.constant 0 : index
    %c0_14 = arith.constant 0 : index
    %19 = arith.index_cast %18 : i32 to index
    %c0_15 = arith.constant 0 : index
    %20 = vector.load %arg2[%c0_13, %c0_14, %19, %c0_15] : memref<1x2x1120x21xbf16, #tpu.memory_space<vmem>>, vector<1x1x512x21xbf16>
    %21 = vector.shape_cast %20 : vector<1x1x512x21xbf16> to vector<512x21xbf16>
    %c2 = arith.constant 2 : index
    %c0_16 = arith.constant 0 : index
    %c0_17 = arith.constant 0 : index
    %22 = vector.load %arg3[%c2, %c0_16, %c0_17] : memref<7x21x64xbf16, #tpu.memory_space<vmem>>, vector<1x21x64xbf16>
    %23 = vector.shape_cast %22 : vector<1x21x64xbf16> to vector<21x64xbf16>
    %cst_18 = arith.constant dense<0.000000e+00> : vector<512x64xf32>
    %24 = tpu.matmul %21, %23, %cst_18 {dimension_numbers = #tpu.dot_dimension_numbers<[1], [0], [0], [1], [0, 0, 1, 1], [], []>} : vector<512x21xbf16>, vector<21x64xbf16>, vector<512x64xf32> -> vector<512x64xf32>
    %25 = arith.addf %17, %24 : vector<512x64xf32>
    %c32_i32_19 = arith.constant 32 : i32
    %26 = arith.addi %0, %c32_i32_19 : i32
    %c0_20 = arith.constant 0 : index
    %c1_21 = arith.constant 1 : index
    %27 = arith.index_cast %26 : i32 to index
    %c0_22 = arith.constant 0 : index
    %28 = vector.load %arg2[%c0_20, %c1_21, %27, %c0_22] : memref<1x2x1120x21xbf16, #tpu.memory_space<vmem>>, vector<1x1x512x21xbf16>
    %29 = vector.shape_cast %28 : vector<1x1x512x21xbf16> to vector<512x21xbf16>
    %c3 = arith.constant 3 : index
    %c0_23 = arith.constant 0 : index
    %c0_24 = arith.constant 0 : index
    %30 = vector.load %arg3[%c3, %c0_23, %c0_24] : memref<7x21x64xbf16, #tpu.memory_space<vmem>>, vector<1x21x64xbf16>
    %31 = vector.shape_cast %30 : vector<1x21x64xbf16> to vector<21x64xbf16>
    %cst_25 = arith.constant dense<0.000000e+00> : vector<512x64xf32>
    %32 = tpu.matmul %29, %31, %cst_25 {dimension_numbers = #tpu.dot_dimension_numbers<[1], [0], [0], [1], [0, 0, 1, 1], [], []>} : vector<512x21xbf16>, vector<21x64xbf16>, vector<512x64xf32> -> vector<512x64xf32>
    %33 = arith.addf %25, %32 : vector<512x64xf32>
    %c64_i32 = arith.constant 64 : i32
    %34 = arith.addi %0, %c64_i32 : i32
    %c0_26 = arith.constant 0 : index
    %c0_27 = arith.constant 0 : index
    %35 = arith.index_cast %34 : i32 to index
    %c0_28 = arith.constant 0 : index
    %36 = vector.load %arg2[%c0_26, %c0_27, %35, %c0_28] : memref<1x2x1120x21xbf16, #tpu.memory_space<vmem>>, vector<1x1x512x21xbf16>
    %37 = vector.shape_cast %36 : vector<1x1x512x21xbf16> to vector<512x21xbf16>
    %c4 = arith.constant 4 : index
    %c0_29 = arith.constant 0 : index
    %c0_30 = arith.constant 0 : index
    %38 = vector.load %arg3[%c4, %c0_29, %c0_30] : memref<7x21x64xbf16, #tpu.memory_space<vmem>>, vector<1x21x64xbf16>
    %39 = vector.shape_cast %38 : vector<1x21x64xbf16> to vector<21x64xbf16>
    %cst_31 = arith.constant dense<0.000000e+00> : vector<512x64xf32>
    %40 = tpu.matmul %37, %39, %cst_31 {dimension_numbers = #tpu.dot_dimension_numbers<[1], [0], [0], [1], [0, 0, 1, 1], [], []>} : vector<512x21xbf16>, vector<21x64xbf16>, vector<512x64xf32> -> vector<512x64xf32>
    %41 = arith.addf %33, %40 : vector<512x64xf32>
    %c64_i32_32 = arith.constant 64 : i32
    %42 = arith.addi %0, %c64_i32_32 : i32
    %c0_33 = arith.constant 0 : index
    %c1_34 = arith.constant 1 : index
    %43 = arith.index_cast %42 : i32 to index
    %c0_35 = arith.constant 0 : index
    %44 = vector.load %arg2[%c0_33, %c1_34, %43, %c0_35] : memref<1x2x1120x21xbf16, #tpu.memory_space<vmem>>, vector<1x1x512x21xbf16>
    %45 = vector.shape_cast %44 : vector<1x1x512x21xbf16> to vector<512x21xbf16>
    %c5 = arith.constant 5 : index
    %c0_36 = arith.constant 0 : index
    %c0_37 = arith.constant 0 : index
    %46 = vector.load %arg3[%c5, %c0_36, %c0_37] : memref<7x21x64xbf16, #tpu.memory_space<vmem>>, vector<1x21x64xbf16>
    %47 = vector.shape_cast %46 : vector<1x21x64xbf16> to vector<21x64xbf16>
    %cst_38 = arith.constant dense<0.000000e+00> : vector<512x64xf32>
    %48 = tpu.matmul %45, %47, %cst_38 {dimension_numbers = #tpu.dot_dimension_numbers<[1], [0], [0], [1], [0, 0, 1, 1], [], []>} : vector<512x21xbf16>, vector<21x64xbf16>, vector<512x64xf32> -> vector<512x64xf32>
    %49 = arith.addf %41, %48 : vector<512x64xf32>
    %c96_i32 = arith.constant 96 : i32
    %50 = arith.addi %0, %c96_i32 : i32
    %c0_39 = arith.constant 0 : index
    %c0_40 = arith.constant 0 : index
    %51 = arith.index_cast %50 : i32 to index
    %c0_41 = arith.constant 0 : index
    %52 = vector.load %arg2[%c0_39, %c0_40, %51, %c0_41] : memref<1x2x1120x21xbf16, #tpu.memory_space<vmem>>, vector<1x1x512x21xbf16>
    %53 = vector.shape_cast %52 : vector<1x1x512x21xbf16> to vector<512x21xbf16>
    %c6 = arith.constant 6 : index
    %c0_42 = arith.constant 0 : index
    %c0_43 = arith.constant 0 : index
    %54 = vector.load %arg3[%c6, %c0_42, %c0_43] : memref<7x21x64xbf16, #tpu.memory_space<vmem>>, vector<1x21x64xbf16>
    %55 = vector.shape_cast %54 : vector<1x21x64xbf16> to vector<21x64xbf16>
    %cst_44 = arith.constant dense<0.000000e+00> : vector<512x64xf32>
    %56 = tpu.matmul %53, %55, %cst_44 {dimension_numbers = #tpu.dot_dimension_numbers<[1], [0], [0], [1], [0, 0, 1, 1], [], []>} : vector<512x21xbf16>, vector<21x64xbf16>, vector<512x64xf32> -> vector<512x64xf32>
    %57 = arith.addf %49, %56 : vector<512x64xf32>
    %c0_45 = arith.constant 0 : index
    %c0_46 = arith.constant 0 : index
    %58 = vector.load %arg4[%c0_45, %c0_46] : memref<1x64xf32, #tpu.memory_space<vmem>>, vector<1x64xf32>
    %59 = vector.broadcast %58 : vector<1x64xf32> to vector<512x64xf32>
    %60 = arith.addf %57, %59 : vector<512x64xf32>
    %cst_47 = arith.constant 0.000000e+00 : f32
    %61 = vector.broadcast %cst_47 : f32 to vector<512x64xf32>
    %62 = arith.maximumf %60, %61 : vector<512x64xf32>
    %63 = arith.truncf %62 : vector<512x64xf32> to vector<512x64xbf16>
    %c0_48 = arith.constant 0 : index
    %c0_49 = arith.constant 0 : index
    %c0_50 = arith.constant 0 : index
    %64 = vector.load %arg5[%c0_48, %c0_49, %c0_50] : memref<1x512x64xbf16, #tpu.memory_space<vmem>>, vector<1x512x64xbf16>
    %65 = vector.shape_cast %64 : vector<1x512x64xbf16> to vector<512x64xbf16>
    %66 = vector.shape_cast %63 : vector<512x64xbf16> to vector<1x512x64xbf16>
    tpu.vector_store %arg5[%c0_48, %c0_49, %c0_50], %66 {strides = array<i32>} : memref<1x512x64xbf16, #tpu.memory_space<vmem>>, vector<1x512x64xbf16>,
    return
  }
  func.func @transform_0(%arg0: i32, %arg1: i32) -> (i32, i32, i32, i32) {
    %c0_i32 = arith.constant 0 : i32
    %c0_i32_0 = arith.constant 0 : i32
    %c0_i32_1 = arith.constant 0 : i32
    %c0_i32_2 = arith.constant 0 : i32
    return %arg0, %c0_i32, %c0_i32_0, %c0_i32_1 : i32, i32, i32, i32
  }
  func.func @transform_1(%arg0: i32, %arg1: i32) -> (i32, i32, i32) {
    %c0_i32 = arith.constant 0 : i32
    %c0_i32_0 = arith.constant 0 : i32
    %c0_i32_1 = arith.constant 0 : i32
    %c0_i32_2 = arith.constant 0 : i32
    return %c0_i32, %c0_i32_0, %c0_i32_1 : i32, i32, i32
  }
  func.func @transform_2(%arg0: i32, %arg1: i32) -> (i32, i32) {
    %c0_i32 = arith.constant 0 : i32
    %c0_i32_0 = arith.constant 0 : i32
    %c0_i32_1 = arith.constant 0 : i32
    return %c0_i32, %c0_i32_0 : i32, i32
  }
  func.func @transform_3(%arg0: i32, %arg1: i32) -> (i32, i32, i32) {
    %c0_i32 = arith.constant 0 : i32
    %c0_i32_0 = arith.constant 0 : i32
    return %arg0, %arg1, %c0_i32 : i32, i32, i32
  }
}

</mosaic_0001>

<llo_original>
// kernel: tpu_custom_call.1
$region0: #{tpu_custom_call.1}
  #allocation0 [shape = 'u32[]', space=smem, size = 0x4, offset = 0x4, fixed_abs, tag = 'smem constant byte address 0x4 - core index']
  #allocation1 [shape = 'u32[144,128]{1,0:T(1,128)}', space=vmem, size = 0x12000, scoped, tag = 'internal scratch']
  %s0 = inlined_call_operand.vmem [shape: bf16[2,2,1120,21], index: 0, kind: input, shape index: {}]
  %s1 = inlined_call_operand.vmem [shape: bf16[7,21,64], index: 1, kind: input, shape index: {}]
  %s2 = inlined_call_operand.vmem [shape: f32[1,64], index: 2, kind: input, shape index: {}]
  %s3 = inlined_call_operand.vmem [shape: bf16[2,1024,64], index: 3, kind: output, shape index: {}]
  %s4 = sld [smem:[#allocation0]]
  $region45: #{tpu_custom_call.1} parent=0
    _
  %s6 = ssub.s32 1, %s4
  %s7 = scalar_select 0, %s6, %s4
  loop: start=0, step=1, limit=6
  $region2: #{tpu_custom_call.1} parent=0 // loop_pre_header
    _
  $region3: #{tpu_custom_call.1} parent=0 // loop_header
    %s9 = sphi 0, %s13
    %p10 = scmp.ge.s32.totalorder %s9, 6
    %s16 = sphi 0, %s28
    %s17 = sphi 0, %s24
    %s18 = sphi 0, %s16
    %s19 = sphi 0, %s17
    %s20 = sphi 0, %s18
    %s21 = sphi 0, %s19
    %s31 = sphi 0, %s33
    %s34 = sphi 0, %s31
    %s35 = sphi 0, %s34
    %s51 = sphi 0, %s35
    %s55 = sphi 0, %s55
    %s57 = sphi 0, %s55
    %s58 = sphi 0, %s57
    %s72 = sphi 0, %s58
    %s76 = sphi 0, %s76
    %s78 = sphi 0, %s76
    %s79 = sphi 0, %s78
    %s93 = sphi 0, %s79
    %s101 = sphi 0, %s103
    %s104 = sphi 0, %s101
    %s105 = sphi 0, %s104
    %s121 = sphi 0, %s105
  $region4: #{tpu_custom_call.1} parent=0 // loop_header_branch
    %12 = sbr.rel (%p10) target = $region8
  $region5: #{tpu_custom_call.1} parent=0 // loop_body
    %s14 = ssub.s32 %s9, 1
    %s15 = ssub.s32 %s9, 2
    %s22 = sadd.s32 1, %s17
    %p23 = scmp.ge.s32.totalorder %s22, 2
    %s24 = scalar_select %p23, 0, %s22
    %s25 = sadd.s32 1, %s16
    %s26 = scalar_select %p23, %s25, %s16
    %p27 = scmp.ge.s32.totalorder %s26, 2
    %s28 = scalar_select %p27, 0, %s26
    %s29 = ssub.s32 %s16, %s28
    %p30 = scmp.eq.s32.totalorder %s29, 0
    %s32 = sadd.s32 %s31, 1
    %s33 = scalar_select %p30, %s31, %s32
    %p36 = pneg %p30
    %p37 = scmp.eq.s32.totalorder %s9, 3
    %p38 = por %p36, %p37
    %p39 = scmp.ne.s32.totalorder %s31, %s34
    %p40 = scmp.eq.s32.totalorder %s9, 0
    %p41 = por %p39, %p40
    %p42 = scmp.ne.s32.totalorder %s31, %s34
    %p43 = scmp.eq.s32.totalorder %s14, 3
    %p44 = por %p42, %p43
    %p45 = scmp.ne.s32.totalorder %s34, %s35
    %p46 = scmp.eq.s32.totalorder %s14, 0
    %p47 = por %p45, %p46
    %p48 = scmp.ne.s32.totalorder %s34, %s35
    %p49 = scmp.eq.s32.totalorder %s15, 3
    %p50 = por %p48, %p49
    %p52 = scmp.ne.s32.totalorder %s35, %s51
    %p53 = scmp.eq.s32.totalorder %s15, 0
    %p54 = por %p52, %p53
    %s56 = sadd.s32 %s55, 1
    %p59 = scmp.eq.s32.totalorder %s9, 3
    %p60 = scmp.ne.s32.totalorder %s55, %s57
    %p61 = scmp.eq.s32.totalorder %s9, 0
    %p62 = por %p60, %p61
    %p63 = scmp.ne.s32.totalorder %s55, %s57
    %p64 = scmp.eq.s32.totalorder %s14, 3
    %p65 = por %p63, %p64
    %p66 = scmp.ne.s32.totalorder %s57, %s58
    %p67 = scmp.eq.s32.totalorder %s14, 0
    %p68 = por %p66, %p67
    %p69 = scmp.ne.s32.totalorder %s57, %s58
    %p70 = scmp.eq.s32.totalorder %s15, 3
    %p71 = por %p69, %p70
    %p73 = scmp.ne.s32.totalorder %s58, %s72
    %p74 = scmp.eq.s32.totalorder %s15, 0
    %p75 = por %p73, %p74
    %s77 = sadd.s32 %s76, 1
    %p80 = scmp.eq.s32.totalorder %s9, 3
    %p81 = scmp.ne.s32.totalorder %s76, %s78
    %p82 = scmp.eq.s32.totalorder %s9, 0
    %p83 = por %p81, %p82
    %p84 = scmp.ne.s32.totalorder %s76, %s78
    %p85 = scmp.eq.s32.totalorder %s14, 3
    %p86 = por %p84, %p85
    %p87 = scmp.ne.s32.totalorder %s78, %s79
    %p88 = scmp.eq.s32.totalorder %s14, 0
    %p89 = por %p87, %p88
    %p90 = scmp.ne.s32.totalorder %s78, %s79
    %p91 = scmp.eq.s32.totalorder %s15, 3
    %p92 = por %p90, %p91
    %p94 = scmp.ne.s32.totalorder %s79, %s93
    %p95 = scmp.eq.s32.totalorder %s15, 0
    %p96 = por %p94, %p95
    %s97 = ssub.s32 %s16, %s28
    %s98 = ssub.s32 %s17, %s24
    %s99 = sor.u32 %s97, %s98
    %p100 = scmp.eq.s32.totalorder %s99, 0
    %s102 = sadd.s32 %s101, 1
    %s103 = scalar_select %p100, %s101, %s102
    %p106 = pneg %p100
    %p107 = scmp.eq.s32.totalorder %s9, 3
    %p108 = por %p106, %p107
    %p109 = scmp.ne.s32.totalorder %s101, %s104
    %p110 = scmp.eq.s32.totalorder %s9, 0
    %p111 = por %p109, %p110
    %p112 = scmp.ne.s32.totalorder %s101, %s104
    %p113 = scmp.eq.s32.totalorder %s14, 3
    %p114 = por %p112, %p113
    %p115 = scmp.ne.s32.totalorder %s104, %s105
    %p116 = scmp.eq.s32.totalorder %s14, 0
    %p117 = por %p115, %p116
    %p118 = scmp.ne.s32.totalorder %s104, %s105
    %p119 = scmp.eq.s32.totalorder %s15, 3
    %p120 = por %p118, %p119
    %p122 = scmp.ne.s32.totalorder %s105, %s121
    %p123 = scmp.eq.s32.totalorder %s15, 0
    %p124 = por %p122, %p123
    %p125 = scmp.le.s32.totalorder 1, %s9
    %p126 = scmp.lt.s32.totalorder %s9, 5
    %p127 = pnand %p125, %p126
    %p128 = pneg %p127
    // Predicated region
    $region9: #{tpu_custom_call.1} parent=5 // pred_check
      _
    $region10: #{tpu_custom_call.1} parent=5 // pred_check_branch
      %130 = sbr.rel (%p127) target = $region12
    $region11: #{tpu_custom_call.1} parent=5 // pred_region
      %s131 = ssub.s32 %s9, 1
      // Predicated region
      $region13: #{tpu_custom_call.1} parent=11 // pred_check
        %p132 = pneg %p68
      $region14: #{tpu_custom_call.1} parent=11 // pred_check_branch
        %134 = sbr.rel (%p132) target = $region16
      $region15: #{tpu_custom_call.1} parent=11 // pred_region
        _
      $region16: #{tpu_custom_call.1} parent=11 // pred_fallthru
        _
      // Predicated region
      $region17: #{tpu_custom_call.1} parent=11 // pred_check
        %p135 = pneg %p89
      $region18: #{tpu_custom_call.1} parent=11 // pred_check_branch
        %137 = sbr.rel (%p135) target = $region20
      $region19: #{tpu_custom_call.1} parent=11 // pred_region
        _
      $region20: #{tpu_custom_call.1} parent=11 // pred_fallthru
        _
    $region12: #{tpu_custom_call.1} parent=5 // pred_fallthru
      _
    %p138 = scmp.lt.s32.totalorder %s9, 4
    // Predicated region
    $region21: #{tpu_custom_call.1} parent=5 // pred_check
      %p139 = pneg %p138
    $region22: #{tpu_custom_call.1} parent=5 // pred_check_branch
      %141 = sbr.rel (%p139) target = $region24
    $region23: #{tpu_custom_call.1} parent=5 // pred_region
      // Predicated region
      $region25: #{tpu_custom_call.1} parent=23 // pred_check
        %p142 = pneg %p41
      $region26: #{tpu_custom_call.1} parent=23 // pred_check_branch
        %144 = sbr.rel (%p142) target = $region28
      $region27: #{tpu_custom_call.1} parent=23 // pred_region
        %p145 = scmp.lt.s32.totalorder %s16, 1
        %s146 = scalar_select %p145, %s16, 1
        %s147 = smul.addr %s146, 280
        %s148 = smul.addr %s147, 4
        %s149 = scalar_lea.vmem %s0, %s148
      $region28: #{tpu_custom_call.1} parent=23 // pred_fallthru
        _
    $region24: #{tpu_custom_call.1} parent=5 // pred_fallthru
      _
    %p150 = scmp.le.s32.totalorder 1, %s9
    %p151 = scmp.lt.s32.totalorder %s9, 5
    %p152 = pnand %p150, %p151
    %p153 = pneg %p152
    // Predicated region
    $region29: #{tpu_custom_call.1} parent=5 // pred_check
      _
    $region30: #{tpu_custom_call.1} parent=5 // pred_check_branch
      %155 = sbr.rel (%p152) target = $region32
    $region31: #{tpu_custom_call.1} parent=5 // pred_region
      %s156 = ssub.s32 %s9, 1
      %p157 = scmp.lt.s32.totalorder %s18, 1
      %s158 = scalar_select %p157, %s18, 1
      %s159 = smul.addr %s158, 280
      %s160 = smul.addr %s159, 4
      %s161 = scalar_lea.vmem %s0, %s160
      %p162 = pneg %p47
      %p163 = pneg %p44
      %p164 = pneg %p68
      %p165 = pneg %p65
      %p166 = pneg %p89
      %p167 = pneg %p86
      %p168 = pneg %p117
      %p169 = pneg %p114
      %s170 = smul.u32 64, %s19
      %p171 = scmp.lt.s32.totalorder %s18, 1
      %s172 = scalar_select %p171, %s18, 1
      %p173 = scmp.lt.s32.totalorder %s170, 127
      %s174 = scalar_select %p173, %s170, 127
      %s175 = smul.addr %s172, 128
      %s176 = sadd.s32 %s174, %s175
      %s177 = smul.addr %s176, 4
      %s178 = scalar_lea.vmem %s3, %s177
      %p179 = scmp.lt.s32.totalorder %s18, 1
      %s180 = scalar_select %p179, %s18, 1
      %s181 = smul.addr %s180, 280
      %s182 = smul.addr %s181, 4
      %s183 = scalar_lea.vmem %s0, %s182
      %s184 = smul.u32 64, %s19
      %p185 = scmp.lt.s32.totalorder %s18, 1
      %s186 = scalar_select %p185, %s18, 1
      %p187 = scmp.lt.s32.totalorder %s184, 127
      %s188 = scalar_select %p187, %s184, 127
      %s189 = smul.addr %s186, 128
      %s190 = sadd.s32 %s188, %s189
      %s191 = smul.addr %s190, 4
      %s192 = scalar_lea.vmem %s3, %s191
      %s193 = smul.u32 64, %s19
      %s195 = smul.u32 %s19, 512
      %s196 = sshra.s32 %s195, 3
      %s197 = sand.u32 %s195, 7
      %s198 = smul.addr %s196, 4
      %s199 = scalar_lea.vmem %s183, %s198
      %v200 = vld [vmem:[%s199] sm:$0xf]
      %v201 = vld [vmem:[%s199 + $0x4] sm:$0xf]
      %v202 = vld [vmem:[%s199 + $0x8] sm:$0xf]
      %v203 = vld [vmem:[%s199 + $0xc] sm:$0xf]
      %v204 = vld [vmem:[%s199 + $0x10] sm:$0xf]
      %v205 = vld [vmem:[%s199 + $0x14] sm:$0xf]
      %v206 = vld [vmem:[%s199 + $0x18] sm:$0xf]
      %v207 = vld [vmem:[%s199 + $0x1c] sm:$0xf]
      %v208 = vld [vmem:[%s199 + $0x20] sm:$0xf]
      %v209 = vld [vmem:[%s199 + $0x24] sm:$0xf]
      %v210 = vld [vmem:[%s199 + $0x28] sm:$0xf]
      %v211 = vld [vmem:[%s199 + $0x2c] sm:$0xf]
      %v212 = vld [vmem:[%s199 + $0x30] sm:$0xf]
      %v213 = vld [vmem:[%s199 + $0x34] sm:$0xf]
      %v214 = vld [vmem:[%s199 + $0x38] sm:$0xf]
      %v215 = vld [vmem:[%s199 + $0x3c] sm:$0xf]
      %v216 = vld [vmem:[%s199 + $0x40] sm:$0xf]
      %v217 = vld [vmem:[%s199 + $0x44] sm:$0xf]
      %v218 = vld [vmem:[%s199 + $0x48] sm:$0xf]
      %v219 = vld [vmem:[%s199 + $0x4c] sm:$0xf]
      %v220 = vld [vmem:[%s199 + $0x50] sm:$0xf]
      %v221 = vld [vmem:[%s199 + $0x54] sm:$0xf]
      %v222 = vld [vmem:[%s199 + $0x58] sm:$0xf]
      %v223 = vld [vmem:[%s199 + $0x5c] sm:$0xf]
      %v224 = vld [vmem:[%s199 + $0x60] sm:$0xf]
      %v225 = vld [vmem:[%s199 + $0x64] sm:$0xf]
      %v226 = vld [vmem:[%s199 + $0x68] sm:$0xf]
      %v227 = vld [vmem:[%s199 + $0x6c] sm:$0xf]
      %v228 = vld [vmem:[%s199 + $0x70] sm:$0xf]
      %v229 = vld [vmem:[%s199 + $0x74] sm:$0xf]
      %v230 = vld [vmem:[%s199 + $0x78] sm:$0xf]
      %v231 = vld [vmem:[%s199 + $0x7c] sm:$0xf]
      %v232 = vld [vmem:[%s199 + $0x80] sm:$0xf]
      %v233 = vld [vmem:[%s199 + $0x84] sm:$0xf]
      %v234 = vld [vmem:[%s199 + $0x88] sm:$0xf]
      %v235 = vld [vmem:[%s199 + $0x8c] sm:$0xf]
      %v236 = vld [vmem:[%s199 + $0x90] sm:$0xf]
      %v237 = vld [vmem:[%s199 + $0x94] sm:$0xf]
      %v238 = vld [vmem:[%s199 + $0x98] sm:$0xf]
      %v239 = vld [vmem:[%s199 + $0x9c] sm:$0xf]
      %v240 = vld [vmem:[%s199 + $0xa0] sm:$0xf]
      %v241 = vld [vmem:[%s199 + $0xa4] sm:$0xf]
      %v242 = vld [vmem:[%s199 + $0xa8] sm:$0xf]
      %v243 = vld [vmem:[%s199 + $0xac] sm:$0xf]
      %v244 = vld [vmem:[%s199 + $0xb0] sm:$0xf]
      %v245 = vld [vmem:[%s199 + $0xb4] sm:$0xf]
      %v246 = vld [vmem:[%s199 + $0xb8] sm:$0xf]
      %v247 = vld [vmem:[%s199 + $0xbc] sm:$0xf]
      %v248 = vld [vmem:[%s199 + $0xc0] sm:$0xf]
      %v249 = vld [vmem:[%s199 + $0xc4] sm:$0xf]
      %v250 = vld [vmem:[%s199 + $0xc8] sm:$0xf]
      %v251 = vld [vmem:[%s199 + $0xcc] sm:$0xf]
      %v252 = vld [vmem:[%s199 + $0xd0] sm:$0xf]
      %v253 = vld [vmem:[%s199 + $0xd4] sm:$0xf]
      %v254 = vld [vmem:[%s199 + $0xd8] sm:$0xf]
      %v255 = vld [vmem:[%s199 + $0xdc] sm:$0xf]
      %v256 = vld [vmem:[%s199 + $0xe0] sm:$0xf]
      %v257 = vld [vmem:[%s199 + $0xe4] sm:$0xf]
      %v258 = vld [vmem:[%s199 + $0xe8] sm:$0xf]
      %v259 = vld [vmem:[%s199 + $0xec] sm:$0xf]
      %v260 = vld [vmem:[%s199 + $0xf0] sm:$0xf]
      %v261 = vld [vmem:[%s199 + $0xf4] sm:$0xf]
      %v262 = vld [vmem:[%s199 + $0xf8] sm:$0xf]
      %v263 = vld [vmem:[%s199 + $0xfc] sm:$0xf]
      %v264 = vld [vmem:[%s1] sm:$0xf]
      %v265 = vld [vmem:[%s1 + $0x4] sm:$0xf]
      %v266 = vld [vmem:[%s1 + $0x8] sm:$0x7]
      %s267 = sadd.s32 %s196, 140
      %s268 = smul.addr %s267, 4
      %s269 = scalar_lea.vmem %s183, %s268
      %v270 = vld [vmem:[%s269] sm:$0xf]
      %v271 = vld [vmem:[%s269 + $0x4] sm:$0xf]
      %v272 = vld [vmem:[%s269 + $0x8] sm:$0xf]
      %v273 = vld [vmem:[%s269 + $0xc] sm:$0xf]
      %v274 = vld [vmem:[%s269 + $0x10] sm:$0xf]
      %v275 = vld [vmem:[%s269 + $0x14] sm:$0xf]
      %v276 = vld [vmem:[%s269 + $0x18] sm:$0xf]
      %v277 = vld [vmem:[%s269 + $0x1c] sm:$0xf]
      %v278 = vld [vmem:[%s269 + $0x20] sm:$0xf]
      %v279 = vld [vmem:[%s269 + $0x24] sm:$0xf]
      %v280 = vld [vmem:[%s269 + $0x28] sm:$0xf]
      %v281 = vld [vmem:[%s269 + $0x2c] sm:$0xf]
      %v282 = vld [vmem:[%s269 + $0x30] sm:$0xf]
      %v283 = vld [vmem:[%s269 + $0x34] sm:$0xf]
      %v284 = vld [vmem:[%s269 + $0x38] sm:$0xf]
      %v285 = vld [vmem:[%s269 + $0x3c] sm:$0xf]
      %v286 = vld [vmem:[%s269 + $0x40] sm:$0xf]
      %v287 = vld [vmem:[%s269 + $0x44] sm:$0xf]
      %v288 = vld [vmem:[%s269 + $0x48] sm:$0xf]
      %v289 = vld [vmem:[%s269 + $0x4c] sm:$0xf]
      %v290 = vld [vmem:[%s269 + $0x50] sm:$0xf]
      %v291 = vld [vmem:[%s269 + $0x54] sm:$0xf]
      %v292 = vld [vmem:[%s269 + $0x58] sm:$0xf]
      %v293 = vld [vmem:[%s269 + $0x5c] sm:$0xf]
      %v294 = vld [vmem:[%s269 + $0x60] sm:$0xf]
      %v295 = vld [vmem:[%s269 + $0x64] sm:$0xf]
      %v296 = vld [vmem:[%s269 + $0x68] sm:$0xf]
      %v297 = vld [vmem:[%s269 + $0x6c] sm:$0xf]
      %v298 = vld [vmem:[%s269 + $0x70] sm:$0xf]
      %v299 = vld [vmem:[%s269 + $0x74] sm:$0xf]
      %v300 = vld [vmem:[%s269 + $0x78] sm:$0xf]
      %v301 = vld [vmem:[%s269 + $0x7c] sm:$0xf]
      %v302 = vld [vmem:[%s269 + $0x80] sm:$0xf]
      %v303 = vld [vmem:[%s269 + $0x84] sm:$0xf]
      %v304 = vld [vmem:[%s269 + $0x88] sm:$0xf]
      %v305 = vld [vmem:[%s269 + $0x8c] sm:$0xf]
      %v306 = vld [vmem:[%s269 + $0x90] sm:$0xf]
      %v307 = vld [vmem:[%s269 + $0x94] sm:$0xf]
      %v308 = vld [vmem:[%s269 + $0x98] sm:$0xf]
      %v309 = vld [vmem:[%s269 + $0x9c] sm:$0xf]
      %v310 = vld [vmem:[%s269 + $0xa0] sm:$0xf]
      %v311 = vld [vmem:[%s269 + $0xa4] sm:$0xf]
      %v312 = vld [vmem:[%s269 + $0xa8] sm:$0xf]
      %v313 = vld [vmem:[%s269 + $0xac] sm:$0xf]
      %v314 = vld [vmem:[%s269 + $0xb0] sm:$0xf]
      %v315 = vld [vmem:[%s269 + $0xb4] sm:$0xf]
      %v316 = vld [vmem:[%s269 + $0xb8] sm:$0xf]
      %v317 = vld [vmem:[%s269 + $0xbc] sm:$0xf]
      %v318 = vld [vmem:[%s269 + $0xc0] sm:$0xf]
      %v319 = vld [vmem:[%s269 + $0xc4] sm:$0xf]
      %v320 = vld [vmem:[%s269 + $0xc8] sm:$0xf]
      %v321 = vld [vmem:[%s269 + $0xcc] sm:$0xf]
      %v322 = vld [vmem:[%s269 + $0xd0] sm:$0xf]
      %v323 = vld [vmem:[%s269 + $0xd4] sm:$0xf]
      %v324 = vld [vmem:[%s269 + $0xd8] sm:$0xf]
      %v325 = vld [vmem:[%s269 + $0xdc] sm:$0xf]
      %v326 = vld [vmem:[%s269 + $0xe0] sm:$0xf]
      %v327 = vld [vmem:[%s269 + $0xe4] sm:$0xf]
      %v328 = vld [vmem:[%s269 + $0xe8] sm:$0xf]
      %v329 = vld [vmem:[%s269 + $0xec] sm:$0xf]
      %v330 = vld [vmem:[%s269 + $0xf0] sm:$0xf]
      %v331 = vld [vmem:[%s269 + $0xf4] sm:$0xf]
      %v332 = vld [vmem:[%s269 + $0xf8] sm:$0xf]
      %v333 = vld [vmem:[%s269 + $0xfc] sm:$0xf]
      %s334 = scalar_lea.vmem %s1, 12
      %v335 = vld [vmem:[%s334] sm:$0xf]
      %v336 = vld [vmem:[%s334 + $0x4] sm:$0xf]
      %v337 = vld [vmem:[%s334 + $0x8] sm:$0x7]
      %v402 = vunpack.c.l.b16 %v270
      %v403 = vunpack.c.l.b16 %v271
      %v404 = vunpack.c.l.b16 %v272
      %v405 = vunpack.c.l.b16 %v273
      %v406 = vunpack.c.l.b16 %v274
      %v407 = vunpack.c.l.b16 %v275
      %v408 = vunpack.c.l.b16 %v276
      %v409 = vunpack.c.l.b16 %v277
      %v410 = vunpack.c.l.b16 %v278
      %v411 = vunpack.c.l.b16 %v279
      %v412 = vunpack.c.l.b16 %v280
      %v413 = vunpack.c.l.b16 %v281
      %v414 = vunpack.c.l.b16 %v282
      %v415 = vunpack.c.l.b16 %v283
      %v416 = vunpack.c.l.b16 %v284
      %v417 = vunpack.c.l.b16 %v285
      %v418 = vunpack.c.l.b16 %v286
      %v419 = vunpack.c.l.b16 %v287
      %v420 = vunpack.c.l.b16 %v288
      %v421 = vunpack.c.l.b16 %v289
      %v422 = vunpack.c.l.b16 %v290
      %v423 = vunpack.c.l.b16 %v291
      %v424 = vunpack.c.l.b16 %v292
      %v425 = vunpack.c.l.b16 %v293
      %v426 = vunpack.c.l.b16 %v294
      %v427 = vunpack.c.l.b16 %v295
      %v428 = vunpack.c.l.b16 %v296
      %v429 = vunpack.c.l.b16 %v297
      %v430 = vunpack.c.l.b16 %v298
      %v431 = vunpack.c.l.b16 %v299
      %v432 = vunpack.c.l.b16 %v300
      %v433 = vunpack.c.l.b16 %v301
      %v434 = vunpack.c.l.b16 %v302
      %v435 = vunpack.c.l.b16 %v303
      %v436 = vunpack.c.l.b16 %v304
      %v437 = vunpack.c.l.b16 %v305
      %v438 = vunpack.c.l.b16 %v306
      %v439 = vunpack.c.l.b16 %v307
      %v440 = vunpack.c.l.b16 %v308
      %v441 = vunpack.c.l.b16 %v309
      %v442 = vunpack.c.l.b16 %v310
      %v443 = vunpack.c.l.b16 %v311
      %v444 = vunpack.c.l.b16 %v312
      %v445 = vunpack.c.l.b16 %v313
      %v446 = vunpack.c.l.b16 %v314
      %v447 = vunpack.c.l.b16 %v315
      %v448 = vunpack.c.l.b16 %v316
      %v449 = vunpack.c.l.b16 %v317
      %v450 = vunpack.c.l.b16 %v318
      %v451 = vunpack.c.l.b16 %v319
      %v452 = vunpack.c.l.b16 %v320
      %v453 = vunpack.c.l.b16 %v321
      %v454 = vunpack.c.l.b16 %v322
      %v455 = vunpack.c.l.b16 %v323
      %v456 = vunpack.c.l.b16 %v324
      %v457 = vunpack.c.l.b16 %v325
      %v458 = vunpack.c.l.b16 %v326
      %v459 = vunpack.c.l.b16 %v327
      %v460 = vunpack.c.l.b16 %v328
      %v461 = vunpack.c.l.b16 %v329
      %v462 = vunpack.c.l.b16 %v330
      %v463 = vunpack.c.l.b16 %v331
      %v464 = vunpack.c.l.b16 %v332
      %v465 = vunpack.c.l.b16 %v333
      %v466 = vpack.c.b16 %v403, %v402
      %v467 = vpack.c.b16 %v405, %v404
      %v468 = vpack.c.b16 %v407, %v406
      %v469 = vpack.c.b16 %v409, %v408
      %v470 = vpack.c.b16 %v411, %v410
      %v471 = vpack.c.b16 %v413, %v412
      %v472 = vpack.c.b16 %v415, %v414
      %v473 = vpack.c.b16 %v417, %v416
      %v474 = vpack.c.b16 %v419, %v418
      %v475 = vpack.c.b16 %v421, %v420
      %v476 = vpack.c.b16 %v423, %v422
      %v477 = vpack.c.b16 %v425, %v424
      %v478 = vpack.c.b16 %v427, %v426
      %v479 = vpack.c.b16 %v429, %v428
      %v480 = vpack.c.b16 %v431, %v430
      %v481 = vpack.c.b16 %v433, %v432
      %v482 = vpack.c.b16 %v435, %v434
      %v483 = vpack.c.b16 %v437, %v436
      %v484 = vpack.c.b16 %v439, %v438
      %v485 = vpack.c.b16 %v441, %v440
      %v486 = vpack.c.b16 %v443, %v442
      %v487 = vpack.c.b16 %v445, %v444
      %v488 = vpack.c.b16 %v447, %v446
      %v489 = vpack.c.b16 %v449, %v448
      %v490 = vpack.c.b16 %v451, %v450
      %v491 = vpack.c.b16 %v453, %v452
      %v492 = vpack.c.b16 %v455, %v454
      %v493 = vpack.c.b16 %v457, %v456
      %v494 = vpack.c.b16 %v459, %v458
      %v495 = vpack.c.b16 %v461, %v460
      %v496 = vpack.c.b16 %v463, %v462
      %v497 = vpack.c.b16 %v465, %v464
      %v501 = vunpack.c.l.b16 %v335
      %v502 = vunpack.c.l.b16 %v336
      %v503 = vunpack.c.l.b16 %v337
      %v504 = vpack.c.b16 %v502, %v501
      %v505 = vpack.c.b16 %v503, %v503
      %vm507 = vcmask 171008
      %v509 = vsel %vm507, %v466, 0
      %v512 = vsel %vm507, %v467, 0
      %v515 = vsel %vm507, %v468, 0
      %v518 = vsel %vm507, %v469, 0
      %v521 = vsel %vm507, %v470, 0
      %v524 = vsel %vm507, %v471, 0
      %v527 = vsel %vm507, %v472, 0
      %v530 = vsel %vm507, %v473, 0
      %v533 = vsel %vm507, %v474, 0
      %v536 = vsel %vm507, %v475, 0
      %v539 = vsel %vm507, %v476, 0
      %v542 = vsel %vm507, %v477, 0
      %v545 = vsel %vm507, %v478, 0
      %v548 = vsel %vm507, %v479, 0
      %v551 = vsel %vm507, %v480, 0
      %v554 = vsel %vm507, %v481, 0
      %v557 = vsel %vm507, %v482, 0
      %v560 = vsel %vm507, %v483, 0
      %v563 = vsel %vm507, %v484, 0
      %v566 = vsel %vm507, %v485, 0
      %v569 = vsel %vm507, %v486, 0
      %v572 = vsel %vm507, %v487, 0
      %v575 = vsel %vm507, %v488, 0
      %v578 = vsel %vm507, %v489, 0
      %v581 = vsel %vm507, %v490, 0
      %v584 = vsel %vm507, %v491, 0
      %v587 = vsel %vm507, %v492, 0
      %v590 = vsel %vm507, %v493, 0
      %v593 = vsel %vm507, %v494, 0
      %v596 = vsel %vm507, %v495, 0
      %v599 = vsel %vm507, %v496, 0
      %v602 = vsel %vm507, %v497, 0
      %vm604 = vcmask 1041408
      %vm605 = vcmask 1042432
      %v606 = vsel %vm604, 4294967295, 65535
      %v607 = vsel %vm605, %v606, 0
      %v609 = vand.u32 %v505, %v607
      %611 = vmatprep.subr.bf16.mxu0 0
      %612 = vmatpush1.bf16.msra.mxu0 %v504
      %613 = vmatprep.subr.bf16.mxu0 0
      %614 = vmatpush1.bf16.msra.mxu0 %v609
      %615 = vmatprep.subr.bf16.mxu0 0
      %616 = vmatpush1.bf16.msra.mxu0 0
      %617 = vmatprep.subr.bf16.mxu0 0
      %618 = vmatpush1.bf16.msra.mxu0 0
      %619 = vmatprep.subr.bf16.mxu0 0
      %620 = vmatpush1.bf16.msra.mxu0 0
      %621 = vmatprep.subr.bf16.mxu0 0
      %622 = vmatpush1.bf16.msra.mxu0 0
      %623 = vmatprep.subr.bf16.mxu0 0
      %624 = vmatpush1.bf16.msra.mxu0 0
      %625 = vmatprep.subr.bf16.mxu0 0
      %626 = vmatpush1.bf16.msra.mxu0 0
      %627 = vmatprep.subr.bf16.mxu0 0
      %628 = vmatpush1.bf16.msra.mxu0 0
      %629 = vmatprep.subr.bf16.mxu0 0
      %630 = vmatpush1.bf16.msra.mxu0 0
      %631 = vmatprep.subr.bf16.mxu0 0
      %632 = vmatpush1.bf16.msra.mxu0 0
      %633 = vmatprep.subr.bf16.mxu0 0
      %634 = vmatpush1.bf16.msra.mxu0 0
      %635 = vmatprep.subr.bf16.mxu0 0
      %636 = vmatpush1.bf16.msra.mxu0 0
      %637 = vmatprep.subr.bf16.mxu0 0
      %638 = vmatpush1.bf16.msra.mxu0 0
      %639 = vmatprep.subr.bf16.mxu0 0
      %640 = vmatpush1.bf16.msra.mxu0 0
      %641 = vmatprep.subr.bf16.mxu0 0
      %642 = vmatpush1.bf16.msra.mxu0 0
      %643 = vmatprep.mubr.bf16.mxu0 0
      %644 = vmatmul.mubr.bf16.gmra.mrb[0].mxu0 %v509
      %v645 = vpop.f32.mrb[0].mxu0
      %v646 = vadd.f32 0.0, %v645
      %v647 = vpop.f32.mrb[0].mxu0
      %v648 = vpop.f32.mrb[0].mxu0
      %v649 = vadd.f32 0.0, %v648
      %v650 = vpop.f32.mrb[0].mxu0
      %651 = vmatprep.mubr.bf16.mxu0 0
      %652 = vmatmul.mubr.bf16.gmra.mrb[0].mxu0 %v512
      %v653 = vpop.f32.mrb[0].mxu0
      %v654 = vadd.f32 0.0, %v653
      %v655 = vpop.f32.mrb[0].mxu0
      %v656 = vpop.f32.mrb[0].mxu0
      %v657 = vadd.f32 0.0, %v656
      %v658 = vpop.f32.mrb[0].mxu0
      %659 = vmatprep.mubr.bf16.mxu0 0
      %660 = vmatmul.mubr.bf16.gmra.mrb[0].mxu0 %v515
      %v661 = vpop.f32.mrb[0].mxu0
      %v662 = vadd.f32 0.0, %v661
      %v663 = vpop.f32.mrb[0].mxu0
      %v664 = vpop.f32.mrb[0].mxu0
      %v665 = vadd.f32 0.0, %v664
      %v666 = vpop.f32.mrb[0].mxu0
      %667 = vmatprep.mubr.bf16.mxu0 0
      %668 = vmatmul.mubr.bf16.gmra.mrb[0].mxu0 %v518
      %v669 = vpop.f32.mrb[0].mxu0
      %v670 = vadd.f32 0.0, %v669
      %v671 = vpop.f32.mrb[0].mxu0
      %v672 = vpop.f32.mrb[0].mxu0
      %v673 = vadd.f32 0.0, %v672
      %v674 = vpop.f32.mrb[0].mxu0
      %675 = vmatprep.mubr.bf16.mxu0 0
      %676 = vmatmul.mubr.bf16.gmra.mrb[0].mxu0 %v521
      %v677 = vpop.f32.mrb[0].mxu0
      %v678 = vadd.f32 0.0, %v677
      %v679 = vpop.f32.mrb[0].mxu0
      %v680 = vpop.f32.mrb[0].mxu0
      %v681 = vadd.f32 0.0, %v680
      %v682 = vpop.f32.mrb[0].mxu0
      %683 = vmatprep.mubr.bf16.mxu0 0
      %684 = vmatmul.mubr.bf16.gmra.mrb[0].mxu0 %v524
      %v685 = vpop.f32.mrb[0].mxu0
      %v686 = vadd.f32 0.0, %v685
      %v687 = vpop.f32.mrb[0].mxu0
      %v688 = vpop.f32.mrb[0].mxu0
      %v689 = vadd.f32 0.0, %v688
      %v690 = vpop.f32.mrb[0].mxu0
      %691 = vmatprep.mubr.bf16.mxu0 0
      %692 = vmatmul.mubr.bf16.gmra.mrb[0].mxu0 %v527
      %v693 = vpop.f32.mrb[0].mxu0
      %v694 = vadd.f32 0.0, %v693
      %v695 = vpop.f32.mrb[0].mxu0
      %v696 = vpop.f32.mrb[0].mxu0
      %v697 = vadd.f32 0.0, %v696
      %v698 = vpop.f32.mrb[0].mxu0
      %699 = vmatprep.mubr.bf16.mxu0 0
      %700 = vmatmul.mubr.bf16.gmra.mrb[0].mxu0 %v530
      %v701 = vpop.f32.mrb[0].mxu0
      %v702 = vadd.f32 0.0, %v701
      %v703 = vpop.f32.mrb[0].mxu0
      %v704 = vpop.f32.mrb[0].mxu0
      %v705 = vadd.f32 0.0, %v704
      %v706 = vpop.f32.mrb[0].mxu0
      %707 = vmatprep.mubr.bf16.mxu0 0
      %708 = vmatmul.mubr.bf16.gmra.mrb[0].mxu0 %v533
      %v709 = vpop.f32.mrb[0].mxu0
      %v710 = vadd.f32 0.0, %v709
      %v711 = vpop.f32.mrb[0].mxu0
      %v712 = vpop.f32.mrb[0].mxu0
      %v713 = vadd.f32 0.0, %v712
      %v714 = vpop.f32.mrb[0].mxu0
      %715 = vmatprep.mubr.bf16.mxu0 0
      %716 = vmatmul.mubr.bf16.gmra.mrb[0].mxu0 %v536
      %v717 = vpop.f32.mrb[0].mxu0
      %v718 = vadd.f32 0.0, %v717
      %v719 = vpop.f32.mrb[0].mxu0
      %v720 = vpop.f32.mrb[0].mxu0
      %v721 = vadd.f32 0.0, %v720
      %v722 = vpop.f32.mrb[0].mxu0
      %723 = vmatprep.mubr.bf16.mxu0 0
      %724 = vmatmul.mubr.bf16.gmra.mrb[0].mxu0 %v539
      %v725 = vpop.f32.mrb[0].mxu0
      %v726 = vadd.f32 0.0, %v725
      %v727 = vpop.f32.mrb[0].mxu0
      %v728 = vpop.f32.mrb[0].mxu0
      %v729 = vadd.f32 0.0, %v728
      %v730 = vpop.f32.mrb[0].mxu0
      %731 = vmatprep.mubr.bf16.mxu0 0
      %732 = vmatmul.mubr.bf16.gmra.mrb[0].mxu0 %v542
      %v733 = vpop.f32.mrb[0].mxu0
      %v734 = vadd.f32 0.0, %v733
      %v735 = vpop.f32.mrb[0].mxu0
      %v736 = vpop.f32.mrb[0].mxu0
      %v737 = vadd.f32 0.0, %v736
      %v738 = vpop.f32.mrb[0].mxu0
      %739 = vmatprep.mubr.bf16.mxu0 0
      %740 = vmatmul.mubr.bf16.gmra.mrb[0].mxu0 %v545
      %v741 = vpop.f32.mrb[0].mxu0
      %v742 = vadd.f32 0.0, %v741
      %v743 = vpop.f32.mrb[0].mxu0
      %v744 = vpop.f32.mrb[0].mxu0
      %v745 = vadd.f32 0.0, %v744
      %v746 = vpop.f32.mrb[0].mxu0
      %747 = vmatprep.mubr.bf16.mxu0 0
      %748 = vmatmul.mubr.bf16.gmra.mrb[0].mxu0 %v548
      %v749 = vpop.f32.mrb[0].mxu0
      %v750 = vadd.f32 0.0, %v749
      %v751 = vpop.f32.mrb[0].mxu0
      %v752 = vpop.f32.mrb[0].mxu0
      %v753 = vadd.f32 0.0, %v752
      %v754 = vpop.f32.mrb[0].mxu0
      %755 = vmatprep.mubr.bf16.mxu0 0
      %756 = vmatmul.mubr.bf16.gmra.mrb[0].mxu0 %v551
      %v757 = vpop.f32.mrb[0].mxu0
      %v758 = vadd.f32 0.0, %v757
      %v759 = vpop.f32.mrb[0].mxu0
      %v760 = vpop.f32.mrb[0].mxu0
      %v761 = vadd.f32 0.0, %v760
      %v762 = vpop.f32.mrb[0].mxu0
      %763 = vmatprep.mubr.bf16.mxu0 0
      %764 = vmatmul.mubr.bf16.gmra.mrb[0].mxu0 %v554
      %v765 = vpop.f32.mrb[0].mxu0
      %v766 = vadd.f32 0.0, %v765
      %v767 = vpop.f32.mrb[0].mxu0
      %v768 = vpop.f32.mrb[0].mxu0
      %v769 = vadd.f32 0.0, %v768
      %v770 = vpop.f32.mrb[0].mxu0
      %771 = vmatprep.mubr.bf16.mxu0 0
      %772 = vmatmul.mubr.bf16.gmra.mrb[0].mxu0 %v557
      %v773 = vpop.f32.mrb[0].mxu0
      %v774 = vadd.f32 0.0, %v773
      %v775 = vpop.f32.mrb[0].mxu0
      %v776 = vpop.f32.mrb[0].mxu0
      %v777 = vadd.f32 0.0, %v776
      %v778 = vpop.f32.mrb[0].mxu0
      %779 = vmatprep.mubr.bf16.mxu0 0
      %780 = vmatmul.mubr.bf16.gmra.mrb[0].mxu0 %v560
      %v781 = vpop.f32.mrb[0].mxu0
      %v782 = vadd.f32 0.0, %v781
      %v783 = vpop.f32.mrb[0].mxu0
      %v784 = vpop.f32.mrb[0].mxu0
      %v785 = vadd.f32 0.0, %v784
      %v786 = vpop.f32.mrb[0].mxu0
      %787 = vmatprep.mubr.bf16.mxu0 0
      %788 = vmatmul.mubr.bf16.gmra.mrb[0].mxu0 %v563
      %v789 = vpop.f32.mrb[0].mxu0
      %v790 = vadd.f32 0.0, %v789
      %v791 = vpop.f32.mrb[0].mxu0
      %v792 = vpop.f32.mrb[0].mxu0
      %v793 = vadd.f32 0.0, %v792
      %v794 = vpop.f32.mrb[0].mxu0
      %795 = vmatprep.mubr.bf16.mxu0 0
      %796 = vmatmul.mubr.bf16.gmra.mrb[0].mxu0 %v566
      %v797 = vpop.f32.mrb[0].mxu0
      %v798 = vadd.f32 0.0, %v797
      %v799 = vpop.f32.mrb[0].mxu0
      %v800 = vpop.f32.mrb[0].mxu0
      %v801 = vadd.f32 0.0, %v800
      %v802 = vpop.f32.mrb[0].mxu0
      %803 = vmatprep.mubr.bf16.mxu0 0
      %804 = vmatmul.mubr.bf16.gmra.mrb[0].mxu0 %v569
      %v805 = vpop.f32.mrb[0].mxu0
      %v806 = vadd.f32 0.0, %v805
      %v807 = vpop.f32.mrb[0].mxu0
      %v808 = vpop.f32.mrb[0].mxu0
      %v809 = vadd.f32 0.0, %v808
      %v810 = vpop.f32.mrb[0].mxu0
      %811 = vmatprep.mubr.bf16.mxu0 0
      %812 = vmatmul.mubr.bf16.gmra.mrb[0].mxu0 %v572
      %v813 = vpop.f32.mrb[0].mxu0
      %v814 = vadd.f32 0.0, %v813
      %v815 = vpop.f32.mrb[0].mxu0
      %v816 = vpop.f32.mrb[0].mxu0
      %v817 = vadd.f32 0.0, %v816
      %v818 = vpop.f32.mrb[0].mxu0
      %819 = vmatprep.mubr.bf16.mxu0 0
      %820 = vmatmul.mubr.bf16.gmra.mrb[0].mxu0 %v575
      %v821 = vpop.f32.mrb[0].mxu0
      %v822 = vadd.f32 0.0, %v821
      %v823 = vpop.f32.mrb[0].mxu0
      %v824 = vpop.f32.mrb[0].mxu0
      %v825 = vadd.f32 0.0, %v824
      %v826 = vpop.f32.mrb[0].mxu0
      %827 = vmatprep.mubr.bf16.mxu0 0
      %828 = vmatmul.mubr.bf16.gmra.mrb[0].mxu0 %v578
      %v829 = vpop.f32.mrb[0].mxu0
      %v830 = vadd.f32 0.0, %v829
      %v831 = vpop.f32.mrb[0].mxu0
      %v832 = vpop.f32.mrb[0].mxu0
      %v833 = vadd.f32 0.0, %v832
      %v834 = vpop.f32.mrb[0].mxu0
      %835 = vmatprep.mubr.bf16.mxu0 0
      %836 = vmatmul.mubr.bf16.gmra.mrb[0].mxu0 %v581
      %v837 = vpop.f32.mrb[0].mxu0
      %v838 = vadd.f32 0.0, %v837
      %v839 = vpop.f32.mrb[0].mxu0
      %v840 = vpop.f32.mrb[0].mxu0
      %v841 = vadd.f32 0.0, %v840
      %v842 = vpop.f32.mrb[0].mxu0
      %843 = vmatprep.mubr.bf16.mxu0 0
      %844 = vmatmul.mubr.bf16.gmra.mrb[0].mxu0 %v584
      %v845 = vpop.f32.mrb[0].mxu0
      %v846 = vadd.f32 0.0, %v845
      %v847 = vpop.f32.mrb[0].mxu0
      %v848 = vpop.f32.mrb[0].mxu0
      %v849 = vadd.f32 0.0, %v848
      %v850 = vpop.f32.mrb[0].mxu0
      %851 = vmatprep.mubr.bf16.mxu0 0
      %852 = vmatmul.mubr.bf16.gmra.mrb[0].mxu0 %v587
      %v853 = vpop.f32.mrb[0].mxu0
      %v854 = vadd.f32 0.0, %v853
      %v855 = vpop.f32.mrb[0].mxu0
      %v856 = vpop.f32.mrb[0].mxu0
      %v857 = vadd.f32 0.0, %v856
      %v858 = vpop.f32.mrb[0].mxu0
      %859 = vmatprep.mubr.bf16.mxu0 0
      %860 = vmatmul.mubr.bf16.gmra.mrb[0].mxu0 %v590
      %v861 = vpop.f32.mrb[0].mxu0
      %v862 = vadd.f32 0.0, %v861
      %v863 = vpop.f32.mrb[0].mxu0
      %v864 = vpop.f32.mrb[0].mxu0
      %v865 = vadd.f32 0.0, %v864
      %v866 = vpop.f32.mrb[0].mxu0
      %867 = vmatprep.mubr.bf16.mxu0 0
      %868 = vmatmul.mubr.bf16.gmra.mrb[0].mxu0 %v593
      %v869 = vpop.f32.mrb[0].mxu0
      %v870 = vadd.f32 0.0, %v869
      %v871 = vpop.f32.mrb[0].mxu0
      %v872 = vpop.f32.mrb[0].mxu0
      %v873 = vadd.f32 0.0, %v872
      %v874 = vpop.f32.mrb[0].mxu0
      %875 = vmatprep.mubr.bf16.mxu0 0
      %876 = vmatmul.mubr.bf16.gmra.mrb[0].mxu0 %v596
      %v877 = vpop.f32.mrb[0].mxu0
      %v878 = vadd.f32 0.0, %v877
      %v879 = vpop.f32.mrb[0].mxu0
      %v880 = vpop.f32.mrb[0].mxu0
      %v881 = vadd.f32 0.0, %v880
      %v882 = vpop.f32.mrb[0].mxu0
      %883 = vmatprep.mubr.bf16.mxu0 0
      %884 = vmatmul.mubr.bf16.gmra.mrb[0].mxu0 %v599
      %v885 = vpop.f32.mrb[0].mxu0
      %v886 = vadd.f32 0.0, %v885
      %v887 = vpop.f32.mrb[0].mxu0
      %v888 = vpop.f32.mrb[0].mxu0
      %v889 = vadd.f32 0.0, %v888
      %v890 = vpop.f32.mrb[0].mxu0
      %891 = vmatprep.mubr.bf16.mxu0 0
      %892 = vmatmul.mubr.bf16.gmra.mrb[0].mxu0 %v602
      %v893 = vpop.f32.mrb[0].mxu0
      %v894 = vadd.f32 0.0, %v893
      %v895 = vpop.f32.mrb[0].mxu0
      %v896 = vpop.f32.mrb[0].mxu0
      %v897 = vadd.f32 0.0, %v896
      %v898 = vpop.f32.mrb[0].mxu0
      %899 = vdwg.mxu0
      %v964 = vunpack.c.l.b16 %v200
      %v965 = vunpack.c.l.b16 %v201
      %v966 = vunpack.c.l.b16 %v202
      %v967 = vunpack.c.l.b16 %v203
      %v968 = vunpack.c.l.b16 %v204
      %v969 = vunpack.c.l.b16 %v205
      %v970 = vunpack.c.l.b16 %v206
      %v971 = vunpack.c.l.b16 %v207
      %v972 = vunpack.c.l.b16 %v208
      %v973 = vunpack.c.l.b16 %v209
      %v974 = vunpack.c.l.b16 %v210
      %v975 = vunpack.c.l.b16 %v211
      %v976 = vunpack.c.l.b16 %v212
      %v977 = vunpack.c.l.b16 %v213
      %v978 = vunpack.c.l.b16 %v214
      %v979 = vunpack.c.l.b16 %v215
      %v980 = vunpack.c.l.b16 %v216
      %v981 = vunpack.c.l.b16 %v217
      %v982 = vunpack.c.l.b16 %v218
      %v983 = vunpack.c.l.b16 %v219
      %v984 = vunpack.c.l.b16 %v220
      %v985 = vunpack.c.l.b16 %v221
      %v986 = vunpack.c.l.b16 %v222
      %v987 = vunpack.c.l.b16 %v223
      %v988 = vunpack.c.l.b16 %v224
      %v989 = vunpack.c.l.b16 %v225
      %v990 = vunpack.c.l.b16 %v226
      %v991 = vunpack.c.l.b16 %v227
      %v992 = vunpack.c.l.b16 %v228
      %v993 = vunpack.c.l.b16 %v229
      %v994 = vunpack.c.l.b16 %v230
      %v995 = vunpack.c.l.b16 %v231
      %v996 = vunpack.c.l.b16 %v232
      %v997 = vunpack.c.l.b16 %v233
      %v998 = vunpack.c.l.b16 %v234
      %v999 = vunpack.c.l.b16 %v235
      %v1000 = vunpack.c.l.b16 %v236
      %v1001 = vunpack.c.l.b16 %v237
      %v1002 = vunpack.c.l.b16 %v238
      %v1003 = vunpack.c.l.b16 %v239
      %v1004 = vunpack.c.l.b16 %v240
      %v1005 = vunpack.c.l.b16 %v241
      %v1006 = vunpack.c.l.b16 %v242
      %v1007 = vunpack.c.l.b16 %v243
      %v1008 = vunpack.c.l.b16 %v244
      %v1009 = vunpack.c.l.b16 %v245
      %v1010 = vunpack.c.l.b16 %v246
      %v1011 = vunpack.c.l.b16 %v247
      %v1012 = vunpack.c.l.b16 %v248
      %v1013 = vunpack.c.l.b16 %v249
      %v1014 = vunpack.c.l.b16 %v250
      %v1015 = vunpack.c.l.b16 %v251
      %v1016 = vunpack.c.l.b16 %v252
      %v1017 = vunpack.c.l.b16 %v253
      %v1018 = vunpack.c.l.b16 %v254
      %v1019 = vunpack.c.l.b16 %v255
      %v1020 = vunpack.c.l.b16 %v256
      %v1021 = vunpack.c.l.b16 %v257
      %v1022 = vunpack.c.l.b16 %v258
      %v1023 = vunpack.c.l.b16 %v259
      %v1024 = vunpack.c.l.b16 %v260
      %v1025 = vunpack.c.l.b16 %v261
      %v1026 = vunpack.c.l.b16 %v262
      %v1027 = vunpack.c.l.b16 %v263
      %v1028 = vpack.c.b16 %v965, %v964
      %v1029 = vpack.c.b16 %v967, %v966
      %v1030 = vpack.c.b16 %v969, %v968
      %v1031 = vpack.c.b16 %v971, %v970
      %v1032 = vpack.c.b16 %v973, %v972
      %v1033 = vpack.c.b16 %v975, %v974
      %v1034 = vpack.c.b16 %v977, %v976
      %v1035 = vpack.c.b16 %v979, %v978
      %v1036 = vpack.c.b16 %v981, %v980
      %v1037 = vpack.c.b16 %v983, %v982
      %v1038 = vpack.c.b16 %v985, %v984
      %v1039 = vpack.c.b16 %v987, %v986
      %v1040 = vpack.c.b16 %v989, %v988
      %v1041 = vpack.c.b16 %v991, %v990
      %v1042 = vpack.c.b16 %v993, %v992
      %v1043 = vpack.c.b16 %v995, %v994
      %v1044 = vpack.c.b16 %v997, %v996
      %v1045 = vpack.c.b16 %v999, %v998
      %v1046 = vpack.c.b16 %v1001, %v1000
      %v1047 = vpack.c.b16 %v1003, %v1002
      %v1048 = vpack.c.b16 %v1005, %v1004
      %v1049 = vpack.c.b16 %v1007, %v1006
      %v1050 = vpack.c.b16 %v1009, %v1008
      %v1051 = vpack.c.b16 %v1011, %v1010
      %v1052 = vpack.c.b16 %v1013, %v1012
      %v1053 = vpack.c.b16 %v1015, %v1014
      %v1054 = vpack.c.b16 %v1017, %v1016
      %v1055 = vpack.c.b16 %v1019, %v1018
      %v1056 = vpack.c.b16 %v1021, %v1020
      %v1057 = vpack.c.b16 %v1023, %v1022
      %v1058 = vpack.c.b16 %v1025, %v1024
      %v1059 = vpack.c.b16 %v1027, %v1026
      %v1063 = vunpack.c.l.b16 %v264
      %v1064 = vunpack.c.l.b16 %v265
      %v1065 = vunpack.c.l.b16 %v266
      %v1066 = vpack.c.b16 %v1064, %v1063
      %v1067 = vpack.c.b16 %v1065, %v1065
      %v1070 = vsel %vm507, %v1028, 0
      %v1073 = vsel %vm507, %v1029, 0
      %v1076 = vsel %vm507, %v1030, 0
      %v1079 = vsel %vm507, %v1031, 0
      %v1082 = vsel %vm507, %v1032, 0
      %v1085 = vsel %vm507, %v1033, 0
      %v1088 = vsel %vm507, %v1034, 0
      %v1091 = vsel %vm507, %v1035, 0
      %v1094 = vsel %vm507, %v1036, 0
      %v1097 = vsel %vm507, %v1037, 0
      %v1100 = vsel %vm507, %v1038, 0
      %v1103 = vsel %vm507, %v1039, 0
      %v1106 = vsel %vm507, %v1040, 0
      %v1109 = vsel %vm507, %v1041, 0
      %v1112 = vsel %vm507, %v1042, 0
      %v1115 = vsel %vm507, %v1043, 0
      %v1118 = vsel %vm507, %v1044, 0
      %v1121 = vsel %vm507, %v1045, 0
      %v1124 = vsel %vm507, %v1046, 0
      %v1127 = vsel %vm507, %v1047, 0
      %v1130 = vsel %vm507, %v1048, 0
      %v1133 = vsel %vm507, %v1049, 0
      %v1136 = vsel %vm507, %v1050, 0
      %v1139 = vsel %vm507, %v1051, 0
      %v1142 = vsel %vm507, %v1052, 0
      %v1145 = vsel %vm507, %v1053, 0
      %v1148 = vsel %vm507, %v1054, 0
      %v1151 = vsel %vm507, %v1055, 0
      %v1154 = vsel %vm507, %v1056, 0
      %v1157 = vsel %vm507, %v1057, 0
      %v1160 = vsel %vm507, %v1058, 0
      %v1163 = vsel %vm507, %v1059, 0
      %v1166 = vand.u32 %v1067, %v607
      %1168 = vmatprep.subr.bf16.mxu0 0
      %1169 = vmatpush1.bf16.msra.mxu0 %v1066
      %1170 = vmatprep.subr.bf16.mxu0 0
      %1171 = vmatpush1.bf16.msra.mxu0 %v1166
      %1172 = vmatprep.subr.bf16.mxu0 0
      %1173 = vmatpush1.bf16.msra.mxu0 0
      %1174 = vmatprep.subr.bf16.mxu0 0
      %1175 = vmatpush1.bf16.msra.mxu0 0
      %1176 = vmatprep.subr.bf16.mxu0 0
      %1177 = vmatpush1.bf16.msra.mxu0 0
      %1178 = vmatprep.subr.bf16.mxu0 0
      %1179 = vmatpush1.bf16.msra.mxu0 0
      %1180 = vmatprep.subr.bf16.mxu0 0
      %1181 = vmatpush1.bf16.msra.mxu0 0
      %1182 = vmatprep.subr.bf16.mxu0 0
      %1183 = vmatpush1.bf16.msra.mxu0 0
      %1184 = vmatprep.subr.bf16.mxu0 0
      %1185 = vmatpush1.bf16.msra.mxu0 0
      %1186 = vmatprep.subr.bf16.mxu0 0
      %1187 = vmatpush1.bf16.msra.mxu0 0
      %1188 = vmatprep.subr.bf16.mxu0 0
      %1189 = vmatpush1.bf16.msra.mxu0 0
      %1190 = vmatprep.subr.bf16.mxu0 0
      %1191 = vmatpush1.bf16.msra.mxu0 0
      %1192 = vmatprep.subr.bf16.mxu0 0
      %1193 = vmatpush1.bf16.msra.mxu0 0
      %1194 = vmatprep.subr.bf16.mxu0 0
      %1195 = vmatpush1.bf16.msra.mxu0 0
      %1196 = vmatprep.subr.bf16.mxu0 0
      %1197 = vmatpush1.bf16.msra.mxu0 0
      %1198 = vmatprep.subr.bf16.mxu0 0
      %1199 = vmatpush1.bf16.msra.mxu0 0
      %1200 = vmatprep.mubr.bf16.mxu0 0
      %1201 = vmatmul.mubr.bf16.gmra.mrb[0].mxu0 %v1070
      %v1202 = vpop.f32.mrb[0].mxu0
      %v1203 = vadd.f32 %v646, %v1202
      %v1204 = vpop.f32.mrb[0].mxu0
      %v1205 = vpop.f32.mrb[0].mxu0
      %v1206 = vadd.f32 %v649, %v1205
      %v1207 = vpop.f32.mrb[0].mxu0
      %1208 = vmatprep.mubr.bf16.mxu0 0
      %1209 = vmatmul.mubr.bf16.gmra.mrb[0].mxu0 %v1073
      %v1210 = vpop.f32.mrb[0].mxu0
      %v1211 = vadd.f32 %v654, %v1210
      %v1212 = vpop.f32.mrb[0].mxu0
      %v1213 = vpop.f32.mrb[0].mxu0
      %v1214 = vadd.f32 %v657, %v1213
      %v1215 = vpop.f32.mrb[0].mxu0
      %1216 = vmatprep.mubr.bf16.mxu0 0
      %1217 = vmatmul.mubr.bf16.gmra.mrb[0].mxu0 %v1076
      %v1218 = vpop.f32.mrb[0].mxu0
      %v1219 = vadd.f32 %v662, %v1218
      %v1220 = vpop.f32.mrb[0].mxu0
      %v1221 = vpop.f32.mrb[0].mxu0
      %v1222 = vadd.f32 %v665, %v1221
      %v1223 = vpop.f32.mrb[0].mxu0
      %1224 = vmatprep.mubr.bf16.mxu0 0
      %1225 = vmatmul.mubr.bf16.gmra.mrb[0].mxu0 %v1079
      %v1226 = vpop.f32.mrb[0].mxu0
      %v1227 = vadd.f32 %v670, %v1226
      %v1228 = vpop.f32.mrb[0].mxu0
      %v1229 = vpop.f32.mrb[0].mxu0
      %v1230 = vadd.f32 %v673, %v1229
      %v1231 = vpop.f32.mrb[0].mxu0
      %1232 = vmatprep.mubr.bf16.mxu0 0
      %1233 = vmatmul.mubr.bf16.gmra.mrb[0].mxu0 %v1082
      %v1234 = vpop.f32.mrb[0].mxu0
      %v1235 = vadd.f32 %v678, %v1234
      %v1236 = vpop.f32.mrb[0].mxu0
      %v1237 = vpop.f32.mrb[0].mxu0
      %v1238 = vadd.f32 %v681, %v1237
      %v1239 = vpop.f32.mrb[0].mxu0
      %1240 = vmatprep.mubr.bf16.mxu0 0
      %1241 = vmatmul.mubr.bf16.gmra.mrb[0].mxu0 %v1085
      %v1242 = vpop.f32.mrb[0].mxu0
      %v1243 = vadd.f32 %v686, %v1242
      %v1244 = vpop.f32.mrb[0].mxu0
      %v1245 = vpop.f32.mrb[0].mxu0
      %v1246 = vadd.f32 %v689, %v1245
      %v1247 = vpop.f32.mrb[0].mxu0
      %1248 = vmatprep.mubr.bf16.mxu0 0
      %1249 = vmatmul.mubr.bf16.gmra.mrb[0].mxu0 %v1088
      %v1250 = vpop.f32.mrb[0].mxu0
      %v1251 = vadd.f32 %v694, %v1250
      %v1252 = vpop.f32.mrb[0].mxu0
      %v1253 = vpop.f32.mrb[0].mxu0
      %v1254 = vadd.f32 %v697, %v1253
      %v1255 = vpop.f32.mrb[0].mxu0
      %1256 = vmatprep.mubr.bf16.mxu0 0
      %1257 = vmatmul.mubr.bf16.gmra.mrb[0].mxu0 %v1091
      %v1258 = vpop.f32.mrb[0].mxu0
      %v1259 = vadd.f32 %v702, %v1258
      %v1260 = vpop.f32.mrb[0].mxu0
      %v1261 = vpop.f32.mrb[0].mxu0
      %v1262 = vadd.f32 %v705, %v1261
      %v1263 = vpop.f32.mrb[0].mxu0
      %1264 = vmatprep.mubr.bf16.mxu0 0
      %1265 = vmatmul.mubr.bf16.gmra.mrb[0].mxu0 %v1094
      %v1266 = vpop.f32.mrb[0].mxu0
      %v1267 = vadd.f32 %v710, %v1266
      %v1268 = vpop.f32.mrb[0].mxu0
      %v1269 = vpop.f32.mrb[0].mxu0
      %v1270 = vadd.f32 %v713, %v1269
      %v1271 = vpop.f32.mrb[0].mxu0
      %1272 = vmatprep.mubr.bf16.mxu0 0
      %1273 = vmatmul.mubr.bf16.gmra.mrb[0].mxu0 %v1097
      %v1274 = vpop.f32.mrb[0].mxu0
      %v1275 = vadd.f32 %v718, %v1274
      %v1276 = vpop.f32.mrb[0].mxu0
      %v1277 = vpop.f32.mrb[0].mxu0
      %v1278 = vadd.f32 %v721, %v1277
      %v1279 = vpop.f32.mrb[0].mxu0
      %1280 = vmatprep.mubr.bf16.mxu0 0
      %1281 = vmatmul.mubr.bf16.gmra.mrb[0].mxu0 %v1100
      %v1282 = vpop.f32.mrb[0].mxu0
      %v1283 = vadd.f32 %v726, %v1282
      %v1284 = vpop.f32.mrb[0].mxu0
      %v1285 = vpop.f32.mrb[0].mxu0
      %v1286 = vadd.f32 %v729, %v1285
      %v1287 = vpop.f32.mrb[0].mxu0
      %1288 = vmatprep.mubr.bf16.mxu0 0
      %1289 = vmatmul.mubr.bf16.gmra.mrb[0].mxu0 %v1103
      %v1290 = vpop.f32.mrb[0].mxu0
      %v1291 = vadd.f32 %v734, %v1290
      %v1292 = vpop.f32.mrb[0].mxu0
      %v1293 = vpop.f32.mrb[0].mxu0
      %v1294 = vadd.f32 %v737, %v1293
      %v1295 = vpop.f32.mrb[0].mxu0
      %1296 = vmatprep.mubr.bf16.mxu0 0
      %1297 = vmatmul.mubr.bf16.gmra.mrb[0].mxu0 %v1106
      %v1298 = vpop.f32.mrb[0].mxu0
      %v1299 = vadd.f32 %v742, %v1298
      %v1300 = vpop.f32.mrb[0].mxu0
      %v1301 = vpop.f32.mrb[0].mxu0
      %v1302 = vadd.f32 %v745, %v1301
      %v1303 = vpop.f32.mrb[0].mxu0
      %1304 = vmatprep.mubr.bf16.mxu0 0
      %1305 = vmatmul.mubr.bf16.gmra.mrb[0].mxu0 %v1109
      %v1306 = vpop.f32.mrb[0].mxu0
      %v1307 = vadd.f32 %v750, %v1306
      %v1308 = vpop.f32.mrb[0].mxu0
      %v1309 = vpop.f32.mrb[0].mxu0
      %v1310 = vadd.f32 %v753, %v1309
      %v1311 = vpop.f32.mrb[0].mxu0
      %1312 = vmatprep.mubr.bf16.mxu0 0
      %1313 = vmatmul.mubr.bf16.gmra.mrb[0].mxu0 %v1112
      %v1314 = vpop.f32.mrb[0].mxu0
      %v1315 = vadd.f32 %v758, %v1314
      %v1316 = vpop.f32.mrb[0].mxu0
      %v1317 = vpop.f32.mrb[0].mxu0
      %v1318 = vadd.f32 %v761, %v1317
      %v1319 = vpop.f32.mrb[0].mxu0
      %1320 = vmatprep.mubr.bf16.mxu0 0
      %1321 = vmatmul.mubr.bf16.gmra.mrb[0].mxu0 %v1115
      %v1322 = vpop.f32.mrb[0].mxu0
      %v1323 = vadd.f32 %v766, %v1322
      %v1324 = vpop.f32.mrb[0].mxu0
      %v1325 = vpop.f32.mrb[0].mxu0
      %v1326 = vadd.f32 %v769, %v1325
      %v1327 = vpop.f32.mrb[0].mxu0
      %1328 = vmatprep.mubr.bf16.mxu0 0
      %1329 = vmatmul.mubr.bf16.gmra.mrb[0].mxu0 %v1118
      %v1330 = vpop.f32.mrb[0].mxu0
      %v1331 = vadd.f32 %v774, %v1330
      %v1332 = vpop.f32.mrb[0].mxu0
      %v1333 = vpop.f32.mrb[0].mxu0
      %v1334 = vadd.f32 %v777, %v1333
      %v1335 = vpop.f32.mrb[0].mxu0
      %1336 = vmatprep.mubr.bf16.mxu0 0
      %1337 = vmatmul.mubr.bf16.gmra.mrb[0].mxu0 %v1121
      %v1338 = vpop.f32.mrb[0].mxu0
      %v1339 = vadd.f32 %v782, %v1338
      %v1340 = vpop.f32.mrb[0].mxu0
      %v1341 = vpop.f32.mrb[0].mxu0
      %v1342 = vadd.f32 %v785, %v1341
      %v1343 = vpop.f32.mrb[0].mxu0
      %1344 = vmatprep.mubr.bf16.mxu0 0
      %1345 = vmatmul.mubr.bf16.gmra.mrb[0].mxu0 %v1124
      %v1346 = vpop.f32.mrb[0].mxu0
      %v1347 = vadd.f32 %v790, %v1346
      %v1348 = vpop.f32.mrb[0].mxu0
      %v1349 = vpop.f32.mrb[0].mxu0
      %v1350 = vadd.f32 %v793, %v1349
      %v1351 = vpop.f32.mrb[0].mxu0
      %1352 = vmatprep.mubr.bf16.mxu0 0
      %1353 = vmatmul.mubr.bf16.gmra.mrb[0].mxu0 %v1127
      %v1354 = vpop.f32.mrb[0].mxu0
      %v1355 = vadd.f32 %v798, %v1354
      %v1356 = vpop.f32.mrb[0].mxu0
      %v1357 = vpop.f32.mrb[0].mxu0
      %v1358 = vadd.f32 %v801, %v1357
      %v1359 = vpop.f32.mrb[0].mxu0
      %1360 = vmatprep.mubr.bf16.mxu0 0
      %1361 = vmatmul.mubr.bf16.gmra.mrb[0].mxu0 %v1130
      %v1362 = vpop.f32.mrb[0].mxu0
      %v1363 = vadd.f32 %v806, %v1362
      %v1364 = vpop.f32.mrb[0].mxu0
      %v1365 = vpop.f32.mrb[0].mxu0
      %v1366 = vadd.f32 %v809, %v1365
      %v1367 = vpop.f32.mrb[0].mxu0
      %1368 = vmatprep.mubr.bf16.mxu0 0
      %1369 = vmatmul.mubr.bf16.gmra.mrb[0].mxu0 %v1133
      %v1370 = vpop.f32.mrb[0].mxu0
      %v1371 = vadd.f32 %v814, %v1370
      %v1372 = vpop.f32.mrb[0].mxu0
      %v1373 = vpop.f32.mrb[0].mxu0
      %v1374 = vadd.f32 %v817, %v1373
      %v1375 = vpop.f32.mrb[0].mxu0
      %1376 = vmatprep.mubr.bf16.mxu0 0
      %1377 = vmatmul.mubr.bf16.gmra.mrb[0].mxu0 %v1136
      %v1378 = vpop.f32.mrb[0].mxu0
      %v1379 = vadd.f32 %v822, %v1378
      %v1380 = vpop.f32.mrb[0].mxu0
      %v1381 = vpop.f32.mrb[0].mxu0
      %v1382 = vadd.f32 %v825, %v1381
      %v1383 = vpop.f32.mrb[0].mxu0
      %1384 = vmatprep.mubr.bf16.mxu0 0
      %1385 = vmatmul.mubr.bf16.gmra.mrb[0].mxu0 %v1139
      %v1386 = vpop.f32.mrb[0].mxu0
      %v1387 = vadd.f32 %v830, %v1386
      %v1388 = vpop.f32.mrb[0].mxu0
      %v1389 = vpop.f32.mrb[0].mxu0
      %v1390 = vadd.f32 %v833, %v1389
      %v1391 = vpop.f32.mrb[0].mxu0
      %1392 = vmatprep.mubr.bf16.mxu0 0
      %1393 = vmatmul.mubr.bf16.gmra.mrb[0].mxu0 %v1142
      %v1394 = vpop.f32.mrb[0].mxu0
      %v1395 = vadd.f32 %v838, %v1394
      %v1396 = vpop.f32.mrb[0].mxu0
      %v1397 = vpop.f32.mrb[0].mxu0
      %v1398 = vadd.f32 %v841, %v1397
      %v1399 = vpop.f32.mrb[0].mxu0
      %1400 = vmatprep.mubr.bf16.mxu0 0
      %1401 = vmatmul.mubr.bf16.gmra.mrb[0].mxu0 %v1145
      %v1402 = vpop.f32.mrb[0].mxu0
      %v1403 = vadd.f32 %v846, %v1402
      %v1404 = vpop.f32.mrb[0].mxu0
      %v1405 = vpop.f32.mrb[0].mxu0
      %v1406 = vadd.f32 %v849, %v1405
      %v1407 = vpop.f32.mrb[0].mxu0
      %1408 = vmatprep.mubr.bf16.mxu0 0
      %1409 = vmatmul.mubr.bf16.gmra.mrb[0].mxu0 %v1148
      %v1410 = vpop.f32.mrb[0].mxu0
      %v1411 = vadd.f32 %v854, %v1410
      %v1412 = vpop.f32.mrb[0].mxu0
      %v1413 = vpop.f32.mrb[0].mxu0
      %v1414 = vadd.f32 %v857, %v1413
      %v1415 = vpop.f32.mrb[0].mxu0
      %1416 = vmatprep.mubr.bf16.mxu0 0
      %1417 = vmatmul.mubr.bf16.gmra.mrb[0].mxu0 %v1151
      %v1418 = vpop.f32.mrb[0].mxu0
      %v1419 = vadd.f32 %v862, %v1418
      %v1420 = vpop.f32.mrb[0].mxu0
      %v1421 = vpop.f32.mrb[0].mxu0
      %v1422 = vadd.f32 %v865, %v1421
      %v1423 = vpop.f32.mrb[0].mxu0
      %1424 = vmatprep.mubr.bf16.mxu0 0
      %1425 = vmatmul.mubr.bf16.gmra.mrb[0].mxu0 %v1154
      %v1426 = vpop.f32.mrb[0].mxu0
      %v1427 = vadd.f32 %v870, %v1426
      %v1428 = vpop.f32.mrb[0].mxu0
      %v1429 = vpop.f32.mrb[0].mxu0
      %v1430 = vadd.f32 %v873, %v1429
      %v1431 = vpop.f32.mrb[0].mxu0
      %1432 = vmatprep.mubr.bf16.mxu0 0
      %1433 = vmatmul.mubr.bf16.gmra.mrb[0].mxu0 %v1157
      %v1434 = vpop.f32.mrb[0].mxu0
      %v1435 = vadd.f32 %v878, %v1434
      %v1436 = vpop.f32.mrb[0].mxu0
      %v1437 = vpop.f32.mrb[0].mxu0
      %v1438 = vadd.f32 %v881, %v1437
      %v1439 = vpop.f32.mrb[0].mxu0
      %1440 = vmatprep.mubr.bf16.mxu0 0
      %1441 = vmatmul.mubr.bf16.gmra.mrb[0].mxu0 %v1160
      %v1442 = vpop.f32.mrb[0].mxu0
      %v1443 = vadd.f32 %v886, %v1442
      %v1444 = vpop.f32.mrb[0].mxu0
      %v1445 = vpop.f32.mrb[0].mxu0
      %v1446 = vadd.f32 %v889, %v1445
      %v1447 = vpop.f32.mrb[0].mxu0
      %1448 = vmatprep.mubr.bf16.mxu0 0
      %1449 = vmatmul.mubr.bf16.gmra.mrb[0].mxu0 %v1163
      %v1450 = vpop.f32.mrb[0].mxu0
      %v1451 = vadd.f32 %v894, %v1450
      %v1452 = vpop.f32.mrb[0].mxu0
      %v1453 = vpop.f32.mrb[0].mxu0
      %v1454 = vadd.f32 %v897, %v1453
      %v1455 = vpop.f32.mrb[0].mxu0
      %1456 = vdwg.mxu0
      %s1457 = sadd.s32 %s195, 32
      %s1458 = sshra.s32 %s1457, 3
      %s1459 = sand.u32 %s1457, 7
      %s1460 = smul.addr %s1458, 4
      %s1461 = scalar_lea.vmem %s183, %s1460
      %v1462 = vld [vmem:[%s1461] sm:$0xf]
      %v1463 = vld [vmem:[%s1461 + $0x4] sm:$0xf]
      %v1464 = vld [vmem:[%s1461 + $0x8] sm:$0xf]
      %v1465 = vld [vmem:[%s1461 + $0xc] sm:$0xf]
      %v1466 = vld [vmem:[%s1461 + $0x10] sm:$0xf]
      %v1467 = vld [vmem:[%s1461 + $0x14] sm:$0xf]
      %v1468 = vld [vmem:[%s1461 + $0x18] sm:$0xf]
      %v1469 = vld [vmem:[%s1461 + $0x1c] sm:$0xf]
      %v1470 = vld [vmem:[%s1461 + $0x20] sm:$0xf]
      %v1471 = vld [vmem:[%s1461 + $0x24] sm:$0xf]
      %v1472 = vld [vmem:[%s1461 + $0x28] sm:$0xf]
      %v1473 = vld [vmem:[%s1461 + $0x2c] sm:$0xf]
      %v1474 = vld [vmem:[%s1461 + $0x30] sm:$0xf]
      %v1475 = vld [vmem:[%s1461 + $0x34] sm:$0xf]
      %v1476 = vld [vmem:[%s1461 + $0x38] sm:$0xf]
      %v1477 = vld [vmem:[%s1461 + $0x3c] sm:$0xf]
      %v1478 = vld [vmem:[%s1461 + $0x40] sm:$0xf]
      %v1479 = vld [vmem:[%s1461 + $0x44] sm:$0xf]
      %v1480 = vld [vmem:[%s1461 + $0x48] sm:$0xf]
      %v1481 = vld [vmem:[%s1461 + $0x4c] sm:$0xf]
      %v1482 = vld [vmem:[%s1461 + $0x50] sm:$0xf]
      %v1483 = vld [vmem:[%s1461 + $0x54] sm:$0xf]
      %v1484 = vld [vmem:[%s1461 + $0x58] sm:$0xf]
      %v1485 = vld [vmem:[%s1461 + $0x5c] sm:$0xf]
      %v1486 = vld [vmem:[%s1461 + $0x60] sm:$0xf]
      %v1487 = vld [vmem:[%s1461 + $0x64] sm:$0xf]
      %v1488 = vld [vmem:[%s1461 + $0x68] sm:$0xf]
      %v1489 = vld [vmem:[%s1461 + $0x6c] sm:$0xf]
      %v1490 = vld [vmem:[%s1461 + $0x70] sm:$0xf]
      %v1491 = vld [vmem:[%s1461 + $0x74] sm:$0xf]
      %v1492 = vld [vmem:[%s1461 + $0x78] sm:$0xf]
      %v1493 = vld [vmem:[%s1461 + $0x7c] sm:$0xf]
      %v1494 = vld [vmem:[%s1461 + $0x80] sm:$0xf]
      %v1495 = vld [vmem:[%s1461 + $0x84] sm:$0xf]
      %v1496 = vld [vmem:[%s1461 + $0x88] sm:$0xf]
      %v1497 = vld [vmem:[%s1461 + $0x8c] sm:$0xf]
      %v1498 = vld [vmem:[%s1461 + $0x90] sm:$0xf]
      %v1499 = vld [vmem:[%s1461 + $0x94] sm:$0xf]
      %v1500 = vld [vmem:[%s1461 + $0x98] sm:$0xf]
      %v1501 = vld [vmem:[%s1461 + $0x9c] sm:$0xf]
      %v1502 = vld [vmem:[%s1461 + $0xa0] sm:$0xf]
      %v1503 = vld [vmem:[%s1461 + $0xa4] sm:$0xf]
      %v1504 = vld [vmem:[%s1461 + $0xa8] sm:$0xf]
      %v1505 = vld [vmem:[%s1461 + $0xac] sm:$0xf]
      %v1506 = vld [vmem:[%s1461 + $0xb0] sm:$0xf]
      %v1507 = vld [vmem:[%s1461 + $0xb4] sm:$0xf]
      %v1508 = vld [vmem:[%s1461 + $0xb8] sm:$0xf]
      %v1509 = vld [vmem:[%s1461 + $0xbc] sm:$0xf]
      %v1510 = vld [vmem:[%s1461 + $0xc0] sm:$0xf]
      %v1511 = vld [vmem:[%s1461 + $0xc4] sm:$0xf]
      %v1512 = vld [vmem:[%s1461 + $0xc8] sm:$0xf]
      %v1513 = vld [vmem:[%s1461 + $0xcc] sm:$0xf]
      %v1514 = vld [vmem:[%s1461 + $0xd0] sm:$0xf]
      %v1515 = vld [vmem:[%s1461 + $0xd4] sm:$0xf]
      %v1516 = vld [vmem:[%s1461 + $0xd8] sm:$0xf]
      %v1517 = vld [vmem:[%s1461 + $0xdc] sm:$0xf]
      %v1518 = vld [vmem:[%s1461 + $0xe0] sm:$0xf]
      %v1519 = vld [vmem:[%s1461 + $0xe4] sm:$0xf]
      %v1520 = vld [vmem:[%s1461 + $0xe8] sm:$0xf]
      %v1521 = vld [vmem:[%s1461 + $0xec] sm:$0xf]
      %v1522 = vld [vmem:[%s1461 + $0xf0] sm:$0xf]
      %v1523 = vld [vmem:[%s1461 + $0xf4] sm:$0xf]
      %v1524 = vld [vmem:[%s1461 + $0xf8] sm:$0xf]
      %v1525 = vld [vmem:[%s1461 + $0xfc] sm:$0xf]
      %s1526 = scalar_lea.vmem %s1, 24
      %v1527 = vld [vmem:[%s1526] sm:$0xf]
      %v1528 = vld [vmem:[%s1526 + $0x4] sm:$0xf]
      %v1529 = vld [vmem:[%s1526 + $0x8] sm:$0x7]
      %v1594 = vunpack.c.l.b16 %v1462
      %v1595 = vunpack.c.l.b16 %v1463
      %v1596 = vunpack.c.l.b16 %v1464
      %v1597 = vunpack.c.l.b16 %v1465
      %v1598 = vunpack.c.l.b16 %v1466
      %v1599 = vunpack.c.l.b16 %v1467
      %v1600 = vunpack.c.l.b16 %v1468
      %v1601 = vunpack.c.l.b16 %v1469
      %v1602 = vunpack.c.l.b16 %v1470
      %v1603 = vunpack.c.l.b16 %v1471
      %v1604 = vunpack.c.l.b16 %v1472
      %v1605 = vunpack.c.l.b16 %v1473
      %v1606 = vunpack.c.l.b16 %v1474
      %v1607 = vunpack.c.l.b16 %v1475
      %v1608 = vunpack.c.l.b16 %v1476
      %v1609 = vunpack.c.l.b16 %v1477
      %v1610 = vunpack.c.l.b16 %v1478
      %v1611 = vunpack.c.l.b16 %v1479
      %v1612 = vunpack.c.l.b16 %v1480
      %v1613 = vunpack.c.l.b16 %v1481
      %v1614 = vunpack.c.l.b16 %v1482
      %v1615 = vunpack.c.l.b16 %v1483
      %v1616 = vunpack.c.l.b16 %v1484
      %v1617 = vunpack.c.l.b16 %v1485
      %v1618 = vunpack.c.l.b16 %v1486
      %v1619 = vunpack.c.l.b16 %v1487
      %v1620 = vunpack.c.l.b16 %v1488
      %v1621 = vunpack.c.l.b16 %v1489
      %v1622 = vunpack.c.l.b16 %v1490
      %v1623 = vunpack.c.l.b16 %v1491
      %v1624 = vunpack.c.l.b16 %v1492
      %v1625 = vunpack.c.l.b16 %v1493
      %v1626 = vunpack.c.l.b16 %v1494
      %v1627 = vunpack.c.l.b16 %v1495
      %v1628 = vunpack.c.l.b16 %v1496
      %v1629 = vunpack.c.l.b16 %v1497
      %v1630 = vunpack.c.l.b16 %v1498
      %v1631 = vunpack.c.l.b16 %v1499
      %v1632 = vunpack.c.l.b16 %v1500
      %v1633 = vunpack.c.l.b16 %v1501
      %v1634 = vunpack.c.l.b16 %v1502
      %v1635 = vunpack.c.l.b16 %v1503
      %v1636 = vunpack.c.l.b16 %v1504
      %v1637 = vunpack.c.l.b16 %v1505
      %v1638 = vunpack.c.l.b16 %v1506
      %v1639 = vunpack.c.l.b16 %v1507
      %v1640 = vunpack.c.l.b16 %v1508
      %v1641 = vunpack.c.l.b16 %v1509
      %v1642 = vunpack.c.l.b16 %v1510
      %v1643 = vunpack.c.l.b16 %v1511
      %v1644 = vunpack.c.l.b16 %v1512
      %v1645 = vunpack.c.l.b16 %v1513
      %v1646 = vunpack.c.l.b16 %v1514
      %v1647 = vunpack.c.l.b16 %v1515
      %v1648 = vunpack.c.l.b16 %v1516
      %v1649 = vunpack.c.l.b16 %v1517
      %v1650 = vunpack.c.l.b16 %v1518
      %v1651 = vunpack.c.l.b16 %v1519
      %v1652 = vunpack.c.l.b16 %v1520
      %v1653 = vunpack.c.l.b16 %v1521
      %v1654 = vunpack.c.l.b16 %v1522
      %v1655 = vunpack.c.l.b16 %v1523
      %v1656 = vunpack.c.l.b16 %v1524
      %v1657 = vunpack.c.l.b16 %v1525
      %v1658 = vpack.c.b16 %v1595, %v1594
      %v1659 = vpack.c.b16 %v1597, %v1596
      %v1660 = vpack.c.b16 %v1599, %v1598
      %v1661 = vpack.c.b16 %v1601, %v1600
      %v1662 = vpack.c.b16 %v1603, %v1602
      %v1663 = vpack.c.b16 %v1605, %v1604
      %v1664 = vpack.c.b16 %v1607, %v1606
      %v1665 = vpack.c.b16 %v1609, %v1608
      %v1666 = vpack.c.b16 %v1611, %v1610
      %v1667 = vpack.c.b16 %v1613, %v1612
      %v1668 = vpack.c.b16 %v1615, %v1614
      %v1669 = vpack.c.b16 %v1617, %v1616
      %v1670 = vpack.c.b16 %v1619, %v1618
      %v1671 = vpack.c.b16 %v1621, %v1620
      %v1672 = vpack.c.b16 %v1623, %v1622
      %v1673 = vpack.c.b16 %v1625, %v1624
      %v1674 = vpack.c.b16 %v1627, %v1626
      %v1675 = vpack.c.b16 %v1629, %v1628
      %v1676 = vpack.c.b16 %v1631, %v1630
      %v1677 = vpack.c.b16 %v1633, %v1632
      %v1678 = vpack.c.b16 %v1635, %v1634
      %v1679 = vpack.c.b16 %v1637, %v1636
      %v1680 = vpack.c.b16 %v1639, %v1638
      %v1681 = vpack.c.b16 %v1641, %v1640
      %v1682 = vpack.c.b16 %v1643, %v1642
      %v1683 = vpack.c.b16 %v1645, %v1644
      %v1684 = vpack.c.b16 %v1647, %v1646
      %v1685 = vpack.c.b16 %v1649, %v1648
      %v1686 = vpack.c.b16 %v1651, %v1650
      %v1687 = vpack.c.b16 %v1653, %v1652
      %v1688 = vpack.c.b16 %v1655, %v1654
      %v1689 = vpack.c.b16 %v1657, %v1656
      %v1693 = vunpack.c.l.b16 %v1527
      %v1694 = vunpack.c.l.b16 %v1528
      %v1695 = vunpack.c.l.b16 %v1529
      %v1696 = vpack.c.b16 %v1694, %v1693
      %v1697 = vpack.c.b16 %v1695, %v1695
      %v1700 = vsel %vm507, %v1658, 0
      %v1703 = vsel %vm507, %v1659, 0
      %v1706 = vsel %vm507, %v1660, 0
      %v1709 = vsel %vm507, %v1661, 0
      %v1712 = vsel %vm507, %v1662, 0
      %v1715 = vsel %vm507, %v1663, 0
      %v1718 = vsel %vm507, %v1664, 0
      %v1721 = vsel %vm507, %v1665, 0
      %v1724 = vsel %vm507, %v1666, 0
      %v1727 = vsel %vm507, %v1667, 0
      %v1730 = vsel %vm507, %v1668, 0
      %v1733 = vsel %vm507, %v1669, 0
      %v1736 = vsel %vm507, %v1670, 0
      %v1739 = vsel %vm507, %v1671, 0
      %v1742 = vsel %vm507, %v1672, 0
      %v1745 = vsel %vm507, %v1673, 0
      %v1748 = vsel %vm507, %v1674, 0
      %v1751 = vsel %vm507, %v1675, 0
      %v1754 = vsel %vm507, %v1676, 0
      %v1757 = vsel %vm507, %v1677, 0
      %v1760 = vsel %vm507, %v1678, 0
      %v1763 = vsel %vm507, %v1679, 0
      %v1766 = vsel %vm507, %v1680, 0
      %v1769 = vsel %vm507, %v1681, 0
      %v1772 = vsel %vm507, %v1682, 0
      %v1775 = vsel %vm507, %v1683, 0
      %v1778 = vsel %vm507, %v1684, 0
      %v1781 = vsel %vm507, %v1685, 0
      %v1784 = vsel %vm507, %v1686, 0
      %v1787 = vsel %vm507, %v1687, 0
      %v1790 = vsel %vm507, %v1688, 0
      %v1793 = vsel %vm507, %v1689, 0
      %v1796 = vand.u32 %v1697, %v607
      %1798 = vmatprep.subr.bf16.mxu0 0
      %1799 = vmatpush1.bf16.msra.mxu0 %v1696
      %1800 = vmatprep.subr.bf16.mxu0 0
      %1801 = vmatpush1.bf16.msra.mxu0 %v1796
      %1802 = vmatprep.subr.bf16.mxu0 0
      %1803 = vmatpush1.bf16.msra.mxu0 0
      %1804 = vmatprep.subr.bf16.mxu0 0
      %1805 = vmatpush1.bf16.msra.mxu0 0
      %1806 = vmatprep.subr.bf16.mxu0 0
      %1807 = vmatpush1.bf16.msra.mxu0 0
      %1808 = vmatprep.subr.bf16.mxu0 0
      %1809 = vmatpush1.bf16.msra.mxu0 0
      %1810 = vmatprep.subr.bf16.mxu0 0
      %1811 = vmatpush1.bf16.msra.mxu0 0
      %1812 = vmatprep.subr.bf16.mxu0 0
      %1813 = vmatpush1.bf16.msra.mxu0 0
      %1814 = vmatprep.subr.bf16.mxu0 0
      %1815 = vmatpush1.bf16.msra.mxu0 0
      %1816 = vmatprep.subr.bf16.mxu0 0
      %1817 = vmatpush1.bf16.msra.mxu0 0
      %1818 = vmatprep.subr.bf16.mxu0 0
      %1819 = vmatpush1.bf16.msra.mxu0 0
      %1820 = vmatprep.subr.bf16.mxu0 0
      %1821 = vmatpush1.bf16.msra.mxu0 0
      %1822 = vmatprep.subr.bf16.mxu0 0
      %1823 = vmatpush1.bf16.msra.mxu0 0
      %1824 = vmatprep.subr.bf16.mxu0 0
      %1825 = vmatpush1.bf16.msra.mxu0 0
      %1826 = vmatprep.subr.bf16.mxu0 0
      %1827 = vmatpush1.bf16.msra.mxu0 0
      %1828 = vmatprep.subr.bf16.mxu0 0
      %1829 = vmatpush1.bf16.msra.mxu0 0
      %1830 = vmatprep.mubr.bf16.mxu0 0
      %1831 = vmatmul.mubr.bf16.gmra.mrb[0].mxu0 %v1700
      %v1832 = vpop.f32.mrb[0].mxu0
      %v1833 = vadd.f32 0.0, %v1832
      %v1834 = vpop.f32.mrb[0].mxu0
      %v1835 = vpop.f32.mrb[0].mxu0
      %v1836 = vadd.f32 0.0, %v1835
      %v1837 = vpop.f32.mrb[0].mxu0
      %1838 = vmatprep.mubr.bf16.mxu0 0
      %1839 = vmatmul.mubr.bf16.gmra.mrb[0].mxu0 %v1703
      %v1840 = vpop.f32.mrb[0].mxu0
      %v1841 = vadd.f32 0.0, %v1840
      %v1842 = vpop.f32.mrb[0].mxu0
      %v1843 = vpop.f32.mrb[0].mxu0
      %v1844 = vadd.f32 0.0, %v1843
      %v1845 = vpop.f32.mrb[0].mxu0
      %1846 = vmatprep.mubr.bf16.mxu0 0
      %1847 = vmatmul.mubr.bf16.gmra.mrb[0].mxu0 %v1706
      %v1848 = vpop.f32.mrb[0].mxu0
      %v1849 = vadd.f32 0.0, %v1848
      %v1850 = vpop.f32.mrb[0].mxu0
      %v1851 = vpop.f32.mrb[0].mxu0
      %v1852 = vadd.f32 0.0, %v1851
      %v1853 = vpop.f32.mrb[0].mxu0
      %1854 = vmatprep.mubr.bf16.mxu0 0
      %1855 = vmatmul.mubr.bf16.gmra.mrb[0].mxu0 %v1709
      %v1856 = vpop.f32.mrb[0].mxu0
      %v1857 = vadd.f32 0.0, %v1856
      %v1858 = vpop.f32.mrb[0].mxu0
      %v1859 = vpop.f32.mrb[0].mxu0
      %v1860 = vadd.f32 0.0, %v1859
      %v1861 = vpop.f32.mrb[0].mxu0
      %1862 = vmatprep.mubr.bf16.mxu0 0
      %1863 = vmatmul.mubr.bf16.gmra.mrb[0].mxu0 %v1712
      %v1864 = vpop.f32.mrb[0].mxu0
      %v1865 = vadd.f32 0.0, %v1864
      %v1866 = vpop.f32.mrb[0].mxu0
      %v1867 = vpop.f32.mrb[0].mxu0
      %v1868 = vadd.f32 0.0, %v1867
      %v1869 = vpop.f32.mrb[0].mxu0
      %1870 = vmatprep.mubr.bf16.mxu0 0
      %1871 = vmatmul.mubr.bf16.gmra.mrb[0].mxu0 %v1715
      %v1872 = vpop.f32.mrb[0].mxu0
      %v1873 = vadd.f32 0.0, %v1872
      %v1874 = vpop.f32.mrb[0].mxu0
      %v1875 = vpop.f32.mrb[0].mxu0
      %v1876 = vadd.f32 0.0, %v1875
      %v1877 = vpop.f32.mrb[0].mxu0
      %1878 = vmatprep.mubr.bf16.mxu0 0
      %1879 = vmatmul.mubr.bf16.gmra.mrb[0].mxu0 %v1718
      %v1880 = vpop.f32.mrb[0].mxu0
      %v1881 = vadd.f32 0.0, %v1880
      %v1882 = vpop.f32.mrb[0].mxu0
      %v1883 = vpop.f32.mrb[0].mxu0
      %v1884 = vadd.f32 0.0, %v1883
      %v1885 = vpop.f32.mrb[0].mxu0
      %1886 = vmatprep.mubr.bf16.mxu0 0
      %1887 = vmatmul.mubr.bf16.gmra.mrb[0].mxu0 %v1721
      %v1888 = vpop.f32.mrb[0].mxu0
      %v1889 = vadd.f32 0.0, %v1888
      %v1890 = vpop.f32.mrb[0].mxu0
      %v1891 = vpop.f32.mrb[0].mxu0
      %v1892 = vadd.f32 0.0, %v1891
      %v1893 = vpop.f32.mrb[0].mxu0
      %1894 = vmatprep.mubr.bf16.mxu0 0
      %1895 = vmatmul.mubr.bf16.gmra.mrb[0].mxu0 %v1724
      %v1896 = vpop.f32.mrb[0].mxu0
      %v1897 = vadd.f32 0.0, %v1896
      %v1898 = vpop.f32.mrb[0].mxu0
      %v1899 = vpop.f32.mrb[0].mxu0
      %v1900 = vadd.f32 0.0, %v1899
      %v1901 = vpop.f32.mrb[0].mxu0
      %1902 = vmatprep.mubr.bf16.mxu0 0
      %1903 = vmatmul.mubr.bf16.gmra.mrb[0].mxu0 %v1727
      %v1904 = vpop.f32.mrb[0].mxu0
      %v1905 = vadd.f32 0.0, %v1904
      %v1906 = vpop.f32.mrb[0].mxu0
      %v1907 = vpop.f32.mrb[0].mxu0
      %v1908 = vadd.f32 0.0, %v1907
      %v1909 = vpop.f32.mrb[0].mxu0
      %1910 = vmatprep.mubr.bf16.mxu0 0
      %1911 = vmatmul.mubr.bf16.gmra.mrb[0].mxu0 %v1730
      %v1912 = vpop.f32.mrb[0].mxu0
      %v1913 = vadd.f32 0.0, %v1912
      %v1914 = vpop.f32.mrb[0].mxu0
      %v1915 = vpop.f32.mrb[0].mxu0
      %v1916 = vadd.f32 0.0, %v1915
      %v1917 = vpop.f32.mrb[0].mxu0
      %1918 = vmatprep.mubr.bf16.mxu0 0
      %1919 = vmatmul.mubr.bf16.gmra.mrb[0].mxu0 %v1733
      %v1920 = vpop.f32.mrb[0].mxu0
      %v1921 = vadd.f32 0.0, %v1920
      %v1922 = vpop.f32.mrb[0].mxu0
      %v1923 = vpop.f32.mrb[0].mxu0
      %v1924 = vadd.f32 0.0, %v1923
      %v1925 = vpop.f32.mrb[0].mxu0
      %1926 = vmatprep.mubr.bf16.mxu0 0
      %1927 = vmatmul.mubr.bf16.gmra.mrb[0].mxu0 %v1736
      %v1928 = vpop.f32.mrb[0].mxu0
      %v1929 = vadd.f32 0.0, %v1928
      %v1930 = vpop.f32.mrb[0].mxu0
      %v1931 = vpop.f32.mrb[0].mxu0
      %v1932 = vadd.f32 0.0, %v1931
      %v1933 = vpop.f32.mrb[0].mxu0
      %1934 = vmatprep.mubr.bf16.mxu0 0
      %1935 = vmatmul.mubr.bf16.gmra.mrb[0].mxu0 %v1739
      %v1936 = vpop.f32.mrb[0].mxu0
      %v1937 = vadd.f32 0.0, %v1936
      %v1938 = vpop.f32.mrb[0].mxu0
      %v1939 = vpop.f32.mrb[0].mxu0
      %v1940 = vadd.f32 0.0, %v1939
      %v1941 = vpop.f32.mrb[0].mxu0
      %1942 = vmatprep.mubr.bf16.mxu0 0
      %1943 = vmatmul.mubr.bf16.gmra.mrb[0].mxu0 %v1742
      %v1944 = vpop.f32.mrb[0].mxu0
      %v1945 = vadd.f32 0.0, %v1944
      %v1946 = vpop.f32.mrb[0].mxu0
      %v1947 = vpop.f32.mrb[0].mxu0
      %v1948 = vadd.f32 0.0, %v1947
      %v1949 = vpop.f32.mrb[0].mxu0
      %1950 = vmatprep.mubr.bf16.mxu0 0
      %1951 = vmatmul.mubr.bf16.gmra.mrb[0].mxu0 %v1745
      %v1952 = vpop.f32.mrb[0].mxu0
      %v1953 = vadd.f32 0.0, %v1952
      %v1954 = vpop.f32.mrb[0].mxu0
      %v1955 = vpop.f32.mrb[0].mxu0
      %v1956 = vadd.f32 0.0, %v1955
      %v1957 = vpop.f32.mrb[0].mxu0
      %1958 = vmatprep.mubr.bf16.mxu0 0
      %1959 = vmatmul.mubr.bf16.gmra.mrb[0].mxu0 %v1748
      %v1960 = vpop.f32.mrb[0].mxu0
      %v1961 = vadd.f32 0.0, %v1960
      %v1962 = vpop.f32.mrb[0].mxu0
      %v1963 = vpop.f32.mrb[0].mxu0
      %v1964 = vadd.f32 0.0, %v1963
      %v1965 = vpop.f32.mrb[0].mxu0
      %1966 = vmatprep.mubr.bf16.mxu0 0
      %1967 = vmatmul.mubr.bf16.gmra.mrb[0].mxu0 %v1751
      %v1968 = vpop.f32.mrb[0].mxu0
      %v1969 = vadd.f32 0.0, %v1968
      %v1970 = vpop.f32.mrb[0].mxu0
      %v1971 = vpop.f32.mrb[0].mxu0
      %v1972 = vadd.f32 0.0, %v1971
      %v1973 = vpop.f32.mrb[0].mxu0
      %1974 = vmatprep.mubr.bf16.mxu0 0
      %1975 = vmatmul.mubr.bf16.gmra.mrb[0].mxu0 %v1754
      %v1976 = vpop.f32.mrb[0].mxu0
      %v1977 = vadd.f32 0.0, %v1976
      %v1978 = vpop.f32.mrb[0].mxu0
      %v1979 = vpop.f32.mrb[0].mxu0
      %v1980 = vadd.f32 0.0, %v1979
      %v1981 = vpop.f32.mrb[0].mxu0
      %1982 = vmatprep.mubr.bf16.mxu0 0
      %1983 = vmatmul.mubr.bf16.gmra.mrb[0].mxu0 %v1757
      %v1984 = vpop.f32.mrb[0].mxu0
      %v1985 = vadd.f32 0.0, %v1984
      %v1986 = vpop.f32.mrb[0].mxu0
      %v1987 = vpop.f32.mrb[0].mxu0
      %v1988 = vadd.f32 0.0, %v1987
      %v1989 = vpop.f32.mrb[0].mxu0
      %1990 = vmatprep.mubr.bf16.mxu0 0
      %1991 = vmatmul.mubr.bf16.gmra.mrb[0].mxu0 %v1760
      %v1992 = vpop.f32.mrb[0].mxu0
      %v1993 = vadd.f32 0.0, %v1992
      %v1994 = vpop.f32.mrb[0].mxu0
      %v1995 = vpop.f32.mrb[0].mxu0
      %v1996 = vadd.f32 0.0, %v1995
      %v1997 = vpop.f32.mrb[0].mxu0
      %1998 = vmatprep.mubr.bf16.mxu0 0
      %1999 = vmatmul.mubr.bf16.gmra.mrb[0].mxu0 %v1763
      %v2000 = vpop.f32.mrb[0].mxu0
      %v2001 = vadd.f32 0.0, %v2000
      %v2002 = vpop.f32.mrb[0].mxu0
      %v2003 = vpop.f32.mrb[0].mxu0
      %v2004 = vadd.f32 0.0, %v2003
      %v2005 = vpop.f32.mrb[0].mxu0
      %2006 = vmatprep.mubr.bf16.mxu0 0
      %2007 = vmatmul.mubr.bf16.gmra.mrb[0].mxu0 %v1766
      %v2008 = vpop.f32.mrb[0].mxu0
      %v2009 = vadd.f32 0.0, %v2008
      %v2010 = vpop.f32.mrb[0].mxu0
      %v2011 = vpop.f32.mrb[0].mxu0
      %v2012 = vadd.f32 0.0, %v2011
      %v2013 = vpop.f32.mrb[0].mxu0
      %2014 = vmatprep.mubr.bf16.mxu0 0
      %2015 = vmatmul.mubr.bf16.gmra.mrb[0].mxu0 %v1769
      %v2016 = vpop.f32.mrb[0].mxu0
      %v2017 = vadd.f32 0.0, %v2016
      %v2018 = vpop.f32.mrb[0].mxu0
      %v2019 = vpop.f32.mrb[0].mxu0
      %v2020 = vadd.f32 0.0, %v2019
      %v2021 = vpop.f32.mrb[0].mxu0
      %2022 = vmatprep.mubr.bf16.mxu0 0
      %2023 = vmatmul.mubr.bf16.gmra.mrb[0].mxu0 %v1772
      %v2024 = vpop.f32.mrb[0].mxu0
      %v2025 = vadd.f32 0.0, %v2024
      %v2026 = vpop.f32.mrb[0].mxu0
      %v2027 = vpop.f32.mrb[0].mxu0
      %v2028 = vadd.f32 0.0, %v2027
      %v2029 = vpop.f32.mrb[0].mxu0
      %2030 = vmatprep.mubr.bf16.mxu0 0
      %2031 = vmatmul.mubr.bf16.gmra.mrb[0].mxu0 %v1775
      %v2032 = vpop.f32.mrb[0].mxu0
      %v2033 = vadd.f32 0.0, %v2032
      %v2034 = vpop.f32.mrb[0].mxu0
      %v2035 = vpop.f32.mrb[0].mxu0
      %v2036 = vadd.f32 0.0, %v2035
      %v2037 = vpop.f32.mrb[0].mxu0
      %2038 = vmatprep.mubr.bf16.mxu0 0
      %2039 = vmatmul.mubr.bf16.gmra.mrb[0].mxu0 %v1778
      %v2040 = vpop.f32.mrb[0].mxu0
      %v2041 = vadd.f32 0.0, %v2040
      %v2042 = vpop.f32.mrb[0].mxu0
      %v2043 = vpop.f32.mrb[0].mxu0
      %v2044 = vadd.f32 0.0, %v2043
      %v2045 = vpop.f32.mrb[0].mxu0
      %2046 = vmatprep.mubr.bf16.mxu0 0
      %2047 = vmatmul.mubr.bf16.gmra.mrb[0].mxu0 %v1781
      %v2048 = vpop.f32.mrb[0].mxu0
      %v2049 = vadd.f32 0.0, %v2048
      %v2050 = vpop.f32.mrb[0].mxu0
      %v2051 = vpop.f32.mrb[0].mxu0
      %v2052 = vadd.f32 0.0, %v2051
      %v2053 = vpop.f32.mrb[0].mxu0
      %2054 = vmatprep.mubr.bf16.mxu0 0
      %2055 = vmatmul.mubr.bf16.gmra.mrb[0].mxu0 %v1784
      %v2056 = vpop.f32.mrb[0].mxu0
      %v2057 = vadd.f32 0.0, %v2056
      %v2058 = vpop.f32.mrb[0].mxu0
      %v2059 = vpop.f32.mrb[0].mxu0
      %v2060 = vadd.f32 0.0, %v2059
      %v2061 = vpop.f32.mrb[0].mxu0
      %2062 = vmatprep.mubr.bf16.mxu0 0
      %2063 = vmatmul.mubr.bf16.gmra.mrb[0].mxu0 %v1787
      %v2064 = vpop.f32.mrb[0].mxu0
      %v2065 = vadd.f32 0.0, %v2064
      %v2066 = vpop.f32.mrb[0].mxu0
      %v2067 = vpop.f32.mrb[0].mxu0
      %v2068 = vadd.f32 0.0, %v2067
      %v2069 = vpop.f32.mrb[0].mxu0
      %2070 = vmatprep.mubr.bf16.mxu0 0
      %2071 = vmatmul.mubr.bf16.gmra.mrb[0].mxu0 %v1790
      %v2072 = vpop.f32.mrb[0].mxu0
      %v2073 = vadd.f32 0.0, %v2072
      %v2074 = vpop.f32.mrb[0].mxu0
      %v2075 = vpop.f32.mrb[0].mxu0
      %v2076 = vadd.f32 0.0, %v2075
      %v2077 = vpop.f32.mrb[0].mxu0
      %2078 = vmatprep.mubr.bf16.mxu0 0
      %2079 = vmatmul.mubr.bf16.gmra.mrb[0].mxu0 %v1793
      %v2080 = vpop.f32.mrb[0].mxu0
      %v2081 = vadd.f32 0.0, %v2080
      %v2082 = vpop.f32.mrb[0].mxu0
      %v2083 = vpop.f32.mrb[0].mxu0
      %v2084 = vadd.f32 0.0, %v2083
      %v2085 = vpop.f32.mrb[0].mxu0
      %2086 = vdwg.mxu0
      %v2087 = vadd.f32 %v1203, %v1833
      %v2088 = vadd.f32 %v1206, %v1836
      %v2089 = vadd.f32 %v1211, %v1841
      %v2090 = vadd.f32 %v1214, %v1844
      %v2091 = vadd.f32 %v1219, %v1849
      %v2092 = vadd.f32 %v1222, %v1852
      %v2093 = vadd.f32 %v1227, %v1857
      %v2094 = vadd.f32 %v1230, %v1860
      %v2095 = vadd.f32 %v1235, %v1865
      %v2096 = vadd.f32 %v1238, %v1868
      %v2097 = vadd.f32 %v1243, %v1873
      %v2098 = vadd.f32 %v1246, %v1876
      %v2099 = vadd.f32 %v1251, %v1881
      %v2100 = vadd.f32 %v1254, %v1884
      %v2101 = vadd.f32 %v1259, %v1889
      %v2102 = vadd.f32 %v1262, %v1892
      %v2103 = vadd.f32 %v1267, %v1897
      %v2104 = vadd.f32 %v1270, %v1900
      %v2105 = vadd.f32 %v1275, %v1905
      %v2106 = vadd.f32 %v1278, %v1908
      %v2107 = vadd.f32 %v1283, %v1913
      %v2108 = vadd.f32 %v1286, %v1916
      %v2109 = vadd.f32 %v1291, %v1921
      %v2110 = vadd.f32 %v1294, %v1924
      %v2111 = vadd.f32 %v1299, %v1929
      %v2112 = vadd.f32 %v1302, %v1932
      %v2113 = vadd.f32 %v1307, %v1937
      %v2114 = vadd.f32 %v1310, %v1940
      %v2115 = vadd.f32 %v1315, %v1945
      %v2116 = vadd.f32 %v1318, %v1948
      %v2117 = vadd.f32 %v1323, %v1953
      %v2118 = vadd.f32 %v1326, %v1956
      %v2119 = vadd.f32 %v1331, %v1961
      %v2120 = vadd.f32 %v1334, %v1964
      %v2121 = vadd.f32 %v1339, %v1969
      %v2122 = vadd.f32 %v1342, %v1972
      %v2123 = vadd.f32 %v1347, %v1977
      %v2124 = vadd.f32 %v1350, %v1980
      %v2125 = vadd.f32 %v1355, %v1985
      %v2126 = vadd.f32 %v1358, %v1988
      %v2127 = vadd.f32 %v1363, %v1993
      %v2128 = vadd.f32 %v1366, %v1996
      %v2129 = vadd.f32 %v1371, %v2001
      %v2130 = vadd.f32 %v1374, %v2004
      %v2131 = vadd.f32 %v1379, %v2009
      %v2132 = vadd.f32 %v1382, %v2012
      %v2133 = vadd.f32 %v1387, %v2017
      %v2134 = vadd.f32 %v1390, %v2020
      %v2135 = vadd.f32 %v1395, %v2025
      %v2136 = vadd.f32 %v1398, %v2028
      %v2137 = vadd.f32 %v1403, %v2033
      %v2138 = vadd.f32 %v1406, %v2036
      %v2139 = vadd.f32 %v1411, %v2041
      %v2140 = vadd.f32 %v1414, %v2044
      %v2141 = vadd.f32 %v1419, %v2049
      %v2142 = vadd.f32 %v1422, %v2052
      %v2143 = vadd.f32 %v1427, %v2057
      %v2144 = vadd.f32 %v1430, %v2060
      %v2145 = vadd.f32 %v1435, %v2065
      %v2146 = vadd.f32 %v1438, %v2068
      %v2147 = vadd.f32 %v1443, %v2073
      %v2148 = vadd.f32 %v1446, %v2076
      %v2149 = vadd.f32 %v1451, %v2081
      %v2150 = vadd.f32 %v1454, %v2084
      %s2151 = sadd.s32 %s1458, 140
      %s2152 = smul.addr %s2151, 4
      %s2153 = scalar_lea.vmem %s183, %s2152
      %v2154 = vld [vmem:[%s2153] sm:$0xf]
      %v2155 = vld [vmem:[%s2153 + $0x4] sm:$0xf]
      %v2156 = vld [vmem:[%s2153 + $0x8] sm:$0xf]
      %v2157 = vld [vmem:[%s2153 + $0xc] sm:$0xf]
      %v2158 = vld [vmem:[%s2153 + $0x10] sm:$0xf]
      %v2159 = vld [vmem:[%s2153 + $0x14] sm:$0xf]
      %v2160 = vld [vmem:[%s2153 + $0x18] sm:$0xf]
      %v2161 = vld [vmem:[%s2153 + $0x1c] sm:$0xf]
      %v2162 = vld [vmem:[%s2153 + $0x20] sm:$0xf]
      %v2163 = vld [vmem:[%s2153 + $0x24] sm:$0xf]
      %v2164 = vld [vmem:[%s2153 + $0x28] sm:$0xf]
      %v2165 = vld [vmem:[%s2153 + $0x2c] sm:$0xf]
      %v2166 = vld [vmem:[%s2153 + $0x30] sm:$0xf]
      %v2167 = vld [vmem:[%s2153 + $0x34] sm:$0xf]
      %v2168 = vld [vmem:[%s2153 + $0x38] sm:$0xf]
      %v2169 = vld [vmem:[%s2153 + $0x3c] sm:$0xf]
      %v2170 = vld [vmem:[%s2153 + $0x40] sm:$0xf]
      %v2171 = vld [vmem:[%s2153 + $0x44] sm:$0xf]
      %v2172 = vld [vmem:[%s2153 + $0x48] sm:$0xf]
      %v2173 = vld [vmem:[%s2153 + $0x4c] sm:$0xf]
      %v2174 = vld [vmem:[%s2153 + $0x50] sm:$0xf]
      %v2175 = vld [vmem:[%s2153 + $0x54] sm:$0xf]
      %v2176 = vld [vmem:[%s2153 + $0x58] sm:$0xf]
      %v2177 = vld [vmem:[%s2153 + $0x5c] sm:$0xf]
      %v2178 = vld [vmem:[%s2153 + $0x60] sm:$0xf]
      %v2179 = vld [vmem:[%s2153 + $0x64] sm:$0xf]
      %v2180 = vld [vmem:[%s2153 + $0x68] sm:$0xf]
      %v2181 = vld [vmem:[%s2153 + $0x6c] sm:$0xf]
      %v2182 = vld [vmem:[%s2153 + $0x70] sm:$0xf]
      %v2183 = vld [vmem:[%s2153 + $0x74] sm:$0xf]
      %v2184 = vld [vmem:[%s2153 + $0x78] sm:$0xf]
      %v2185 = vld [vmem:[%s2153 + $0x7c] sm:$0xf]
      %v2186 = vld [vmem:[%s2153 + $0x80] sm:$0xf]
      %v2187 = vld [vmem:[%s2153 + $0x84] sm:$0xf]
      %v2188 = vld [vmem:[%s2153 + $0x88] sm:$0xf]
      %v2189 = vld [vmem:[%s2153 + $0x8c] sm:$0xf]
      %v2190 = vld [vmem:[%s2153 + $0x90] sm:$0xf]
      %v2191 = vld [vmem:[%s2153 + $0x94] sm:$0xf]
      %v2192 = vld [vmem:[%s2153 + $0x98] sm:$0xf]
      %v2193 = vld [vmem:[%s2153 + $0x9c] sm:$0xf]
      %v2194 = vld [vmem:[%s2153 + $0xa0] sm:$0xf]
      %v2195 = vld [vmem:[%s2153 + $0xa4] sm:$0xf]
      %v2196 = vld [vmem:[%s2153 + $0xa8] sm:$0xf]
      %v2197 = vld [vmem:[%s2153 + $0xac] sm:$0xf]
      %v2198 = vld [vmem:[%s2153 + $0xb0] sm:$0xf]
      %v2199 = vld [vmem:[%s2153 + $0xb4] sm:$0xf]
      %v2200 = vld [vmem:[%s2153 + $0xb8] sm:$0xf]
      %v2201 = vld [vmem:[%s2153 + $0xbc] sm:$0xf]
      %v2202 = vld [vmem:[%s2153 + $0xc0] sm:$0xf]
      %v2203 = vld [vmem:[%s2153 + $0xc4] sm:$0xf]
      %v2204 = vld [vmem:[%s2153 + $0xc8] sm:$0xf]
      %v2205 = vld [vmem:[%s2153 + $0xcc] sm:$0xf]
      %v2206 = vld [vmem:[%s2153 + $0xd0] sm:$0xf]
      %v2207 = vld [vmem:[%s2153 + $0xd4] sm:$0xf]
      %v2208 = vld [vmem:[%s2153 + $0xd8] sm:$0xf]
      %v2209 = vld [vmem:[%s2153 + $0xdc] sm:$0xf]
      %v2210 = vld [vmem:[%s2153 + $0xe0] sm:$0xf]
      %v2211 = vld [vmem:[%s2153 + $0xe4] sm:$0xf]
      %v2212 = vld [vmem:[%s2153 + $0xe8] sm:$0xf]
      %v2213 = vld [vmem:[%s2153 + $0xec] sm:$0xf]
      %v2214 = vld [vmem:[%s2153 + $0xf0] sm:$0xf]
      %v2215 = vld [vmem:[%s2153 + $0xf4] sm:$0xf]
      %v2216 = vld [vmem:[%s2153 + $0xf8] sm:$0xf]
      %v2217 = vld [vmem:[%s2153 + $0xfc] sm:$0xf]
      %s2218 = scalar_lea.vmem %s1, 36
      %v2219 = vld [vmem:[%s2218] sm:$0xf]
      %v2220 = vld [vmem:[%s2218 + $0x4] sm:$0xf]
      %v2221 = vld [vmem:[%s2218 + $0x8] sm:$0x7]
      %v2286 = vunpack.c.l.b16 %v2154
      %v2287 = vunpack.c.l.b16 %v2155
      %v2288 = vunpack.c.l.b16 %v2156
      %v2289 = vunpack.c.l.b16 %v2157
      %v2290 = vunpack.c.l.b16 %v2158
      %v2291 = vunpack.c.l.b16 %v2159
      %v2292 = vunpack.c.l.b16 %v2160
      %v2293 = vunpack.c.l.b16 %v2161
      %v2294 = vunpack.c.l.b16 %v2162
      %v2295 = vunpack.c.l.b16 %v2163
      %v2296 = vunpack.c.l.b16 %v2164
      %v2297 = vunpack.c.l.b16 %v2165
      %v2298 = vunpack.c.l.b16 %v2166
      %v2299 = vunpack.c.l.b16 %v2167
      %v2300 = vunpack.c.l.b16 %v2168
      %v2301 = vunpack.c.l.b16 %v2169
      %v2302 = vunpack.c.l.b16 %v2170
      %v2303 = vunpack.c.l.b16 %v2171
      %v2304 = vunpack.c.l.b16 %v2172
      %v2305 = vunpack.c.l.b16 %v2173
      %v2306 = vunpack.c.l.b16 %v2174
      %v2307 = vunpack.c.l.b16 %v2175
      %v2308 = vunpack.c.l.b16 %v2176
      %v2309 = vunpack.c.l.b16 %v2177
      %v2310 = vunpack.c.l.b16 %v2178
      %v2311 = vunpack.c.l.b16 %v2179
      %v2312 = vunpack.c.l.b16 %v2180
      %v2313 = vunpack.c.l.b16 %v2181
      %v2314 = vunpack.c.l.b16 %v2182
      %v2315 = vunpack.c.l.b16 %v2183
      %v2316 = vunpack.c.l.b16 %v2184
      %v2317 = vunpack.c.l.b16 %v2185
      %v2318 = vunpack.c.l.b16 %v2186
      %v2319 = vunpack.c.l.b16 %v2187
      %v2320 = vunpack.c.l.b16 %v2188
      %v2321 = vunpack.c.l.b16 %v2189
      %v2322 = vunpack.c.l.b16 %v2190
      %v2323 = vunpack.c.l.b16 %v2191
      %v2324 = vunpack.c.l.b16 %v2192
      %v2325 = vunpack.c.l.b16 %v2193
      %v2326 = vunpack.c.l.b16 %v2194
      %v2327 = vunpack.c.l.b16 %v2195
      %v2328 = vunpack.c.l.b16 %v2196
      %v2329 = vunpack.c.l.b16 %v2197
      %v2330 = vunpack.c.l.b16 %v2198
      %v2331 = vunpack.c.l.b16 %v2199
      %v2332 = vunpack.c.l.b16 %v2200
      %v2333 = vunpack.c.l.b16 %v2201
      %v2334 = vunpack.c.l.b16 %v2202
      %v2335 = vunpack.c.l.b16 %v2203
      %v2336 = vunpack.c.l.b16 %v2204
      %v2337 = vunpack.c.l.b16 %v2205
      %v2338 = vunpack.c.l.b16 %v2206
      %v2339 = vunpack.c.l.b16 %v2207
      %v2340 = vunpack.c.l.b16 %v2208
      %v2341 = vunpack.c.l.b16 %v2209
      %v2342 = vunpack.c.l.b16 %v2210
      %v2343 = vunpack.c.l.b16 %v2211
      %v2344 = vunpack.c.l.b16 %v2212
      %v2345 = vunpack.c.l.b16 %v2213
      %v2346 = vunpack.c.l.b16 %v2214
      %v2347 = vunpack.c.l.b16 %v2215
      %v2348 = vunpack.c.l.b16 %v2216
      %v2349 = vunpack.c.l.b16 %v2217
      %v2350 = vpack.c.b16 %v2287, %v2286
      %v2351 = vpack.c.b16 %v2289, %v2288
      %v2352 = vpack.c.b16 %v2291, %v2290
      %v2353 = vpack.c.b16 %v2293, %v2292
      %v2354 = vpack.c.b16 %v2295, %v2294
      %v2355 = vpack.c.b16 %v2297, %v2296
      %v2356 = vpack.c.b16 %v2299, %v2298
      %v2357 = vpack.c.b16 %v2301, %v2300
      %v2358 = vpack.c.b16 %v2303, %v2302
      %v2359 = vpack.c.b16 %v2305, %v2304
      %v2360 = vpack.c.b16 %v2307, %v2306
      %v2361 = vpack.c.b16 %v2309, %v2308
      %v2362 = vpack.c.b16 %v2311, %v2310
      %v2363 = vpack.c.b16 %v2313, %v2312
      %v2364 = vpack.c.b16 %v2315, %v2314
      %v2365 = vpack.c.b16 %v2317, %v2316
      %v2366 = vpack.c.b16 %v2319, %v2318
      %v2367 = vpack.c.b16 %v2321, %v2320
      %v2368 = vpack.c.b16 %v2323, %v2322
      %v2369 = vpack.c.b16 %v2325, %v2324
      %v2370 = vpack.c.b16 %v2327, %v2326
      %v2371 = vpack.c.b16 %v2329, %v2328
      %v2372 = vpack.c.b16 %v2331, %v2330
      %v2373 = vpack.c.b16 %v2333, %v2332
      %v2374 = vpack.c.b16 %v2335, %v2334
      %v2375 = vpack.c.b16 %v2337, %v2336
      %v2376 = vpack.c.b16 %v2339, %v2338
      %v2377 = vpack.c.b16 %v2341, %v2340
      %v2378 = vpack.c.b16 %v2343, %v2342
      %v2379 = vpack.c.b16 %v2345, %v2344
      %v2380 = vpack.c.b16 %v2347, %v2346
      %v2381 = vpack.c.b16 %v2349, %v2348
      %v2385 = vunpack.c.l.b16 %v2219
      %v2386 = vunpack.c.l.b16 %v2220
      %v2387 = vunpack.c.l.b16 %v2221
      %v2388 = vpack.c.b16 %v2386, %v2385
      %v2389 = vpack.c.b16 %v2387, %v2387
      %v2392 = vsel %vm507, %v2350, 0
      %v2395 = vsel %vm507, %v2351, 0
      %v2398 = vsel %vm507, %v2352, 0
      %v2401 = vsel %vm507, %v2353, 0
      %v2404 = vsel %vm507, %v2354, 0
      %v2407 = vsel %vm507, %v2355, 0
      %v2410 = vsel %vm507, %v2356, 0
      %v2413 = vsel %vm507, %v2357, 0
      %v2416 = vsel %vm507, %v2358, 0
      %v2419 = vsel %vm507, %v2359, 0
      %v2422 = vsel %vm507, %v2360, 0
      %v2425 = vsel %vm507, %v2361, 0
      %v2428 = vsel %vm507, %v2362, 0
      %v2431 = vsel %vm507, %v2363, 0
      %v2434 = vsel %vm507, %v2364, 0
      %v2437 = vsel %vm507, %v2365, 0
      %v2440 = vsel %vm507, %v2366, 0
      %v2443 = vsel %vm507, %v2367, 0
      %v2446 = vsel %vm507, %v2368, 0
      %v2449 = vsel %vm507, %v2369, 0
      %v2452 = vsel %vm507, %v2370, 0
      %v2455 = vsel %vm507, %v2371, 0
      %v2458 = vsel %vm507, %v2372, 0
      %v2461 = vsel %vm507, %v2373, 0
      %v2464 = vsel %vm507, %v2374, 0
      %v2467 = vsel %vm507, %v2375, 0
      %v2470 = vsel %vm507, %v2376, 0
      %v2473 = vsel %vm507, %v2377, 0
      %v2476 = vsel %vm507, %v2378, 0
      %v2479 = vsel %vm507, %v2379, 0
      %v2482 = vsel %vm507, %v2380, 0
      %v2485 = vsel %vm507, %v2381, 0
      %v2488 = vand.u32 %v2389, %v607
      %2490 = vmatprep.subr.bf16.mxu0 0
      %2491 = vmatpush1.bf16.msra.mxu0 %v2388
      %2492 = vmatprep.subr.bf16.mxu0 0
      %2493 = vmatpush1.bf16.msra.mxu0 %v2488
      %2494 = vmatprep.subr.bf16.mxu0 0
      %2495 = vmatpush1.bf16.msra.mxu0 0
      %2496 = vmatprep.subr.bf16.mxu0 0
      %2497 = vmatpush1.bf16.msra.mxu0 0
      %2498 = vmatprep.subr.bf16.mxu0 0
      %2499 = vmatpush1.bf16.msra.mxu0 0
      %2500 = vmatprep.subr.bf16.mxu0 0
      %2501 = vmatpush1.bf16.msra.mxu0 0
      %2502 = vmatprep.subr.bf16.mxu0 0
      %2503 = vmatpush1.bf16.msra.mxu0 0
      %2504 = vmatprep.subr.bf16.mxu0 0
      %2505 = vmatpush1.bf16.msra.mxu0 0
      %2506 = vmatprep.subr.bf16.mxu0 0
      %2507 = vmatpush1.bf16.msra.mxu0 0
      %2508 = vmatprep.subr.bf16.mxu0 0
      %2509 = vmatpush1.bf16.msra.mxu0 0
      %2510 = vmatprep.subr.bf16.mxu0 0
      %2511 = vmatpush1.bf16.msra.mxu0 0
      %2512 = vmatprep.subr.bf16.mxu0 0
      %2513 = vmatpush1.bf16.msra.mxu0 0
      %2514 = vmatprep.subr.bf16.mxu0 0
      %2515 = vmatpush1.bf16.msra.mxu0 0
      %2516 = vmatprep.subr.bf16.mxu0 0
      %2517 = vmatpush1.bf16.msra.mxu0 0
      %2518 = vmatprep.subr.bf16.mxu0 0
      %2519 = vmatpush1.bf16.msra.mxu0 0
      %2520 = vmatprep.subr.bf16.mxu0 0
      %2521 = vmatpush1.bf16.msra.mxu0 0
      %2522 = vmatprep.mubr.bf16.mxu0 0
      %2523 = vmatmul.mubr.bf16.gmra.mrb[0].mxu0 %v2392
      %v2524 = vpop.f32.mrb[0].mxu0
      %v2525 = vadd.f32 0.0, %v2524
      %v2526 = vpop.f32.mrb[0].mxu0
      %v2527 = vpop.f32.mrb[0].mxu0
      %v2528 = vadd.f32 0.0, %v2527
      %v2529 = vpop.f32.mrb[0].mxu0
      %2530 = vmatprep.mubr.bf16.mxu0 0
      %2531 = vmatmul.mubr.bf16.gmra.mrb[0].mxu0 %v2395
      %v2532 = vpop.f32.mrb[0].mxu0
      %v2533 = vadd.f32 0.0, %v2532
      %v2534 = vpop.f32.mrb[0].mxu0
      %v2535 = vpop.f32.mrb[0].mxu0
      %v2536 = vadd.f32 0.0, %v2535
      %v2537 = vpop.f32.mrb[0].mxu0
      %2538 = vmatprep.mubr.bf16.mxu0 0
      %2539 = vmatmul.mubr.bf16.gmra.mrb[0].mxu0 %v2398
      %v2540 = vpop.f32.mrb[0].mxu0
      %v2541 = vadd.f32 0.0, %v2540
      %v2542 = vpop.f32.mrb[0].mxu0
      %v2543 = vpop.f32.mrb[0].mxu0
      %v2544 = vadd.f32 0.0, %v2543
      %v2545 = vpop.f32.mrb[0].mxu0
      %2546 = vmatprep.mubr.bf16.mxu0 0
      %2547 = vmatmul.mubr.bf16.gmra.mrb[0].mxu0 %v2401
      %v2548 = vpop.f32.mrb[0].mxu0
      %v2549 = vadd.f32 0.0, %v2548
      %v2550 = vpop.f32.mrb[0].mxu0
      %v2551 = vpop.f32.mrb[0].mxu0
      %v2552 = vadd.f32 0.0, %v2551
      %v2553 = vpop.f32.mrb[0].mxu0
      %2554 = vmatprep.mubr.bf16.mxu0 0
      %2555 = vmatmul.mubr.bf16.gmra.mrb[0].mxu0 %v2404
      %v2556 = vpop.f32.mrb[0].mxu0
      %v2557 = vadd.f32 0.0, %v2556
      %v2558 = vpop.f32.mrb[0].mxu0
      %v2559 = vpop.f32.mrb[0].mxu0
      %v2560 = vadd.f32 0.0, %v2559
      %v2561 = vpop.f32.mrb[0].mxu0
      %2562 = vmatprep.mubr.bf16.mxu0 0
      %2563 = vmatmul.mubr.bf16.gmra.mrb[0].mxu0 %v2407
      %v2564 = vpop.f32.mrb[0].mxu0
      %v2565 = vadd.f32 0.0, %v2564
      %v2566 = vpop.f32.mrb[0].mxu0
      %v2567 = vpop.f32.mrb[0].mxu0
      %v2568 = vadd.f32 0.0, %v2567
      %v2569 = vpop.f32.mrb[0].mxu0
      %2570 = vmatprep.mubr.bf16.mxu0 0
      %2571 = vmatmul.mubr.bf16.gmra.mrb[0].mxu0 %v2410
      %v2572 = vpop.f32.mrb[0].mxu0
      %v2573 = vadd.f32 0.0, %v2572
      %v2574 = vpop.f32.mrb[0].mxu0
      %v2575 = vpop.f32.mrb[0].mxu0
      %v2576 = vadd.f32 0.0, %v2575
      %v2577 = vpop.f32.mrb[0].mxu0
      %2578 = vmatprep.mubr.bf16.mxu0 0
      %2579 = vmatmul.mubr.bf16.gmra.mrb[0].mxu0 %v2413
      %v2580 = vpop.f32.mrb[0].mxu0
      %v2581 = vadd.f32 0.0, %v2580
      %v2582 = vpop.f32.mrb[0].mxu0
      %v2583 = vpop.f32.mrb[0].mxu0
      %v2584 = vadd.f32 0.0, %v2583
      %v2585 = vpop.f32.mrb[0].mxu0
      %2586 = vmatprep.mubr.bf16.mxu0 0
      %2587 = vmatmul.mubr.bf16.gmra.mrb[0].mxu0 %v2416
      %v2588 = vpop.f32.mrb[0].mxu0
      %v2589 = vadd.f32 0.0, %v2588
      %v2590 = vpop.f32.mrb[0].mxu0
      %v2591 = vpop.f32.mrb[0].mxu0
      %v2592 = vadd.f32 0.0, %v2591
      %v2593 = vpop.f32.mrb[0].mxu0
      %2594 = vmatprep.mubr.bf16.mxu0 0
      %2595 = vmatmul.mubr.bf16.gmra.mrb[0].mxu0 %v2419
      %v2596 = vpop.f32.mrb[0].mxu0
      %v2597 = vadd.f32 0.0, %v2596
      %v2598 = vpop.f32.mrb[0].mxu0
      %v2599 = vpop.f32.mrb[0].mxu0
      %v2600 = vadd.f32 0.0, %v2599
      %v2601 = vpop.f32.mrb[0].mxu0
      %2602 = vmatprep.mubr.bf16.mxu0 0
      %2603 = vmatmul.mubr.bf16.gmra.mrb[0].mxu0 %v2422
      %v2604 = vpop.f32.mrb[0].mxu0
      %v2605 = vadd.f32 0.0, %v2604
      %v2606 = vpop.f32.mrb[0].mxu0
      %v2607 = vpop.f32.mrb[0].mxu0
      %v2608 = vadd.f32 0.0, %v2607
      %v2609 = vpop.f32.mrb[0].mxu0
      %2610 = vmatprep.mubr.bf16.mxu0 0
      %2611 = vmatmul.mubr.bf16.gmra.mrb[0].mxu0 %v2425
      %v2612 = vpop.f32.mrb[0].mxu0
      %v2613 = vadd.f32 0.0, %v2612
      %v2614 = vpop.f32.mrb[0].mxu0
      %v2615 = vpop.f32.mrb[0].mxu0
      %v2616 = vadd.f32 0.0, %v2615
      %v2617 = vpop.f32.mrb[0].mxu0
      %2618 = vmatprep.mubr.bf16.mxu0 0
      %2619 = vmatmul.mubr.bf16.gmra.mrb[0].mxu0 %v2428
      %v2620 = vpop.f32.mrb[0].mxu0
      %v2621 = vadd.f32 0.0, %v2620
      %v2622 = vpop.f32.mrb[0].mxu0
      %v2623 = vpop.f32.mrb[0].mxu0
      %v2624 = vadd.f32 0.0, %v2623
      %v2625 = vpop.f32.mrb[0].mxu0
      %2626 = vmatprep.mubr.bf16.mxu0 0
      %2627 = vmatmul.mubr.bf16.gmra.mrb[0].mxu0 %v2431
      %v2628 = vpop.f32.mrb[0].mxu0
      %v2629 = vadd.f32 0.0, %v2628
      %v2630 = vpop.f32.mrb[0].mxu0
      %v2631 = vpop.f32.mrb[0].mxu0
      %v2632 = vadd.f32 0.0, %v2631
      %v2633 = vpop.f32.mrb[0].mxu0
      %2634 = vmatprep.mubr.bf16.mxu0 0
      %2635 = vmatmul.mubr.bf16.gmra.mrb[0].mxu0 %v2434
      %v2636 = vpop.f32.mrb[0].mxu0
      %v2637 = vadd.f32 0.0, %v2636
      %v2638 = vpop.f32.mrb[0].mxu0
      %v2639 = vpop.f32.mrb[0].mxu0
      %v2640 = vadd.f32 0.0, %v2639
      %v2641 = vpop.f32.mrb[0].mxu0
      %2642 = vmatprep.mubr.bf16.mxu0 0
      %2643 = vmatmul.mubr.bf16.gmra.mrb[0].mxu0 %v2437
      %v2644 = vpop.f32.mrb[0].mxu0
      %v2645 = vadd.f32 0.0, %v2644
      %v2646 = vpop.f32.mrb[0].mxu0
      %v2647 = vpop.f32.mrb[0].mxu0
      %v2648 = vadd.f32 0.0, %v2647
      %v2649 = vpop.f32.mrb[0].mxu0
      %2650 = vmatprep.mubr.bf16.mxu0 0
      %2651 = vmatmul.mubr.bf16.gmra.mrb[0].mxu0 %v2440
      %v2652 = vpop.f32.mrb[0].mxu0
      %v2653 = vadd.f32 0.0, %v2652
      %v2654 = vpop.f32.mrb[0].mxu0
      %v2655 = vpop.f32.mrb[0].mxu0
      %v2656 = vadd.f32 0.0, %v2655
      %v2657 = vpop.f32.mrb[0].mxu0
      %2658 = vmatprep.mubr.bf16.mxu0 0
      %2659 = vmatmul.mubr.bf16.gmra.mrb[0].mxu0 %v2443
      %v2660 = vpop.f32.mrb[0].mxu0
      %v2661 = vadd.f32 0.0, %v2660
      %v2662 = vpop.f32.mrb[0].mxu0
      %v2663 = vpop.f32.mrb[0].mxu0
      %v2664 = vadd.f32 0.0, %v2663
      %v2665 = vpop.f32.mrb[0].mxu0
      %2666 = vmatprep.mubr.bf16.mxu0 0
      %2667 = vmatmul.mubr.bf16.gmra.mrb[0].mxu0 %v2446
      %v2668 = vpop.f32.mrb[0].mxu0
      %v2669 = vadd.f32 0.0, %v2668
      %v2670 = vpop.f32.mrb[0].mxu0
      %v2671 = vpop.f32.mrb[0].mxu0
      %v2672 = vadd.f32 0.0, %v2671
      %v2673 = vpop.f32.mrb[0].mxu0
      %2674 = vmatprep.mubr.bf16.mxu0 0
      %2675 = vmatmul.mubr.bf16.gmra.mrb[0].mxu0 %v2449
      %v2676 = vpop.f32.mrb[0].mxu0
      %v2677 = vadd.f32 0.0, %v2676
      %v2678 = vpop.f32.mrb[0].mxu0
      %v2679 = vpop.f32.mrb[0].mxu0
      %v2680 = vadd.f32 0.0, %v2679
      %v2681 = vpop.f32.mrb[0].mxu0
      %2682 = vmatprep.mubr.bf16.mxu0 0
      %2683 = vmatmul.mubr.bf16.gmra.mrb[0].mxu0 %v2452
      %v2684 = vpop.f32.mrb[0].mxu0
      %v2685 = vadd.f32 0.0, %v2684
      %v2686 = vpop.f32.mrb[0].mxu0
      %v2687 = vpop.f32.mrb[0].mxu0
      %v2688 = vadd.f32 0.0, %v2687
      %v2689 = vpop.f32.mrb[0].mxu0
      %2690 = vmatprep.mubr.bf16.mxu0 0
      %2691 = vmatmul.mubr.bf16.gmra.mrb[0].mxu0 %v2455
      %v2692 = vpop.f32.mrb[0].mxu0
      %v2693 = vadd.f32 0.0, %v2692
      %v2694 = vpop.f32.mrb[0].mxu0
      %v2695 = vpop.f32.mrb[0].mxu0
      %v2696 = vadd.f32 0.0, %v2695
      %v2697 = vpop.f32.mrb[0].mxu0
      %2698 = vmatprep.mubr.bf16.mxu0 0
      %2699 = vmatmul.mubr.bf16.gmra.mrb[0].mxu0 %v2458
      %v2700 = vpop.f32.mrb[0].mxu0
      %v2701 = vadd.f32 0.0, %v2700
      %v2702 = vpop.f32.mrb[0].mxu0
      %v2703 = vpop.f32.mrb[0].mxu0
      %v2704 = vadd.f32 0.0, %v2703
      %v2705 = vpop.f32.mrb[0].mxu0
      %2706 = vmatprep.mubr.bf16.mxu0 0
      %2707 = vmatmul.mubr.bf16.gmra.mrb[0].mxu0 %v2461
      %v2708 = vpop.f32.mrb[0].mxu0
      %v2709 = vadd.f32 0.0, %v2708
      %v2710 = vpop.f32.mrb[0].mxu0
      %v2711 = vpop.f32.mrb[0].mxu0
      %v2712 = vadd.f32 0.0, %v2711
      %v2713 = vpop.f32.mrb[0].mxu0
      %2714 = vmatprep.mubr.bf16.mxu0 0
      %2715 = vmatmul.mubr.bf16.gmra.mrb[0].mxu0 %v2464
      %v2716 = vpop.f32.mrb[0].mxu0
      %v2717 = vadd.f32 0.0, %v2716
      %v2718 = vpop.f32.mrb[0].mxu0
      %v2719 = vpop.f32.mrb[0].mxu0
      %v2720 = vadd.f32 0.0, %v2719
      %v2721 = vpop.f32.mrb[0].mxu0
      %2722 = vmatprep.mubr.bf16.mxu0 0
      %2723 = vmatmul.mubr.bf16.gmra.mrb[0].mxu0 %v2467
      %v2724 = vpop.f32.mrb[0].mxu0
      %v2725 = vadd.f32 0.0, %v2724
      %v2726 = vpop.f32.mrb[0].mxu0
      %v2727 = vpop.f32.mrb[0].mxu0
      %v2728 = vadd.f32 0.0, %v2727
      %v2729 = vpop.f32.mrb[0].mxu0
      %2730 = vmatprep.mubr.bf16.mxu0 0
      %2731 = vmatmul.mubr.bf16.gmra.mrb[0].mxu0 %v2470
      %v2732 = vpop.f32.mrb[0].mxu0
      %v2733 = vadd.f32 0.0, %v2732
      %v2734 = vpop.f32.mrb[0].mxu0
      %v2735 = vpop.f32.mrb[0].mxu0
      %v2736 = vadd.f32 0.0, %v2735
      %v2737 = vpop.f32.mrb[0].mxu0
      %2738 = vmatprep.mubr.bf16.mxu0 0
      %2739 = vmatmul.mubr.bf16.gmra.mrb[0].mxu0 %v2473
      %v2740 = vpop.f32.mrb[0].mxu0
      %v2741 = vadd.f32 0.0, %v2740
      %v2742 = vpop.f32.mrb[0].mxu0
      %v2743 = vpop.f32.mrb[0].mxu0
      %v2744 = vadd.f32 0.0, %v2743
      %v2745 = vpop.f32.mrb[0].mxu0
      %2746 = vmatprep.mubr.bf16.mxu0 0
      %2747 = vmatmul.mubr.bf16.gmra.mrb[0].mxu0 %v2476
      %v2748 = vpop.f32.mrb[0].mxu0
      %v2749 = vadd.f32 0.0, %v2748
      %v2750 = vpop.f32.mrb[0].mxu0
      %v2751 = vpop.f32.mrb[0].mxu0
      %v2752 = vadd.f32 0.0, %v2751
      %v2753 = vpop.f32.mrb[0].mxu0
      %2754 = vmatprep.mubr.bf16.mxu0 0
      %2755 = vmatmul.mubr.bf16.gmra.mrb[0].mxu0 %v2479
      %v2756 = vpop.f32.mrb[0].mxu0
      %v2757 = vadd.f32 0.0, %v2756
      %v2758 = vpop.f32.mrb[0].mxu0
      %v2759 = vpop.f32.mrb[0].mxu0
      %v2760 = vadd.f32 0.0, %v2759
      %v2761 = vpop.f32.mrb[0].mxu0
      %2762 = vmatprep.mubr.bf16.mxu0 0
      %2763 = vmatmul.mubr.bf16.gmra.mrb[0].mxu0 %v2482
      %v2764 = vpop.f32.mrb[0].mxu0
      %v2765 = vadd.f32 0.0, %v2764
      %v2766 = vpop.f32.mrb[0].mxu0
      %v2767 = vpop.f32.mrb[0].mxu0
      %v2768 = vadd.f32 0.0, %v2767
      %v2769 = vpop.f32.mrb[0].mxu0
      %2770 = vmatprep.mubr.bf16.mxu0 0
      %2771 = vmatmul.mubr.bf16.gmra.mrb[0].mxu0 %v2485
      %v2772 = vpop.f32.mrb[0].mxu0
      %v2773 = vadd.f32 0.0, %v2772
      %v2774 = vpop.f32.mrb[0].mxu0
      %v2775 = vpop.f32.mrb[0].mxu0
      %v2776 = vadd.f32 0.0, %v2775
      %v2777 = vpop.f32.mrb[0].mxu0
      %2778 = vdwg.mxu0
      %v2779 = vadd.f32 %v2087, %v2525
      %v2780 = vadd.f32 %v2088, %v2528
      %v2781 = vadd.f32 %v2089, %v2533
      %v2782 = vadd.f32 %v2090, %v2536
      %v2783 = vadd.f32 %v2091, %v2541
      %v2784 = vadd.f32 %v2092, %v2544
      %v2785 = vadd.f32 %v2093, %v2549
      %v2786 = vadd.f32 %v2094, %v2552
      %v2787 = vadd.f32 %v2095, %v2557
      %v2788 = vadd.f32 %v2096, %v2560
      %v2789 = vadd.f32 %v2097, %v2565
      %v2790 = vadd.f32 %v2098, %v2568
      %v2791 = vadd.f32 %v2099, %v2573
      %v2792 = vadd.f32 %v2100, %v2576
      %v2793 = vadd.f32 %v2101, %v2581
      %v2794 = vadd.f32 %v2102, %v2584
      %v2795 = vadd.f32 %v2103, %v2589
      %v2796 = vadd.f32 %v2104, %v2592
      %v2797 = vadd.f32 %v2105, %v2597
      %v2798 = vadd.f32 %v2106, %v2600
      %v2799 = vadd.f32 %v2107, %v2605
      %v2800 = vadd.f32 %v2108, %v2608
      %v2801 = vadd.f32 %v2109, %v2613
      %v2802 = vadd.f32 %v2110, %v2616
      %v2803 = vadd.f32 %v2111, %v2621
      %v2804 = vadd.f32 %v2112, %v2624
      %v2805 = vadd.f32 %v2113, %v2629
      %v2806 = vadd.f32 %v2114, %v2632
      %v2807 = vadd.f32 %v2115, %v2637
      %v2808 = vadd.f32 %v2116, %v2640
      %v2809 = vadd.f32 %v2117, %v2645
      %v2810 = vadd.f32 %v2118, %v2648
      %v2811 = vadd.f32 %v2119, %v2653
      %v2812 = vadd.f32 %v2120, %v2656
      %v2813 = vadd.f32 %v2121, %v2661
      %v2814 = vadd.f32 %v2122, %v2664
      %v2815 = vadd.f32 %v2123, %v2669
      %v2816 = vadd.f32 %v2124, %v2672
      %v2817 = vadd.f32 %v2125, %v2677
      %v2818 = vadd.f32 %v2126, %v2680
      %v2819 = vadd.f32 %v2127, %v2685
      %v2820 = vadd.f32 %v2128, %v2688
      %v2821 = vadd.f32 %v2129, %v2693
      %v2822 = vadd.f32 %v2130, %v2696
      %v2823 = vadd.f32 %v2131, %v2701
      %v2824 = vadd.f32 %v2132, %v2704
      %v2825 = vadd.f32 %v2133, %v2709
      %v2826 = vadd.f32 %v2134, %v2712
      %v2827 = vadd.f32 %v2135, %v2717
      %v2828 = vadd.f32 %v2136, %v2720
      %v2829 = vadd.f32 %v2137, %v2725
      %v2830 = vadd.f32 %v2138, %v2728
      %v2831 = vadd.f32 %v2139, %v2733
      %v2832 = vadd.f32 %v2140, %v2736
      %v2833 = vadd.f32 %v2141, %v2741
      %v2834 = vadd.f32 %v2142, %v2744
      %v2835 = vadd.f32 %v2143, %v2749
      %v2836 = vadd.f32 %v2144, %v2752
      %v2837 = vadd.f32 %v2145, %v2757
      %v2838 = vadd.f32 %v2146, %v2760
      %v2839 = vadd.f32 %v2147, %v2765
      %v2840 = vadd.f32 %v2148, %v2768
      %v2841 = vadd.f32 %v2149, %v2773
      %v2842 = vadd.f32 %v2150, %v2776
      %s2843 = sadd.s32 %s195, 64
      %s2844 = sshra.s32 %s2843, 3
      %s2845 = sand.u32 %s2843, 7
      %s2846 = smul.addr %s2844, 4
      %s2847 = scalar_lea.vmem %s183, %s2846
      %v2848 = vld [vmem:[%s2847] sm:$0xf]
      %v2849 = vld [vmem:[%s2847 + $0x4] sm:$0xf]
      %v2850 = vld [vmem:[%s2847 + $0x8] sm:$0xf]
      %v2851 = vld [vmem:[%s2847 + $0xc] sm:$0xf]
      %v2852 = vld [vmem:[%s2847 + $0x10] sm:$0xf]
      %v2853 = vld [vmem:[%s2847 + $0x14] sm:$0xf]
      %v2854 = vld [vmem:[%s2847 + $0x18] sm:$0xf]
      %v2855 = vld [vmem:[%s2847 + $0x1c] sm:$0xf]
      %v2856 = vld [vmem:[%s2847 + $0x20] sm:$0xf]
      %v2857 = vld [vmem:[%s2847 + $0x24] sm:$0xf]
      %v2858 = vld [vmem:[%s2847 + $0x28] sm:$0xf]
      %v2859 = vld [vmem:[%s2847 + $0x2c] sm:$0xf]
      %v2860 = vld [vmem:[%s2847 + $0x30] sm:$0xf]
      %v2861 = vld [vmem:[%s2847 + $0x34] sm:$0xf]
      %v2862 = vld [vmem:[%s2847 + $0x38] sm:$0xf]
      %v2863 = vld [vmem:[%s2847 + $0x3c] sm:$0xf]
      %v2864 = vld [vmem:[%s2847 + $0x40] sm:$0xf]
      %v2865 = vld [vmem:[%s2847 + $0x44] sm:$0xf]
      %v2866 = vld [vmem:[%s2847 + $0x48] sm:$0xf]
      %v2867 = vld [vmem:[%s2847 + $0x4c] sm:$0xf]
      %v2868 = vld [vmem:[%s2847 + $0x50] sm:$0xf]
      %v2869 = vld [vmem:[%s2847 + $0x54] sm:$0xf]
      %v2870 = vld [vmem:[%s2847 + $0x58] sm:$0xf]
      %v2871 = vld [vmem:[%s2847 + $0x5c] sm:$0xf]
      %v2872 = vld [vmem:[%s2847 + $0x60] sm:$0xf]
      %v2873 = vld [vmem:[%s2847 + $0x64] sm:$0xf]
      %v2874 = vld [vmem:[%s2847 + $0x68] sm:$0xf]
      %v2875 = vld [vmem:[%s2847 + $0x6c] sm:$0xf]
      %v2876 = vld [vmem:[%s2847 + $0x70] sm:$0xf]
      %v2877 = vld [vmem:[%s2847 + $0x74] sm:$0xf]
      %v2878 = vld [vmem:[%s2847 + $0x78] sm:$0xf]
      %v2879 = vld [vmem:[%s2847 + $0x7c] sm:$0xf]
      %v2880 = vld [vmem:[%s2847 + $0x80] sm:$0xf]
      %v2881 = vld [vmem:[%s2847 + $0x84] sm:$0xf]
      %v2882 = vld [vmem:[%s2847 + $0x88] sm:$0xf]
      %v2883 = vld [vmem:[%s2847 + $0x8c] sm:$0xf]
      %v2884 = vld [vmem:[%s2847 + $0x90] sm:$0xf]
      %v2885 = vld [vmem:[%s2847 + $0x94] sm:$0xf]
      %v2886 = vld [vmem:[%s2847 + $0x98] sm:$0xf]
      %v2887 = vld [vmem:[%s2847 + $0x9c] sm:$0xf]
      %v2888 = vld [vmem:[%s2847 + $0xa0] sm:$0xf]
      %v2889 = vld [vmem:[%s2847 + $0xa4] sm:$0xf]
      %v2890 = vld [vmem:[%s2847 + $0xa8] sm:$0xf]
      %v2891 = vld [vmem:[%s2847 + $0xac] sm:$0xf]
      %v2892 = vld [vmem:[%s2847 + $0xb0] sm:$0xf]
      %v2893 = vld [vmem:[%s2847 + $0xb4] sm:$0xf]
      %v2894 = vld [vmem:[%s2847 + $0xb8] sm:$0xf]
      %v2895 = vld [vmem:[%s2847 + $0xbc] sm:$0xf]
      %v2896 = vld [vmem:[%s2847 + $0xc0] sm:$0xf]
      %v2897 = vld [vmem:[%s2847 + $0xc4] sm:$0xf]
      %v2898 = vld [vmem:[%s2847 + $0xc8] sm:$0xf]
      %v2899 = vld [vmem:[%s2847 + $0xcc] sm:$0xf]
      %v2900 = vld [vmem:[%s2847 + $0xd0] sm:$0xf]
      %v2901 = vld [vmem:[%s2847 + $0xd4] sm:$0xf]
      %v2902 = vld [vmem:[%s2847 + $0xd8] sm:$0xf]
      %v2903 = vld [vmem:[%s2847 + $0xdc] sm:$0xf]
      %v2904 = vld [vmem:[%s2847 + $0xe0] sm:$0xf]
      %v2905 = vld [vmem:[%s2847 + $0xe4] sm:$0xf]
      %v2906 = vld [vmem:[%s2847 + $0xe8] sm:$0xf]
      %v2907 = vld [vmem:[%s2847 + $0xec] sm:$0xf]
      %v2908 = vld [vmem:[%s2847 + $0xf0] sm:$0xf]
      %v2909 = vld [vmem:[%s2847 + $0xf4] sm:$0xf]
      %v2910 = vld [vmem:[%s2847 + $0xf8] sm:$0xf]
      %v2911 = vld [vmem:[%s2847 + $0xfc] sm:$0xf]
      %s2912 = scalar_lea.vmem %s1, 48
      %v2913 = vld [vmem:[%s2912] sm:$0xf]
      %v2914 = vld [vmem:[%s2912 + $0x4] sm:$0xf]
      %v2915 = vld [vmem:[%s2912 + $0x8] sm:$0x7]
      %v2980 = vunpack.c.l.b16 %v2848
      %v2981 = vunpack.c.l.b16 %v2849
      %v2982 = vunpack.c.l.b16 %v2850
      %v2983 = vunpack.c.l.b16 %v2851
      %v2984 = vunpack.c.l.b16 %v2852
      %v2985 = vunpack.c.l.b16 %v2853
      %v2986 = vunpack.c.l.b16 %v2854
      %v2987 = vunpack.c.l.b16 %v2855
      %v2988 = vunpack.c.l.b16 %v2856
      %v2989 = vunpack.c.l.b16 %v2857
      %v2990 = vunpack.c.l.b16 %v2858
      %v2991 = vunpack.c.l.b16 %v2859
      %v2992 = vunpack.c.l.b16 %v2860
      %v2993 = vunpack.c.l.b16 %v2861
      %v2994 = vunpack.c.l.b16 %v2862
      %v2995 = vunpack.c.l.b16 %v2863
      %v2996 = vunpack.c.l.b16 %v2864
      %v2997 = vunpack.c.l.b16 %v2865
      %v2998 = vunpack.c.l.b16 %v2866
      %v2999 = vunpack.c.l.b16 %v2867
      %v3000 = vunpack.c.l.b16 %v2868
      %v3001 = vunpack.c.l.b16 %v2869
      %v3002 = vunpack.c.l.b16 %v2870
      %v3003 = vunpack.c.l.b16 %v2871
      %v3004 = vunpack.c.l.b16 %v2872
      %v3005 = vunpack.c.l.b16 %v2873
      %v3006 = vunpack.c.l.b16 %v2874
      %v3007 = vunpack.c.l.b16 %v2875
      %v3008 = vunpack.c.l.b16 %v2876
      %v3009 = vunpack.c.l.b16 %v2877
      %v3010 = vunpack.c.l.b16 %v2878
      %v3011 = vunpack.c.l.b16 %v2879
      %v3012 = vunpack.c.l.b16 %v2880
      %v3013 = vunpack.c.l.b16 %v2881
      %v3014 = vunpack.c.l.b16 %v2882
      %v3015 = vunpack.c.l.b16 %v2883
      %v3016 = vunpack.c.l.b16 %v2884
      %v3017 = vunpack.c.l.b16 %v2885
      %v3018 = vunpack.c.l.b16 %v2886
      %v3019 = vunpack.c.l.b16 %v2887
      %v3020 = vunpack.c.l.b16 %v2888
      %v3021 = vunpack.c.l.b16 %v2889
      %v3022 = vunpack.c.l.b16 %v2890
      %v3023 = vunpack.c.l.b16 %v2891
      %v3024 = vunpack.c.l.b16 %v2892
      %v3025 = vunpack.c.l.b16 %v2893
      %v3026 = vunpack.c.l.b16 %v2894
      %v3027 = vunpack.c.l.b16 %v2895
      %v3028 = vunpack.c.l.b16 %v2896
      %v3029 = vunpack.c.l.b16 %v2897
      %v3030 = vunpack.c.l.b16 %v2898
      %v3031 = vunpack.c.l.b16 %v2899
      %v3032 = vunpack.c.l.b16 %v2900
      %v3033 = vunpack.c.l.b16 %v2901
      %v3034 = vunpack.c.l.b16 %v2902
      %v3035 = vunpack.c.l.b16 %v2903
      %v3036 = vunpack.c.l.b16 %v2904
      %v3037 = vunpack.c.l.b16 %v2905
      %v3038 = vunpack.c.l.b16 %v2906
      %v3039 = vunpack.c.l.b16 %v2907
      %v3040 = vunpack.c.l.b16 %v2908
      %v3041 = vunpack.c.l.b16 %v2909
      %v3042 = vunpack.c.l.b16 %v2910
      %v3043 = vunpack.c.l.b16 %v2911
      %v3044 = vpack.c.b16 %v2981, %v2980
      %v3045 = vpack.c.b16 %v2983, %v2982
      %v3046 = vpack.c.b16 %v2985, %v2984
      %v3047 = vpack.c.b16 %v2987, %v2986
      %v3048 = vpack.c.b16 %v2989, %v2988
      %v3049 = vpack.c.b16 %v2991, %v2990
      %v3050 = vpack.c.b16 %v2993, %v2992
      %v3051 = vpack.c.b16 %v2995, %v2994
      %v3052 = vpack.c.b16 %v2997, %v2996
      %v3053 = vpack.c.b16 %v2999, %v2998
      %v3054 = vpack.c.b16 %v3001, %v3000
      %v3055 = vpack.c.b16 %v3003, %v3002
      %v3056 = vpack.c.b16 %v3005, %v3004
      %v3057 = vpack.c.b16 %v3007, %v3006
      %v3058 = vpack.c.b16 %v3009, %v3008
      %v3059 = vpack.c.b16 %v3011, %v3010
      %v3060 = vpack.c.b16 %v3013, %v3012
      %v3061 = vpack.c.b16 %v3015, %v3014
      %v3062 = vpack.c.b16 %v3017, %v3016
      %v3063 = vpack.c.b16 %v3019, %v3018
      %v3064 = vpack.c.b16 %v3021, %v3020
      %v3065 = vpack.c.b16 %v3023, %v3022
      %v3066 = vpack.c.b16 %v3025, %v3024
      %v3067 = vpack.c.b16 %v3027, %v3026
      %v3068 = vpack.c.b16 %v3029, %v3028
      %v3069 = vpack.c.b16 %v3031, %v3030
      %v3070 = vpack.c.b16 %v3033, %v3032
      %v3071 = vpack.c.b16 %v3035, %v3034
      %v3072 = vpack.c.b16 %v3037, %v3036
      %v3073 = vpack.c.b16 %v3039, %v3038
      %v3074 = vpack.c.b16 %v3041, %v3040
      %v3075 = vpack.c.b16 %v3043, %v3042
      %v3079 = vunpack.c.l.b16 %v2913
      %v3080 = vunpack.c.l.b16 %v2914
      %v3081 = vunpack.c.l.b16 %v2915
      %v3082 = vpack.c.b16 %v3080, %v3079
      %v3083 = vpack.c.b16 %v3081, %v3081
      %v3086 = vsel %vm507, %v3044, 0
      %v3089 = vsel %vm507, %v3045, 0
      %v3092 = vsel %vm507, %v3046, 0
      %v3095 = vsel %vm507, %v3047, 0
      %v3098 = vsel %vm507, %v3048, 0
      %v3101 = vsel %vm507, %v3049, 0
      %v3104 = vsel %vm507, %v3050, 0
      %v3107 = vsel %vm507, %v3051, 0
      %v3110 = vsel %vm507, %v3052, 0
      %v3113 = vsel %vm507, %v3053, 0
      %v3116 = vsel %vm507, %v3054, 0
      %v3119 = vsel %vm507, %v3055, 0
      %v3122 = vsel %vm507, %v3056, 0
      %v3125 = vsel %vm507, %v3057, 0
      %v3128 = vsel %vm507, %v3058, 0
      %v3131 = vsel %vm507, %v3059, 0
      %v3134 = vsel %vm507, %v3060, 0
      %v3137 = vsel %vm507, %v3061, 0
      %v3140 = vsel %vm507, %v3062, 0
      %v3143 = vsel %vm507, %v3063, 0
      %v3146 = vsel %vm507, %v3064, 0
      %v3149 = vsel %vm507, %v3065, 0
      %v3152 = vsel %vm507, %v3066, 0
      %v3155 = vsel %vm507, %v3067, 0
      %v3158 = vsel %vm507, %v3068, 0
      %v3161 = vsel %vm507, %v3069, 0
      %v3164 = vsel %vm507, %v3070, 0
      %v3167 = vsel %vm507, %v3071, 0
      %v3170 = vsel %vm507, %v3072, 0
      %v3173 = vsel %vm507, %v3073, 0
      %v3176 = vsel %vm507, %v3074, 0
      %v3179 = vsel %vm507, %v3075, 0
      %v3182 = vand.u32 %v3083, %v607
      %3184 = vmatprep.subr.bf16.mxu0 0
      %3185 = vmatpush1.bf16.msra.mxu0 %v3082
      %3186 = vmatprep.subr.bf16.mxu0 0
      %3187 = vmatpush1.bf16.msra.mxu0 %v3182
      %3188 = vmatprep.subr.bf16.mxu0 0
      %3189 = vmatpush1.bf16.msra.mxu0 0
      %3190 = vmatprep.subr.bf16.mxu0 0
      %3191 = vmatpush1.bf16.msra.mxu0 0
      %3192 = vmatprep.subr.bf16.mxu0 0
      %3193 = vmatpush1.bf16.msra.mxu0 0
      %3194 = vmatprep.subr.bf16.mxu0 0
      %3195 = vmatpush1.bf16.msra.mxu0 0
      %3196 = vmatprep.subr.bf16.mxu0 0
      %3197 = vmatpush1.bf16.msra.mxu0 0
      %3198 = vmatprep.subr.bf16.mxu0 0
      %3199 = vmatpush1.bf16.msra.mxu0 0
      %3200 = vmatprep.subr.bf16.mxu0 0
      %3201 = vmatpush1.bf16.msra.mxu0 0
      %3202 = vmatprep.subr.bf16.mxu0 0
      %3203 = vmatpush1.bf16.msra.mxu0 0
      %3204 = vmatprep.subr.bf16.mxu0 0
      %3205 = vmatpush1.bf16.msra.mxu0 0
      %3206 = vmatprep.subr.bf16.mxu0 0
      %3207 = vmatpush1.bf16.msra.mxu0 0
      %3208 = vmatprep.subr.bf16.mxu0 0
      %3209 = vmatpush1.bf16.msra.mxu0 0
      %3210 = vmatprep.subr.bf16.mxu0 0
      %3211 = vmatpush1.bf16.msra.mxu0 0
      %3212 = vmatprep.subr.bf16.mxu0 0
      %3213 = vmatpush1.bf16.msra.mxu0 0
      %3214 = vmatprep.subr.bf16.mxu0 0
      %3215 = vmatpush1.bf16.msra.mxu0 0
      %3216 = vmatprep.mubr.bf16.mxu0 0
      %3217 = vmatmul.mubr.bf16.gmra.mrb[0].mxu0 %v3086
      %v3218 = vpop.f32.mrb[0].mxu0
      %v3219 = vadd.f32 0.0, %v3218
      %v3220 = vpop.f32.mrb[0].mxu0
      %v3221 = vpop.f32.mrb[0].mxu0
      %v3222 = vadd.f32 0.0, %v3221
      %v3223 = vpop.f32.mrb[0].mxu0
      %3224 = vmatprep.mubr.bf16.mxu0 0
      %3225 = vmatmul.mubr.bf16.gmra.mrb[0].mxu0 %v3089
      %v3226 = vpop.f32.mrb[0].mxu0
      %v3227 = vadd.f32 0.0, %v3226
      %v3228 = vpop.f32.mrb[0].mxu0
      %v3229 = vpop.f32.mrb[0].mxu0
      %v3230 = vadd.f32 0.0, %v3229
      %v3231 = vpop.f32.mrb[0].mxu0
      %3232 = vmatprep.mubr.bf16.mxu0 0
      %3233 = vmatmul.mubr.bf16.gmra.mrb[0].mxu0 %v3092
      %v3234 = vpop.f32.mrb[0].mxu0
      %v3235 = vadd.f32 0.0, %v3234
      %v3236 = vpop.f32.mrb[0].mxu0
      %v3237 = vpop.f32.mrb[0].mxu0
      %v3238 = vadd.f32 0.0, %v3237
      %v3239 = vpop.f32.mrb[0].mxu0
      %3240 = vmatprep.mubr.bf16.mxu0 0
      %3241 = vmatmul.mubr.bf16.gmra.mrb[0].mxu0 %v3095
      %v3242 = vpop.f32.mrb[0].mxu0
      %v3243 = vadd.f32 0.0, %v3242
      %v3244 = vpop.f32.mrb[0].mxu0
      %v3245 = vpop.f32.mrb[0].mxu0
      %v3246 = vadd.f32 0.0, %v3245
      %v3247 = vpop.f32.mrb[0].mxu0
      %3248 = vmatprep.mubr.bf16.mxu0 0
      %3249 = vmatmul.mubr.bf16.gmra.mrb[0].mxu0 %v3098
      %v3250 = vpop.f32.mrb[0].mxu0
      %v3251 = vadd.f32 0.0, %v3250
      %v3252 = vpop.f32.mrb[0].mxu0
      %v3253 = vpop.f32.mrb[0].mxu0
      %v3254 = vadd.f32 0.0, %v3253
      %v3255 = vpop.f32.mrb[0].mxu0
      %3256 = vmatprep.mubr.bf16.mxu0 0
      %3257 = vmatmul.mubr.bf16.gmra.mrb[0].mxu0 %v3101
      %v3258 = vpop.f32.mrb[0].mxu0
      %v3259 = vadd.f32 0.0, %v3258
      %v3260 = vpop.f32.mrb[0].mxu0
      %v3261 = vpop.f32.mrb[0].mxu0
      %v3262 = vadd.f32 0.0, %v3261
      %v3263 = vpop.f32.mrb[0].mxu0
      %3264 = vmatprep.mubr.bf16.mxu0 0
      %3265 = vmatmul.mubr.bf16.gmra.mrb[0].mxu0 %v3104
      %v3266 = vpop.f32.mrb[0].mxu0
      %v3267 = vadd.f32 0.0, %v3266
      %v3268 = vpop.f32.mrb[0].mxu0
      %v3269 = vpop.f32.mrb[0].mxu0
      %v3270 = vadd.f32 0.0, %v3269
      %v3271 = vpop.f32.mrb[0].mxu0
      %3272 = vmatprep.mubr.bf16.mxu0 0
      %3273 = vmatmul.mubr.bf16.gmra.mrb[0].mxu0 %v3107
      %v3274 = vpop.f32.mrb[0].mxu0
      %v3275 = vadd.f32 0.0, %v3274
      %v3276 = vpop.f32.mrb[0].mxu0
      %v3277 = vpop.f32.mrb[0].mxu0
      %v3278 = vadd.f32 0.0, %v3277
      %v3279 = vpop.f32.mrb[0].mxu0
      %3280 = vmatprep.mubr.bf16.mxu0 0
      %3281 = vmatmul.mubr.bf16.gmra.mrb[0].mxu0 %v3110
      %v3282 = vpop.f32.mrb[0].mxu0
      %v3283 = vadd.f32 0.0, %v3282
      %v3284 = vpop.f32.mrb[0].mxu0
      %v3285 = vpop.f32.mrb[0].mxu0
      %v3286 = vadd.f32 0.0, %v3285
      %v3287 = vpop.f32.mrb[0].mxu0
      %3288 = vmatprep.mubr.bf16.mxu0 0
      %3289 = vmatmul.mubr.bf16.gmra.mrb[0].mxu0 %v3113
      %v3290 = vpop.f32.mrb[0].mxu0
      %v3291 = vadd.f32 0.0, %v3290
      %v3292 = vpop.f32.mrb[0].mxu0
      %v3293 = vpop.f32.mrb[0].mxu0
      %v3294 = vadd.f32 0.0, %v3293
      %v3295 = vpop.f32.mrb[0].mxu0
      %3296 = vmatprep.mubr.bf16.mxu0 0
      %3297 = vmatmul.mubr.bf16.gmra.mrb[0].mxu0 %v3116
      %v3298 = vpop.f32.mrb[0].mxu0
      %v3299 = vadd.f32 0.0, %v3298
      %v3300 = vpop.f32.mrb[0].mxu0
      %v3301 = vpop.f32.mrb[0].mxu0
      %v3302 = vadd.f32 0.0, %v3301
      %v3303 = vpop.f32.mrb[0].mxu0
      %3304 = vmatprep.mubr.bf16.mxu0 0
      %3305 = vmatmul.mubr.bf16.gmra.mrb[0].mxu0 %v3119
      %v3306 = vpop.f32.mrb[0].mxu0
      %v3307 = vadd.f32 0.0, %v3306
      %v3308 = vpop.f32.mrb[0].mxu0
      %v3309 = vpop.f32.mrb[0].mxu0
      %v3310 = vadd.f32 0.0, %v3309
      %v3311 = vpop.f32.mrb[0].mxu0
      %3312 = vmatprep.mubr.bf16.mxu0 0
      %3313 = vmatmul.mubr.bf16.gmra.mrb[0].mxu0 %v3122
      %v3314 = vpop.f32.mrb[0].mxu0
      %v3315 = vadd.f32 0.0, %v3314
      %v3316 = vpop.f32.mrb[0].mxu0
      %v3317 = vpop.f32.mrb[0].mxu0
      %v3318 = vadd.f32 0.0, %v3317
      %v3319 = vpop.f32.mrb[0].mxu0
      %3320 = vmatprep.mubr.bf16.mxu0 0
      %3321 = vmatmul.mubr.bf16.gmra.mrb[0].mxu0 %v3125
      %v3322 = vpop.f32.mrb[0].mxu0
      %v3323 = vadd.f32 0.0, %v3322
      %v3324 = vpop.f32.mrb[0].mxu0
      %v3325 = vpop.f32.mrb[0].mxu0
      %v3326 = vadd.f32 0.0, %v3325
      %v3327 = vpop.f32.mrb[0].mxu0
      %3328 = vmatprep.mubr.bf16.mxu0 0
      %3329 = vmatmul.mubr.bf16.gmra.mrb[0].mxu0 %v3128
      %v3330 = vpop.f32.mrb[0].mxu0
      %v3331 = vadd.f32 0.0, %v3330
      %v3332 = vpop.f32.mrb[0].mxu0
      %v3333 = vpop.f32.mrb[0].mxu0
      %v3334 = vadd.f32 0.0, %v3333
      %v3335 = vpop.f32.mrb[0].mxu0
      %3336 = vmatprep.mubr.bf16.mxu0 0
      %3337 = vmatmul.mubr.bf16.gmra.mrb[0].mxu0 %v3131
      %v3338 = vpop.f32.mrb[0].mxu0
      %v3339 = vadd.f32 0.0, %v3338
      %v3340 = vpop.f32.mrb[0].mxu0
      %v3341 = vpop.f32.mrb[0].mxu0
      %v3342 = vadd.f32 0.0, %v3341
      %v3343 = vpop.f32.mrb[0].mxu0
      %3344 = vmatprep.mubr.bf16.mxu0 0
      %3345 = vmatmul.mubr.bf16.gmra.mrb[0].mxu0 %v3134
      %v3346 = vpop.f32.mrb[0].mxu0
      %v3347 = vadd.f32 0.0, %v3346
      %v3348 = vpop.f32.mrb[0].mxu0
      %v3349 = vpop.f32.mrb[0].mxu0
      %v3350 = vadd.f32 0.0, %v3349
      %v3351 = vpop.f32.mrb[0].mxu0
      %3352 = vmatprep.mubr.bf16.mxu0 0
      %3353 = vmatmul.mubr.bf16.gmra.mrb[0].mxu0 %v3137
      %v3354 = vpop.f32.mrb[0].mxu0
      %v3355 = vadd.f32 0.0, %v3354
      %v3356 = vpop.f32.mrb[0].mxu0
      %v3357 = vpop.f32.mrb[0].mxu0
      %v3358 = vadd.f32 0.0, %v3357
      %v3359 = vpop.f32.mrb[0].mxu0
      %3360 = vmatprep.mubr.bf16.mxu0 0
      %3361 = vmatmul.mubr.bf16.gmra.mrb[0].mxu0 %v3140
      %v3362 = vpop.f32.mrb[0].mxu0
      %v3363 = vadd.f32 0.0, %v3362
      %v3364 = vpop.f32.mrb[0].mxu0
      %v3365 = vpop.f32.mrb[0].mxu0
      %v3366 = vadd.f32 0.0, %v3365
      %v3367 = vpop.f32.mrb[0].mxu0
      %3368 = vmatprep.mubr.bf16.mxu0 0
      %3369 = vmatmul.mubr.bf16.gmra.mrb[0].mxu0 %v3143
      %v3370 = vpop.f32.mrb[0].mxu0
      %v3371 = vadd.f32 0.0, %v3370
      %v3372 = vpop.f32.mrb[0].mxu0
      %v3373 = vpop.f32.mrb[0].mxu0
      %v3374 = vadd.f32 0.0, %v3373
      %v3375 = vpop.f32.mrb[0].mxu0
      %3376 = vmatprep.mubr.bf16.mxu0 0
      %3377 = vmatmul.mubr.bf16.gmra.mrb[0].mxu0 %v3146
      %v3378 = vpop.f32.mrb[0].mxu0
      %v3379 = vadd.f32 0.0, %v3378
      %v3380 = vpop.f32.mrb[0].mxu0
      %v3381 = vpop.f32.mrb[0].mxu0
      %v3382 = vadd.f32 0.0, %v3381
      %v3383 = vpop.f32.mrb[0].mxu0
      %3384 = vmatprep.mubr.bf16.mxu0 0
      %3385 = vmatmul.mubr.bf16.gmra.mrb[0].mxu0 %v3149
      %v3386 = vpop.f32.mrb[0].mxu0
      %v3387 = vadd.f32 0.0, %v3386
      %v3388 = vpop.f32.mrb[0].mxu0
      %v3389 = vpop.f32.mrb[0].mxu0
      %v3390 = vadd.f32 0.0, %v3389
      %v3391 = vpop.f32.mrb[0].mxu0
      %3392 = vmatprep.mubr.bf16.mxu0 0
      %3393 = vmatmul.mubr.bf16.gmra.mrb[0].mxu0 %v3152
      %v3394 = vpop.f32.mrb[0].mxu0
      %v3395 = vadd.f32 0.0, %v3394
      %v3396 = vpop.f32.mrb[0].mxu0
      %v3397 = vpop.f32.mrb[0].mxu0
      %v3398 = vadd.f32 0.0, %v3397
      %v3399 = vpop.f32.mrb[0].mxu0
      %3400 = vmatprep.mubr.bf16.mxu0 0
      %3401 = vmatmul.mubr.bf16.gmra.mrb[0].mxu0 %v3155
      %v3402 = vpop.f32.mrb[0].mxu0
      %v3403 = vadd.f32 0.0, %v3402
      %v3404 = vpop.f32.mrb[0].mxu0
      %v3405 = vpop.f32.mrb[0].mxu0
      %v3406 = vadd.f32 0.0, %v3405
      %v3407 = vpop.f32.mrb[0].mxu0
      %3408 = vmatprep.mubr.bf16.mxu0 0
      %3409 = vmatmul.mubr.bf16.gmra.mrb[0].mxu0 %v3158
      %v3410 = vpop.f32.mrb[0].mxu0
      %v3411 = vadd.f32 0.0, %v3410
      %v3412 = vpop.f32.mrb[0].mxu0
      %v3413 = vpop.f32.mrb[0].mxu0
      %v3414 = vadd.f32 0.0, %v3413
      %v3415 = vpop.f32.mrb[0].mxu0
      %3416 = vmatprep.mubr.bf16.mxu0 0
      %3417 = vmatmul.mubr.bf16.gmra.mrb[0].mxu0 %v3161
      %v3418 = vpop.f32.mrb[0].mxu0
      %v3419 = vadd.f32 0.0, %v3418
      %v3420 = vpop.f32.mrb[0].mxu0
      %v3421 = vpop.f32.mrb[0].mxu0
      %v3422 = vadd.f32 0.0, %v3421
      %v3423 = vpop.f32.mrb[0].mxu0
      %3424 = vmatprep.mubr.bf16.mxu0 0
      %3425 = vmatmul.mubr.bf16.gmra.mrb[0].mxu0 %v3164
      %v3426 = vpop.f32.mrb[0].mxu0
      %v3427 = vadd.f32 0.0, %v3426
      %v3428 = vpop.f32.mrb[0].mxu0
      %v3429 = vpop.f32.mrb[0].mxu0
      %v3430 = vadd.f32 0.0, %v3429
      %v3431 = vpop.f32.mrb[0].mxu0
      %3432 = vmatprep.mubr.bf16.mxu0 0
      %3433 = vmatmul.mubr.bf16.gmra.mrb[0].mxu0 %v3167
      %v3434 = vpop.f32.mrb[0].mxu0
      %v3435 = vadd.f32 0.0, %v3434
      %v3436 = vpop.f32.mrb[0].mxu0
      %v3437 = vpop.f32.mrb[0].mxu0
      %v3438 = vadd.f32 0.0, %v3437
      %v3439 = vpop.f32.mrb[0].mxu0
      %3440 = vmatprep.mubr.bf16.mxu0 0
      %3441 = vmatmul.mubr.bf16.gmra.mrb[0].mxu0 %v3170
      %v3442 = vpop.f32.mrb[0].mxu0
      %v3443 = vadd.f32 0.0, %v3442
      %v3444 = vpop.f32.mrb[0].mxu0
      %v3445 = vpop.f32.mrb[0].mxu0
      %v3446 = vadd.f32 0.0, %v3445
      %v3447 = vpop.f32.mrb[0].mxu0
      %3448 = vmatprep.mubr.bf16.mxu0 0
      %3449 = vmatmul.mubr.bf16.gmra.mrb[0].mxu0 %v3173
      %v3450 = vpop.f32.mrb[0].mxu0
      %v3451 = vadd.f32 0.0, %v3450
      %v3452 = vpop.f32.mrb[0].mxu0
      %v3453 = vpop.f32.mrb[0].mxu0
      %v3454 = vadd.f32 0.0, %v3453
      %v3455 = vpop.f32.mrb[0].mxu0
      %3456 = vmatprep.mubr.bf16.mxu0 0
      %3457 = vmatmul.mubr.bf16.gmra.mrb[0].mxu0 %v3176
      %v3458 = vpop.f32.mrb[0].mxu0
      %v3459 = vadd.f32 0.0, %v3458
      %v3460 = vpop.f32.mrb[0].mxu0
      %v3461 = vpop.f32.mrb[0].mxu0
      %v3462 = vadd.f32 0.0, %v3461
      %v3463 = vpop.f32.mrb[0].mxu0
      %3464 = vmatprep.mubr.bf16.mxu0 0
      %3465 = vmatmul.mubr.bf16.gmra.mrb[0].mxu0 %v3179
      %v3466 = vpop.f32.mrb[0].mxu0
      %v3467 = vadd.f32 0.0, %v3466
      %v3468 = vpop.f32.mrb[0].mxu0
      %v3469 = vpop.f32.mrb[0].mxu0
      %v3470 = vadd.f32 0.0, %v3469
      %v3471 = vpop.f32.mrb[0].mxu0
      %3472 = vdwg.mxu0
      %v3473 = vadd.f32 %v2779, %v3219
      %v3474 = vadd.f32 %v2780, %v3222
      %v3475 = vadd.f32 %v2781, %v3227
      %v3476 = vadd.f32 %v2782, %v3230
      %v3477 = vadd.f32 %v2783, %v3235
      %v3478 = vadd.f32 %v2784, %v3238
      %v3479 = vadd.f32 %v2785, %v3243
      %v3480 = vadd.f32 %v2786, %v3246
      %v3481 = vadd.f32 %v2787, %v3251
      %v3482 = vadd.f32 %v2788, %v3254
      %v3483 = vadd.f32 %v2789, %v3259
      %v3484 = vadd.f32 %v2790, %v3262
      %v3485 = vadd.f32 %v2791, %v3267
      %v3486 = vadd.f32 %v2792, %v3270
      %v3487 = vadd.f32 %v2793, %v3275
      %v3488 = vadd.f32 %v2794, %v3278
      %v3489 = vadd.f32 %v2795, %v3283
      %v3490 = vadd.f32 %v2796, %v3286
      %v3491 = vadd.f32 %v2797, %v3291
      %v3492 = vadd.f32 %v2798, %v3294
      %v3493 = vadd.f32 %v2799, %v3299
      %v3494 = vadd.f32 %v2800, %v3302
      %v3495 = vadd.f32 %v2801, %v3307
      %v3496 = vadd.f32 %v2802, %v3310
      %v3497 = vadd.f32 %v2803, %v3315
      %v3498 = vadd.f32 %v2804, %v3318
      %v3499 = vadd.f32 %v2805, %v3323
      %v3500 = vadd.f32 %v2806, %v3326
      %v3501 = vadd.f32 %v2807, %v3331
      %v3502 = vadd.f32 %v2808, %v3334
      %v3503 = vadd.f32 %v2809, %v3339
      %v3504 = vadd.f32 %v2810, %v3342
      %v3505 = vadd.f32 %v2811, %v3347
      %v3506 = vadd.f32 %v2812, %v3350
      %v3507 = vadd.f32 %v2813, %v3355
      %v3508 = vadd.f32 %v2814, %v3358
      %v3509 = vadd.f32 %v2815, %v3363
      %v3510 = vadd.f32 %v2816, %v3366
      %v3511 = vadd.f32 %v2817, %v3371
      %v3512 = vadd.f32 %v2818, %v3374
      %v3513 = vadd.f32 %v2819, %v3379
      %v3514 = vadd.f32 %v2820, %v3382
      %v3515 = vadd.f32 %v2821, %v3387
      %v3516 = vadd.f32 %v2822, %v3390
      %v3517 = vadd.f32 %v2823, %v3395
      %v3518 = vadd.f32 %v2824, %v3398
      %v3519 = vadd.f32 %v2825, %v3403
      %v3520 = vadd.f32 %v2826, %v3406
      %v3521 = vadd.f32 %v2827, %v3411
      %v3522 = vadd.f32 %v2828, %v3414
      %v3523 = vadd.f32 %v2829, %v3419
      %v3524 = vadd.f32 %v2830, %v3422
      %v3525 = vadd.f32 %v2831, %v3427
      %v3526 = vadd.f32 %v2832, %v3430
      %v3527 = vadd.f32 %v2833, %v3435
      %v3528 = vadd.f32 %v2834, %v3438
      %v3529 = vadd.f32 %v2835, %v3443
      %v3530 = vadd.f32 %v2836, %v3446
      %v3531 = vadd.f32 %v2837, %v3451
      %v3532 = vadd.f32 %v2838, %v3454
      %v3533 = vadd.f32 %v2839, %v3459
      %v3534 = vadd.f32 %v2840, %v3462
      %v3535 = vadd.f32 %v2841, %v3467
      %v3536 = vadd.f32 %v2842, %v3470
      %s3537 = sadd.s32 %s2844, 140
      %s3538 = smul.addr %s3537, 4
      %s3539 = scalar_lea.vmem %s183, %s3538
      %v3540 = vld [vmem:[%s3539] sm:$0xf]
      %v3541 = vld [vmem:[%s3539 + $0x4] sm:$0xf]
      %v3542 = vld [vmem:[%s3539 + $0x8] sm:$0xf]
      %v3543 = vld [vmem:[%s3539 + $0xc] sm:$0xf]
      %v3544 = vld [vmem:[%s3539 + $0x10] sm:$0xf]
      %v3545 = vld [vmem:[%s3539 + $0x14] sm:$0xf]
      %v3546 = vld [vmem:[%s3539 + $0x18] sm:$0xf]
      %v3547 = vld [vmem:[%s3539 + $0x1c] sm:$0xf]
      %v3548 = vld [vmem:[%s3539 + $0x20] sm:$0xf]
      %v3549 = vld [vmem:[%s3539 + $0x24] sm:$0xf]
      %v3550 = vld [vmem:[%s3539 + $0x28] sm:$0xf]
      %v3551 = vld [vmem:[%s3539 + $0x2c] sm:$0xf]
      %v3552 = vld [vmem:[%s3539 + $0x30] sm:$0xf]
      %v3553 = vld [vmem:[%s3539 + $0x34] sm:$0xf]
      %v3554 = vld [vmem:[%s3539 + $0x38] sm:$0xf]
      %v3555 = vld [vmem:[%s3539 + $0x3c] sm:$0xf]
      %v3556 = vld [vmem:[%s3539 + $0x40] sm:$0xf]
      %v3557 = vld [vmem:[%s3539 + $0x44] sm:$0xf]
      %v3558 = vld [vmem:[%s3539 + $0x48] sm:$0xf]
      %v3559 = vld [vmem:[%s3539 + $0x4c] sm:$0xf]
      %v3560 = vld [vmem:[%s3539 + $0x50] sm:$0xf]
      %v3561 = vld [vmem:[%s3539 + $0x54] sm:$0xf]
      %v3562 = vld [vmem:[%s3539 + $0x58] sm:$0xf]
      %v3563 = vld [vmem:[%s3539 + $0x5c] sm:$0xf]
      %v3564 = vld [vmem:[%s3539 + $0x60] sm:$0xf]
      %v3565 = vld [vmem:[%s3539 + $0x64] sm:$0xf]
      %v3566 = vld [vmem:[%s3539 + $0x68] sm:$0xf]
      %v3567 = vld [vmem:[%s3539 + $0x6c] sm:$0xf]
      %v3568 = vld [vmem:[%s3539 + $0x70] sm:$0xf]
      %v3569 = vld [vmem:[%s3539 + $0x74] sm:$0xf]
      %v3570 = vld [vmem:[%s3539 + $0x78] sm:$0xf]
      %v3571 = vld [vmem:[%s3539 + $0x7c] sm:$0xf]
      %v3572 = vld [vmem:[%s3539 + $0x80] sm:$0xf]
      %v3573 = vld [vmem:[%s3539 + $0x84] sm:$0xf]
      %v3574 = vld [vmem:[%s3539 + $0x88] sm:$0xf]
      %v3575 = vld [vmem:[%s3539 + $0x8c] sm:$0xf]
      %v3576 = vld [vmem:[%s3539 + $0x90] sm:$0xf]
      %v3577 = vld [vmem:[%s3539 + $0x94] sm:$0xf]
      %v3578 = vld [vmem:[%s3539 + $0x98] sm:$0xf]
      %v3579 = vld [vmem:[%s3539 + $0x9c] sm:$0xf]
      %v3580 = vld [vmem:[%s3539 + $0xa0] sm:$0xf]
      %v3581 = vld [vmem:[%s3539 + $0xa4] sm:$0xf]
      %v3582 = vld [vmem:[%s3539 + $0xa8] sm:$0xf]
      %v3583 = vld [vmem:[%s3539 + $0xac] sm:$0xf]
      %v3584 = vld [vmem:[%s3539 + $0xb0] sm:$0xf]
      %v3585 = vld [vmem:[%s3539 + $0xb4] sm:$0xf]
      %v3586 = vld [vmem:[%s3539 + $0xb8] sm:$0xf]
      %v3587 = vld [vmem:[%s3539 + $0xbc] sm:$0xf]
      %v3588 = vld [vmem:[%s3539 + $0xc0] sm:$0xf]
      %v3589 = vld [vmem:[%s3539 + $0xc4] sm:$0xf]
      %v3590 = vld [vmem:[%s3539 + $0xc8] sm:$0xf]
      %v3591 = vld [vmem:[%s3539 + $0xcc] sm:$0xf]
      %v3592 = vld [vmem:[%s3539 + $0xd0] sm:$0xf]
      %v3593 = vld [vmem:[%s3539 + $0xd4] sm:$0xf]
      %v3594 = vld [vmem:[%s3539 + $0xd8] sm:$0xf]
      %v3595 = vld [vmem:[%s3539 + $0xdc] sm:$0xf]
      %v3596 = vld [vmem:[%s3539 + $0xe0] sm:$0xf]
      %v3597 = vld [vmem:[%s3539 + $0xe4] sm:$0xf]
      %v3598 = vld [vmem:[%s3539 + $0xe8] sm:$0xf]
      %v3599 = vld [vmem:[%s3539 + $0xec] sm:$0xf]
      %v3600 = vld [vmem:[%s3539 + $0xf0] sm:$0xf]
      %v3601 = vld [vmem:[%s3539 + $0xf4] sm:$0xf]
      %v3602 = vld [vmem:[%s3539 + $0xf8] sm:$0xf]
      %v3603 = vld [vmem:[%s3539 + $0xfc] sm:$0xf]
      %s3604 = scalar_lea.vmem %s1, 60
      %v3605 = vld [vmem:[%s3604] sm:$0xf]
      %v3606 = vld [vmem:[%s3604 + $0x4] sm:$0xf]
      %v3607 = vld [vmem:[%s3604 + $0x8] sm:$0x7]
      %v3672 = vunpack.c.l.b16 %v3540
      %v3673 = vunpack.c.l.b16 %v3541
      %v3674 = vunpack.c.l.b16 %v3542
      %v3675 = vunpack.c.l.b16 %v3543
      %v3676 = vunpack.c.l.b16 %v3544
      %v3677 = vunpack.c.l.b16 %v3545
      %v3678 = vunpack.c.l.b16 %v3546
      %v3679 = vunpack.c.l.b16 %v3547
      %v3680 = vunpack.c.l.b16 %v3548
      %v3681 = vunpack.c.l.b16 %v3549
      %v3682 = vunpack.c.l.b16 %v3550
      %v3683 = vunpack.c.l.b16 %v3551
      %v3684 = vunpack.c.l.b16 %v3552
      %v3685 = vunpack.c.l.b16 %v3553
      %v3686 = vunpack.c.l.b16 %v3554
      %v3687 = vunpack.c.l.b16 %v3555
      %v3688 = vunpack.c.l.b16 %v3556
      %v3689 = vunpack.c.l.b16 %v3557
      %v3690 = vunpack.c.l.b16 %v3558
      %v3691 = vunpack.c.l.b16 %v3559
      %v3692 = vunpack.c.l.b16 %v3560
      %v3693 = vunpack.c.l.b16 %v3561
      %v3694 = vunpack.c.l.b16 %v3562
      %v3695 = vunpack.c.l.b16 %v3563
      %v3696 = vunpack.c.l.b16 %v3564
      %v3697 = vunpack.c.l.b16 %v3565
      %v3698 = vunpack.c.l.b16 %v3566
      %v3699 = vunpack.c.l.b16 %v3567
      %v3700 = vunpack.c.l.b16 %v3568
      %v3701 = vunpack.c.l.b16 %v3569
      %v3702 = vunpack.c.l.b16 %v3570
      %v3703 = vunpack.c.l.b16 %v3571
      %v3704 = vunpack.c.l.b16 %v3572
      %v3705 = vunpack.c.l.b16 %v3573
      %v3706 = vunpack.c.l.b16 %v3574
      %v3707 = vunpack.c.l.b16 %v3575
      %v3708 = vunpack.c.l.b16 %v3576
      %v3709 = vunpack.c.l.b16 %v3577
      %v3710 = vunpack.c.l.b16 %v3578
      %v3711 = vunpack.c.l.b16 %v3579
      %v3712 = vunpack.c.l.b16 %v3580
      %v3713 = vunpack.c.l.b16 %v3581
      %v3714 = vunpack.c.l.b16 %v3582
      %v3715 = vunpack.c.l.b16 %v3583
      %v3716 = vunpack.c.l.b16 %v3584
      %v3717 = vunpack.c.l.b16 %v3585
      %v3718 = vunpack.c.l.b16 %v3586
      %v3719 = vunpack.c.l.b16 %v3587
      %v3720 = vunpack.c.l.b16 %v3588
      %v3721 = vunpack.c.l.b16 %v3589
      %v3722 = vunpack.c.l.b16 %v3590
      %v3723 = vunpack.c.l.b16 %v3591
      %v3724 = vunpack.c.l.b16 %v3592
      %v3725 = vunpack.c.l.b16 %v3593
      %v3726 = vunpack.c.l.b16 %v3594
      %v3727 = vunpack.c.l.b16 %v3595
      %v3728 = vunpack.c.l.b16 %v3596
      %v3729 = vunpack.c.l.b16 %v3597
      %v3730 = vunpack.c.l.b16 %v3598
      %v3731 = vunpack.c.l.b16 %v3599
      %v3732 = vunpack.c.l.b16 %v3600
      %v3733 = vunpack.c.l.b16 %v3601
      %v3734 = vunpack.c.l.b16 %v3602
      %v3735 = vunpack.c.l.b16 %v3603
      %v3736 = vpack.c.b16 %v3673, %v3672
      %v3737 = vpack.c.b16 %v3675, %v3674
      %v3738 = vpack.c.b16 %v3677, %v3676
      %v3739 = vpack.c.b16 %v3679, %v3678
      %v3740 = vpack.c.b16 %v3681, %v3680
      %v3741 = vpack.c.b16 %v3683, %v3682
      %v3742 = vpack.c.b16 %v3685, %v3684
      %v3743 = vpack.c.b16 %v3687, %v3686
      %v3744 = vpack.c.b16 %v3689, %v3688
      %v3745 = vpack.c.b16 %v3691, %v3690
      %v3746 = vpack.c.b16 %v3693, %v3692
      %v3747 = vpack.c.b16 %v3695, %v3694
      %v3748 = vpack.c.b16 %v3697, %v3696
      %v3749 = vpack.c.b16 %v3699, %v3698
      %v3750 = vpack.c.b16 %v3701, %v3700
      %v3751 = vpack.c.b16 %v3703, %v3702
      %v3752 = vpack.c.b16 %v3705, %v3704
      %v3753 = vpack.c.b16 %v3707, %v3706
      %v3754 = vpack.c.b16 %v3709, %v3708
      %v3755 = vpack.c.b16 %v3711, %v3710
      %v3756 = vpack.c.b16 %v3713, %v3712
      %v3757 = vpack.c.b16 %v3715, %v3714
      %v3758 = vpack.c.b16 %v3717, %v3716
      %v3759 = vpack.c.b16 %v3719, %v3718
      %v3760 = vpack.c.b16 %v3721, %v3720
      %v3761 = vpack.c.b16 %v3723, %v3722
      %v3762 = vpack.c.b16 %v3725, %v3724
      %v3763 = vpack.c.b16 %v3727, %v3726
      %v3764 = vpack.c.b16 %v3729, %v3728
      %v3765 = vpack.c.b16 %v3731, %v3730
      %v3766 = vpack.c.b16 %v3733, %v3732
      %v3767 = vpack.c.b16 %v3735, %v3734
      %v3771 = vunpack.c.l.b16 %v3605
      %v3772 = vunpack.c.l.b16 %v3606
      %v3773 = vunpack.c.l.b16 %v3607
      %v3774 = vpack.c.b16 %v3772, %v3771
      %v3775 = vpack.c.b16 %v3773, %v3773
      %v3778 = vsel %vm507, %v3736, 0
      %v3781 = vsel %vm507, %v3737, 0
      %v3784 = vsel %vm507, %v3738, 0
      %v3787 = vsel %vm507, %v3739, 0
      %v3790 = vsel %vm507, %v3740, 0
      %v3793 = vsel %vm507, %v3741, 0
      %v3796 = vsel %vm507, %v3742, 0
      %v3799 = vsel %vm507, %v3743, 0
      %v3802 = vsel %vm507, %v3744, 0
      %v3805 = vsel %vm507, %v3745, 0
      %v3808 = vsel %vm507, %v3746, 0
      %v3811 = vsel %vm507, %v3747, 0
      %v3814 = vsel %vm507, %v3748, 0
      %v3817 = vsel %vm507, %v3749, 0
      %v3820 = vsel %vm507, %v3750, 0
      %v3823 = vsel %vm507, %v3751, 0
      %v3826 = vsel %vm507, %v3752, 0
      %v3829 = vsel %vm507, %v3753, 0
      %v3832 = vsel %vm507, %v3754, 0
      %v3835 = vsel %vm507, %v3755, 0
      %v3838 = vsel %vm507, %v3756, 0
      %v3841 = vsel %vm507, %v3757, 0
      %v3844 = vsel %vm507, %v3758, 0
      %v3847 = vsel %vm507, %v3759, 0
      %v3850 = vsel %vm507, %v3760, 0
      %v3853 = vsel %vm507, %v3761, 0
      %v3856 = vsel %vm507, %v3762, 0
      %v3859 = vsel %vm507, %v3763, 0
      %v3862 = vsel %vm507, %v3764, 0
      %v3865 = vsel %vm507, %v3765, 0
      %v3868 = vsel %vm507, %v3766, 0
      %v3871 = vsel %vm507, %v3767, 0
      %v3874 = vand.u32 %v3775, %v607
      %3876 = vmatprep.subr.bf16.mxu0 0
      %3877 = vmatpush1.bf16.msra.mxu0 %v3774
      %3878 = vmatprep.subr.bf16.mxu0 0
      %3879 = vmatpush1.bf16.msra.mxu0 %v3874
      %3880 = vmatprep.subr.bf16.mxu0 0
      %3881 = vmatpush1.bf16.msra.mxu0 0
      %3882 = vmatprep.subr.bf16.mxu0 0
      %3883 = vmatpush1.bf16.msra.mxu0 0
      %3884 = vmatprep.subr.bf16.mxu0 0
      %3885 = vmatpush1.bf16.msra.mxu0 0
      %3886 = vmatprep.subr.bf16.mxu0 0
      %3887 = vmatpush1.bf16.msra.mxu0 0
      %3888 = vmatprep.subr.bf16.mxu0 0
      %3889 = vmatpush1.bf16.msra.mxu0 0
      %3890 = vmatprep.subr.bf16.mxu0 0
      %3891 = vmatpush1.bf16.msra.mxu0 0
      %3892 = vmatprep.subr.bf16.mxu0 0
      %3893 = vmatpush1.bf16.msra.mxu0 0
      %3894 = vmatprep.subr.bf16.mxu0 0
      %3895 = vmatpush1.bf16.msra.mxu0 0
      %3896 = vmatprep.subr.bf16.mxu0 0
      %3897 = vmatpush1.bf16.msra.mxu0 0
      %3898 = vmatprep.subr.bf16.mxu0 0
      %3899 = vmatpush1.bf16.msra.mxu0 0
      %3900 = vmatprep.subr.bf16.mxu0 0
      %3901 = vmatpush1.bf16.msra.mxu0 0
      %3902 = vmatprep.subr.bf16.mxu0 0
      %3903 = vmatpush1.bf16.msra.mxu0 0
      %3904 = vmatprep.subr.bf16.mxu0 0
      %3905 = vmatpush1.bf16.msra.mxu0 0
      %3906 = vmatprep.subr.bf16.mxu0 0
      %3907 = vmatpush1.bf16.msra.mxu0 0
      %3908 = vmatprep.mubr.bf16.mxu0 0
      %3909 = vmatmul.mubr.bf16.gmra.mrb[0].mxu0 %v3778
      %v3910 = vpop.f32.mrb[0].mxu0
      %v3911 = vadd.f32 0.0, %v3910
      %v3912 = vpop.f32.mrb[0].mxu0
      %v3913 = vpop.f32.mrb[0].mxu0
      %v3914 = vadd.f32 0.0, %v3913
      %v3915 = vpop.f32.mrb[0].mxu0
      %3916 = vmatprep.mubr.bf16.mxu0 0
      %3917 = vmatmul.mubr.bf16.gmra.mrb[0].mxu0 %v3781
      %v3918 = vpop.f32.mrb[0].mxu0
      %v3919 = vadd.f32 0.0, %v3918
      %v3920 = vpop.f32.mrb[0].mxu0
      %v3921 = vpop.f32.mrb[0].mxu0
      %v3922 = vadd.f32 0.0, %v3921
      %v3923 = vpop.f32.mrb[0].mxu0
      %3924 = vmatprep.mubr.bf16.mxu0 0
      %3925 = vmatmul.mubr.bf16.gmra.mrb[0].mxu0 %v3784
      %v3926 = vpop.f32.mrb[0].mxu0
      %v3927 = vadd.f32 0.0, %v3926
      %v3928 = vpop.f32.mrb[0].mxu0
      %v3929 = vpop.f32.mrb[0].mxu0
      %v3930 = vadd.f32 0.0, %v3929
      %v3931 = vpop.f32.mrb[0].mxu0
      %3932 = vmatprep.mubr.bf16.mxu0 0
      %3933 = vmatmul.mubr.bf16.gmra.mrb[0].mxu0 %v3787
      %v3934 = vpop.f32.mrb[0].mxu0
      %v3935 = vadd.f32 0.0, %v3934
      %v3936 = vpop.f32.mrb[0].mxu0
      %v3937 = vpop.f32.mrb[0].mxu0
      %v3938 = vadd.f32 0.0, %v3937
      %v3939 = vpop.f32.mrb[0].mxu0
      %3940 = vmatprep.mubr.bf16.mxu0 0
      %3941 = vmatmul.mubr.bf16.gmra.mrb[0].mxu0 %v3790
      %v3942 = vpop.f32.mrb[0].mxu0
      %v3943 = vadd.f32 0.0, %v3942
      %v3944 = vpop.f32.mrb[0].mxu0
      %v3945 = vpop.f32.mrb[0].mxu0
      %v3946 = vadd.f32 0.0, %v3945
      %v3947 = vpop.f32.mrb[0].mxu0
      %3948 = vmatprep.mubr.bf16.mxu0 0
      %3949 = vmatmul.mubr.bf16.gmra.mrb[0].mxu0 %v3793
      %v3950 = vpop.f32.mrb[0].mxu0
      %v3951 = vadd.f32 0.0, %v3950
      %v3952 = vpop.f32.mrb[0].mxu0
      %v3953 = vpop.f32.mrb[0].mxu0
      %v3954 = vadd.f32 0.0, %v3953
      %v3955 = vpop.f32.mrb[0].mxu0
      %3956 = vmatprep.mubr.bf16.mxu0 0
      %3957 = vmatmul.mubr.bf16.gmra.mrb[0].mxu0 %v3796
      %v3958 = vpop.f32.mrb[0].mxu0
      %v3959 = vadd.f32 0.0, %v3958
      %v3960 = vpop.f32.mrb[0].mxu0
      %v3961 = vpop.f32.mrb[0].mxu0
      %v3962 = vadd.f32 0.0, %v3961
      %v3963 = vpop.f32.mrb[0].mxu0
      %3964 = vmatprep.mubr.bf16.mxu0 0
      %3965 = vmatmul.mubr.bf16.gmra.mrb[0].mxu0 %v3799
      %v3966 = vpop.f32.mrb[0].mxu0
      %v3967 = vadd.f32 0.0, %v3966
      %v3968 = vpop.f32.mrb[0].mxu0
      %v3969 = vpop.f32.mrb[0].mxu0
      %v3970 = vadd.f32 0.0, %v3969
      %v3971 = vpop.f32.mrb[0].mxu0
      %3972 = vmatprep.mubr.bf16.mxu0 0
      %3973 = vmatmul.mubr.bf16.gmra.mrb[0].mxu0 %v3802
      %v3974 = vpop.f32.mrb[0].mxu0
      %v3975 = vadd.f32 0.0, %v3974
      %v3976 = vpop.f32.mrb[0].mxu0
      %v3977 = vpop.f32.mrb[0].mxu0
      %v3978 = vadd.f32 0.0, %v3977
      %v3979 = vpop.f32.mrb[0].mxu0
      %3980 = vmatprep.mubr.bf16.mxu0 0
      %3981 = vmatmul.mubr.bf16.gmra.mrb[0].mxu0 %v3805
      %v3982 = vpop.f32.mrb[0].mxu0
      %v3983 = vadd.f32 0.0, %v3982
      %v3984 = vpop.f32.mrb[0].mxu0
      %v3985 = vpop.f32.mrb[0].mxu0
      %v3986 = vadd.f32 0.0, %v3985
      %v3987 = vpop.f32.mrb[0].mxu0
      %3988 = vmatprep.mubr.bf16.mxu0 0
      %3989 = vmatmul.mubr.bf16.gmra.mrb[0].mxu0 %v3808
      %v3990 = vpop.f32.mrb[0].mxu0
      %v3991 = vadd.f32 0.0, %v3990
      %v3992 = vpop.f32.mrb[0].mxu0
      %v3993 = vpop.f32.mrb[0].mxu0
      %v3994 = vadd.f32 0.0, %v3993
      %v3995 = vpop.f32.mrb[0].mxu0
      %3996 = vmatprep.mubr.bf16.mxu0 0
      %3997 = vmatmul.mubr.bf16.gmra.mrb[0].mxu0 %v3811
      %v3998 = vpop.f32.mrb[0].mxu0
      %v3999 = vadd.f32 0.0, %v3998
      %v4000 = vpop.f32.mrb[0].mxu0
      %v4001 = vpop.f32.mrb[0].mxu0
      %v4002 = vadd.f32 0.0, %v4001
      %v4003 = vpop.f32.mrb[0].mxu0
      %4004 = vmatprep.mubr.bf16.mxu0 0
      %4005 = vmatmul.mubr.bf16.gmra.mrb[0].mxu0 %v3814
      %v4006 = vpop.f32.mrb[0].mxu0
      %v4007 = vadd.f32 0.0, %v4006
      %v4008 = vpop.f32.mrb[0].mxu0
      %v4009 = vpop.f32.mrb[0].mxu0
      %v4010 = vadd.f32 0.0, %v4009
      %v4011 = vpop.f32.mrb[0].mxu0
      %4012 = vmatprep.mubr.bf16.mxu0 0
      %4013 = vmatmul.mubr.bf16.gmra.mrb[0].mxu0 %v3817
      %v4014 = vpop.f32.mrb[0].mxu0
      %v4015 = vadd.f32 0.0, %v4014
      %v4016 = vpop.f32.mrb[0].mxu0
      %v4017 = vpop.f32.mrb[0].mxu0
      %v4018 = vadd.f32 0.0, %v4017
      %v4019 = vpop.f32.mrb[0].mxu0
      %4020 = vmatprep.mubr.bf16.mxu0 0
      %4021 = vmatmul.mubr.bf16.gmra.mrb[0].mxu0 %v3820
      %v4022 = vpop.f32.mrb[0].mxu0
      %v4023 = vadd.f32 0.0, %v4022
      %v4024 = vpop.f32.mrb[0].mxu0
      %v4025 = vpop.f32.mrb[0].mxu0
      %v4026 = vadd.f32 0.0, %v4025
      %v4027 = vpop.f32.mrb[0].mxu0
      %4028 = vmatprep.mubr.bf16.mxu0 0
      %4029 = vmatmul.mubr.bf16.gmra.mrb[0].mxu0 %v3823
      %v4030 = vpop.f32.mrb[0].mxu0
      %v4031 = vadd.f32 0.0, %v4030
      %v4032 = vpop.f32.mrb[0].mxu0
      %v4033 = vpop.f32.mrb[0].mxu0
      %v4034 = vadd.f32 0.0, %v4033
      %v4035 = vpop.f32.mrb[0].mxu0
      %4036 = vmatprep.mubr.bf16.mxu0 0
      %4037 = vmatmul.mubr.bf16.gmra.mrb[0].mxu0 %v3826
      %v4038 = vpop.f32.mrb[0].mxu0
      %v4039 = vadd.f32 0.0, %v4038
      %v4040 = vpop.f32.mrb[0].mxu0
      %v4041 = vpop.f32.mrb[0].mxu0
      %v4042 = vadd.f32 0.0, %v4041
      %v4043 = vpop.f32.mrb[0].mxu0
      %4044 = vmatprep.mubr.bf16.mxu0 0
      %4045 = vmatmul.mubr.bf16.gmra.mrb[0].mxu0 %v3829
      %v4046 = vpop.f32.mrb[0].mxu0
      %v4047 = vadd.f32 0.0, %v4046
      %v4048 = vpop.f32.mrb[0].mxu0
      %v4049 = vpop.f32.mrb[0].mxu0
      %v4050 = vadd.f32 0.0, %v4049
      %v4051 = vpop.f32.mrb[0].mxu0
      %4052 = vmatprep.mubr.bf16.mxu0 0
      %4053 = vmatmul.mubr.bf16.gmra.mrb[0].mxu0 %v3832
      %v4054 = vpop.f32.mrb[0].mxu0
      %v4055 = vadd.f32 0.0, %v4054
      %v4056 = vpop.f32.mrb[0].mxu0
      %v4057 = vpop.f32.mrb[0].mxu0
      %v4058 = vadd.f32 0.0, %v4057
      %v4059 = vpop.f32.mrb[0].mxu0
      %4060 = vmatprep.mubr.bf16.mxu0 0
      %4061 = vmatmul.mubr.bf16.gmra.mrb[0].mxu0 %v3835
      %v4062 = vpop.f32.mrb[0].mxu0
      %v4063 = vadd.f32 0.0, %v4062
      %v4064 = vpop.f32.mrb[0].mxu0
      %v4065 = vpop.f32.mrb[0].mxu0
      %v4066 = vadd.f32 0.0, %v4065
      %v4067 = vpop.f32.mrb[0].mxu0
      %4068 = vmatprep.mubr.bf16.mxu0 0
      %4069 = vmatmul.mubr.bf16.gmra.mrb[0].mxu0 %v3838
      %v4070 = vpop.f32.mrb[0].mxu0
      %v4071 = vadd.f32 0.0, %v4070
      %v4072 = vpop.f32.mrb[0].mxu0
      %v4073 = vpop.f32.mrb[0].mxu0
      %v4074 = vadd.f32 0.0, %v4073
      %v4075 = vpop.f32.mrb[0].mxu0
      %4076 = vmatprep.mubr.bf16.mxu0 0
      %4077 = vmatmul.mubr.bf16.gmra.mrb[0].mxu0 %v3841
      %v4078 = vpop.f32.mrb[0].mxu0
      %v4079 = vadd.f32 0.0, %v4078
      %v4080 = vpop.f32.mrb[0].mxu0
      %v4081 = vpop.f32.mrb[0].mxu0
      %v4082 = vadd.f32 0.0, %v4081
      %v4083 = vpop.f32.mrb[0].mxu0
      %4084 = vmatprep.mubr.bf16.mxu0 0
      %4085 = vmatmul.mubr.bf16.gmra.mrb[0].mxu0 %v3844
      %v4086 = vpop.f32.mrb[0].mxu0
      %v4087 = vadd.f32 0.0, %v4086
      %v4088 = vpop.f32.mrb[0].mxu0
      %v4089 = vpop.f32.mrb[0].mxu0
      %v4090 = vadd.f32 0.0, %v4089
      %v4091 = vpop.f32.mrb[0].mxu0
      %4092 = vmatprep.mubr.bf16.mxu0 0
      %4093 = vmatmul.mubr.bf16.gmra.mrb[0].mxu0 %v3847
      %v4094 = vpop.f32.mrb[0].mxu0
      %v4095 = vadd.f32 0.0, %v4094
      %v4096 = vpop.f32.mrb[0].mxu0
      %v4097 = vpop.f32.mrb[0].mxu0
      %v4098 = vadd.f32 0.0, %v4097
      %v4099 = vpop.f32.mrb[0].mxu0
      %4100 = vmatprep.mubr.bf16.mxu0 0
      %4101 = vmatmul.mubr.bf16.gmra.mrb[0].mxu0 %v3850
      %v4102 = vpop.f32.mrb[0].mxu0
      %v4103 = vadd.f32 0.0, %v4102
      %v4104 = vpop.f32.mrb[0].mxu0
      %v4105 = vpop.f32.mrb[0].mxu0
      %v4106 = vadd.f32 0.0, %v4105
      %v4107 = vpop.f32.mrb[0].mxu0
      %4108 = vmatprep.mubr.bf16.mxu0 0
      %4109 = vmatmul.mubr.bf16.gmra.mrb[0].mxu0 %v3853
      %v4110 = vpop.f32.mrb[0].mxu0
      %v4111 = vadd.f32 0.0, %v4110
      %v4112 = vpop.f32.mrb[0].mxu0
      %v4113 = vpop.f32.mrb[0].mxu0
      %v4114 = vadd.f32 0.0, %v4113
      %v4115 = vpop.f32.mrb[0].mxu0
      %4116 = vmatprep.mubr.bf16.mxu0 0
      %4117 = vmatmul.mubr.bf16.gmra.mrb[0].mxu0 %v3856
      %v4118 = vpop.f32.mrb[0].mxu0
      %v4119 = vadd.f32 0.0, %v4118
      %v4120 = vpop.f32.mrb[0].mxu0
      %v4121 = vpop.f32.mrb[0].mxu0
      %v4122 = vadd.f32 0.0, %v4121
      %v4123 = vpop.f32.mrb[0].mxu0
      %4124 = vmatprep.mubr.bf16.mxu0 0
      %4125 = vmatmul.mubr.bf16.gmra.mrb[0].mxu0 %v3859
      %v4126 = vpop.f32.mrb[0].mxu0
      %v4127 = vadd.f32 0.0, %v4126
      %v4128 = vpop.f32.mrb[0].mxu0
      %v4129 = vpop.f32.mrb[0].mxu0
      %v4130 = vadd.f32 0.0, %v4129
      %v4131 = vpop.f32.mrb[0].mxu0
      %4132 = vmatprep.mubr.bf16.mxu0 0
      %4133 = vmatmul.mubr.bf16.gmra.mrb[0].mxu0 %v3862
      %v4134 = vpop.f32.mrb[0].mxu0
      %v4135 = vadd.f32 0.0, %v4134
      %v4136 = vpop.f32.mrb[0].mxu0
      %v4137 = vpop.f32.mrb[0].mxu0
      %v4138 = vadd.f32 0.0, %v4137
      %v4139 = vpop.f32.mrb[0].mxu0
      %4140 = vmatprep.mubr.bf16.mxu0 0
      %4141 = vmatmul.mubr.bf16.gmra.mrb[0].mxu0 %v3865
      %v4142 = vpop.f32.mrb[0].mxu0
      %v4143 = vadd.f32 0.0, %v4142
      %v4144 = vpop.f32.mrb[0].mxu0
      %v4145 = vpop.f32.mrb[0].mxu0
      %v4146 = vadd.f32 0.0, %v4145
      %v4147 = vpop.f32.mrb[0].mxu0
      %4148 = vmatprep.mubr.bf16.mxu0 0
      %4149 = vmatmul.mubr.bf16.gmra.mrb[0].mxu0 %v3868
      %v4150 = vpop.f32.mrb[0].mxu0
      %v4151 = vadd.f32 0.0, %v4150
      %v4152 = vpop.f32.mrb[0].mxu0
      %v4153 = vpop.f32.mrb[0].mxu0
      %v4154 = vadd.f32 0.0, %v4153
      %v4155 = vpop.f32.mrb[0].mxu0
      %4156 = vmatprep.mubr.bf16.mxu0 0
      %4157 = vmatmul.mubr.bf16.gmra.mrb[0].mxu0 %v3871
      %v4158 = vpop.f32.mrb[0].mxu0
      %v4159 = vadd.f32 0.0, %v4158
      %v4160 = vpop.f32.mrb[0].mxu0
      %v4161 = vpop.f32.mrb[0].mxu0
      %v4162 = vadd.f32 0.0, %v4161
      %v4163 = vpop.f32.mrb[0].mxu0
      %4164 = vdwg.mxu0
      %v4165 = vadd.f32 %v3473, %v3911
      %v4166 = vadd.f32 %v3474, %v3914
      %v4167 = vadd.f32 %v3475, %v3919
      %v4168 = vadd.f32 %v3476, %v3922
      %v4169 = vadd.f32 %v3477, %v3927
      %v4170 = vadd.f32 %v3478, %v3930
      %v4171 = vadd.f32 %v3479, %v3935
      %v4172 = vadd.f32 %v3480, %v3938
      %v4173 = vadd.f32 %v3481, %v3943
      %v4174 = vadd.f32 %v3482, %v3946
      %v4175 = vadd.f32 %v3483, %v3951
      %v4176 = vadd.f32 %v3484, %v3954
      %v4177 = vadd.f32 %v3485, %v3959
      %v4178 = vadd.f32 %v3486, %v3962
      %v4179 = vadd.f32 %v3487, %v3967
      %v4180 = vadd.f32 %v3488, %v3970
      %v4181 = vadd.f32 %v3489, %v3975
      %v4182 = vadd.f32 %v3490, %v3978
      %v4183 = vadd.f32 %v3491, %v3983
      %v4184 = vadd.f32 %v3492, %v3986
      %v4185 = vadd.f32 %v3493, %v3991
      %v4186 = vadd.f32 %v3494, %v3994
      %v4187 = vadd.f32 %v3495, %v3999
      %v4188 = vadd.f32 %v3496, %v4002
      %v4189 = vadd.f32 %v3497, %v4007
      %v4190 = vadd.f32 %v3498, %v4010
      %v4191 = vadd.f32 %v3499, %v4015
      %v4192 = vadd.f32 %v3500, %v4018
      %v4193 = vadd.f32 %v3501, %v4023
      %v4194 = vadd.f32 %v3502, %v4026
      %v4195 = vadd.f32 %v3503, %v4031
      %v4196 = vadd.f32 %v3504, %v4034
      %v4197 = vadd.f32 %v3505, %v4039
      %v4198 = vadd.f32 %v3506, %v4042
      %v4199 = vadd.f32 %v3507, %v4047
      %v4200 = vadd.f32 %v3508, %v4050
      %v4201 = vadd.f32 %v3509, %v4055
      %v4202 = vadd.f32 %v3510, %v4058
      %v4203 = vadd.f32 %v3511, %v4063
      %v4204 = vadd.f32 %v3512, %v4066
      %v4205 = vadd.f32 %v3513, %v4071
      %v4206 = vadd.f32 %v3514, %v4074
      %v4207 = vadd.f32 %v3515, %v4079
      %v4208 = vadd.f32 %v3516, %v4082
      %v4209 = vadd.f32 %v3517, %v4087
      %v4210 = vadd.f32 %v3518, %v4090
      %v4211 = vadd.f32 %v3519, %v4095
      %v4212 = vadd.f32 %v3520, %v4098
      %v4213 = vadd.f32 %v3521, %v4103
      %v4214 = vadd.f32 %v3522, %v4106
      %v4215 = vadd.f32 %v3523, %v4111
      %v4216 = vadd.f32 %v3524, %v4114
      %v4217 = vadd.f32 %v3525, %v4119
      %v4218 = vadd.f32 %v3526, %v4122
      %v4219 = vadd.f32 %v3527, %v4127
      %v4220 = vadd.f32 %v3528, %v4130
      %v4221 = vadd.f32 %v3529, %v4135
      %v4222 = vadd.f32 %v3530, %v4138
      %v4223 = vadd.f32 %v3531, %v4143
      %v4224 = vadd.f32 %v3532, %v4146
      %v4225 = vadd.f32 %v3533, %v4151
      %v4226 = vadd.f32 %v3534, %v4154
      %v4227 = vadd.f32 %v3535, %v4159
      %v4228 = vadd.f32 %v3536, %v4162
      %s4229 = sadd.s32 %s195, 96
      %s4230 = sshra.s32 %s4229, 3
      %s4231 = sand.u32 %s4229, 7
      %s4232 = smul.addr %s4230, 4
      %s4233 = scalar_lea.vmem %s183, %s4232
      %v4234 = vld [vmem:[%s4233] sm:$0xf]
      %v4235 = vld [vmem:[%s4233 + $0x4] sm:$0xf]
      %v4236 = vld [vmem:[%s4233 + $0x8] sm:$0xf]
      %v4237 = vld [vmem:[%s4233 + $0xc] sm:$0xf]
      %v4238 = vld [vmem:[%s4233 + $0x10] sm:$0xf]
      %v4239 = vld [vmem:[%s4233 + $0x14] sm:$0xf]
      %v4240 = vld [vmem:[%s4233 + $0x18] sm:$0xf]
      %v4241 = vld [vmem:[%s4233 + $0x1c] sm:$0xf]
      %v4242 = vld [vmem:[%s4233 + $0x20] sm:$0xf]
      %v4243 = vld [vmem:[%s4233 + $0x24] sm:$0xf]
      %v4244 = vld [vmem:[%s4233 + $0x28] sm:$0xf]
      %v4245 = vld [vmem:[%s4233 + $0x2c] sm:$0xf]
      %v4246 = vld [vmem:[%s4233 + $0x30] sm:$0xf]
      %v4247 = vld [vmem:[%s4233 + $0x34] sm:$0xf]
      %v4248 = vld [vmem:[%s4233 + $0x38] sm:$0xf]
      %v4249 = vld [vmem:[%s4233 + $0x3c] sm:$0xf]
      %v4250 = vld [vmem:[%s4233 + $0x40] sm:$0xf]
      %v4251 = vld [vmem:[%s4233 + $0x44] sm:$0xf]
      %v4252 = vld [vmem:[%s4233 + $0x48] sm:$0xf]
      %v4253 = vld [vmem:[%s4233 + $0x4c] sm:$0xf]
      %v4254 = vld [vmem:[%s4233 + $0x50] sm:$0xf]
      %v4255 = vld [vmem:[%s4233 + $0x54] sm:$0xf]
      %v4256 = vld [vmem:[%s4233 + $0x58] sm:$0xf]
      %v4257 = vld [vmem:[%s4233 + $0x5c] sm:$0xf]
      %v4258 = vld [vmem:[%s4233 + $0x60] sm:$0xf]
      %v4259 = vld [vmem:[%s4233 + $0x64] sm:$0xf]
      %v4260 = vld [vmem:[%s4233 + $0x68] sm:$0xf]
      %v4261 = vld [vmem:[%s4233 + $0x6c] sm:$0xf]
      %v4262 = vld [vmem:[%s4233 + $0x70] sm:$0xf]
      %v4263 = vld [vmem:[%s4233 + $0x74] sm:$0xf]
      %v4264 = vld [vmem:[%s4233 + $0x78] sm:$0xf]
      %v4265 = vld [vmem:[%s4233 + $0x7c] sm:$0xf]
      %v4266 = vld [vmem:[%s4233 + $0x80] sm:$0xf]
      %v4267 = vld [vmem:[%s4233 + $0x84] sm:$0xf]
      %v4268 = vld [vmem:[%s4233 + $0x88] sm:$0xf]
      %v4269 = vld [vmem:[%s4233 + $0x8c] sm:$0xf]
      %v4270 = vld [vmem:[%s4233 + $0x90] sm:$0xf]
      %v4271 = vld [vmem:[%s4233 + $0x94] sm:$0xf]
      %v4272 = vld [vmem:[%s4233 + $0x98] sm:$0xf]
      %v4273 = vld [vmem:[%s4233 + $0x9c] sm:$0xf]
      %v4274 = vld [vmem:[%s4233 + $0xa0] sm:$0xf]
      %v4275 = vld [vmem:[%s4233 + $0xa4] sm:$0xf]
      %v4276 = vld [vmem:[%s4233 + $0xa8] sm:$0xf]
      %v4277 = vld [vmem:[%s4233 + $0xac] sm:$0xf]
      %v4278 = vld [vmem:[%s4233 + $0xb0] sm:$0xf]
      %v4279 = vld [vmem:[%s4233 + $0xb4] sm:$0xf]
      %v4280 = vld [vmem:[%s4233 + $0xb8] sm:$0xf]
      %v4281 = vld [vmem:[%s4233 + $0xbc] sm:$0xf]
      %v4282 = vld [vmem:[%s4233 + $0xc0] sm:$0xf]
      %v4283 = vld [vmem:[%s4233 + $0xc4] sm:$0xf]
      %v4284 = vld [vmem:[%s4233 + $0xc8] sm:$0xf]
      %v4285 = vld [vmem:[%s4233 + $0xcc] sm:$0xf]
      %v4286 = vld [vmem:[%s4233 + $0xd0] sm:$0xf]
      %v4287 = vld [vmem:[%s4233 + $0xd4] sm:$0xf]
      %v4288 = vld [vmem:[%s4233 + $0xd8] sm:$0xf]
      %v4289 = vld [vmem:[%s4233 + $0xdc] sm:$0xf]
      %v4290 = vld [vmem:[%s4233 + $0xe0] sm:$0xf]
      %v4291 = vld [vmem:[%s4233 + $0xe4] sm:$0xf]
      %v4292 = vld [vmem:[%s4233 + $0xe8] sm:$0xf]
      %v4293 = vld [vmem:[%s4233 + $0xec] sm:$0xf]
      %v4294 = vld [vmem:[%s4233 + $0xf0] sm:$0xf]
      %v4295 = vld [vmem:[%s4233 + $0xf4] sm:$0xf]
      %v4296 = vld [vmem:[%s4233 + $0xf8] sm:$0xf]
      %v4297 = vld [vmem:[%s4233 + $0xfc] sm:$0xf]
      %s4298 = scalar_lea.vmem %s1, 72
      %v4299 = vld [vmem:[%s4298] sm:$0xf]
      %v4300 = vld [vmem:[%s4298 + $0x4] sm:$0xf]
      %v4301 = vld [vmem:[%s4298 + $0x8] sm:$0x7]
      %v4366 = vunpack.c.l.b16 %v4234
      %v4367 = vunpack.c.l.b16 %v4235
      %v4368 = vunpack.c.l.b16 %v4236
      %v4369 = vunpack.c.l.b16 %v4237
      %v4370 = vunpack.c.l.b16 %v4238
      %v4371 = vunpack.c.l.b16 %v4239
      %v4372 = vunpack.c.l.b16 %v4240
      %v4373 = vunpack.c.l.b16 %v4241
      %v4374 = vunpack.c.l.b16 %v4242
      %v4375 = vunpack.c.l.b16 %v4243
      %v4376 = vunpack.c.l.b16 %v4244
      %v4377 = vunpack.c.l.b16 %v4245
      %v4378 = vunpack.c.l.b16 %v4246
      %v4379 = vunpack.c.l.b16 %v4247
      %v4380 = vunpack.c.l.b16 %v4248
      %v4381 = vunpack.c.l.b16 %v4249
      %v4382 = vunpack.c.l.b16 %v4250
      %v4383 = vunpack.c.l.b16 %v4251
      %v4384 = vunpack.c.l.b16 %v4252
      %v4385 = vunpack.c.l.b16 %v4253
      %v4386 = vunpack.c.l.b16 %v4254
      %v4387 = vunpack.c.l.b16 %v4255
      %v4388 = vunpack.c.l.b16 %v4256
      %v4389 = vunpack.c.l.b16 %v4257
      %v4390 = vunpack.c.l.b16 %v4258
      %v4391 = vunpack.c.l.b16 %v4259
      %v4392 = vunpack.c.l.b16 %v4260
      %v4393 = vunpack.c.l.b16 %v4261
      %v4394 = vunpack.c.l.b16 %v4262
      %v4395 = vunpack.c.l.b16 %v4263
      %v4396 = vunpack.c.l.b16 %v4264
      %v4397 = vunpack.c.l.b16 %v4265
      %v4398 = vunpack.c.l.b16 %v4266
      %v4399 = vunpack.c.l.b16 %v4267
      %v4400 = vunpack.c.l.b16 %v4268
      %v4401 = vunpack.c.l.b16 %v4269
      %v4402 = vunpack.c.l.b16 %v4270
      %v4403 = vunpack.c.l.b16 %v4271
      %v4404 = vunpack.c.l.b16 %v4272
      %v4405 = vunpack.c.l.b16 %v4273
      %v4406 = vunpack.c.l.b16 %v4274
      %v4407 = vunpack.c.l.b16 %v4275
      %v4408 = vunpack.c.l.b16 %v4276
      %v4409 = vunpack.c.l.b16 %v4277
      %v4410 = vunpack.c.l.b16 %v4278
      %v4411 = vunpack.c.l.b16 %v4279
      %v4412 = vunpack.c.l.b16 %v4280
      %v4413 = vunpack.c.l.b16 %v4281
      %v4414 = vunpack.c.l.b16 %v4282
      %v4415 = vunpack.c.l.b16 %v4283
      %v4416 = vunpack.c.l.b16 %v4284
      %v4417 = vunpack.c.l.b16 %v4285
      %v4418 = vunpack.c.l.b16 %v4286
      %v4419 = vunpack.c.l.b16 %v4287
      %v4420 = vunpack.c.l.b16 %v4288
      %v4421 = vunpack.c.l.b16 %v4289
      %v4422 = vunpack.c.l.b16 %v4290
      %v4423 = vunpack.c.l.b16 %v4291
      %v4424 = vunpack.c.l.b16 %v4292
      %v4425 = vunpack.c.l.b16 %v4293
      %v4426 = vunpack.c.l.b16 %v4294
      %v4427 = vunpack.c.l.b16 %v4295
      %v4428 = vunpack.c.l.b16 %v4296
      %v4429 = vunpack.c.l.b16 %v4297
      %v4430 = vpack.c.b16 %v4367, %v4366
      %v4431 = vpack.c.b16 %v4369, %v4368
      %v4432 = vpack.c.b16 %v4371, %v4370
      %v4433 = vpack.c.b16 %v4373, %v4372
      %v4434 = vpack.c.b16 %v4375, %v4374
      %v4435 = vpack.c.b16 %v4377, %v4376
      %v4436 = vpack.c.b16 %v4379, %v4378
      %v4437 = vpack.c.b16 %v4381, %v4380
      %v4438 = vpack.c.b16 %v4383, %v4382
      %v4439 = vpack.c.b16 %v4385, %v4384
      %v4440 = vpack.c.b16 %v4387, %v4386
      %v4441 = vpack.c.b16 %v4389, %v4388
      %v4442 = vpack.c.b16 %v4391, %v4390
      %v4443 = vpack.c.b16 %v4393, %v4392
      %v4444 = vpack.c.b16 %v4395, %v4394
      %v4445 = vpack.c.b16 %v4397, %v4396
      %v4446 = vpack.c.b16 %v4399, %v4398
      %v4447 = vpack.c.b16 %v4401, %v4400
      %v4448 = vpack.c.b16 %v4403, %v4402
      %v4449 = vpack.c.b16 %v4405, %v4404
      %v4450 = vpack.c.b16 %v4407, %v4406
      %v4451 = vpack.c.b16 %v4409, %v4408
      %v4452 = vpack.c.b16 %v4411, %v4410
      %v4453 = vpack.c.b16 %v4413, %v4412
      %v4454 = vpack.c.b16 %v4415, %v4414
      %v4455 = vpack.c.b16 %v4417, %v4416
      %v4456 = vpack.c.b16 %v4419, %v4418
      %v4457 = vpack.c.b16 %v4421, %v4420
      %v4458 = vpack.c.b16 %v4423, %v4422
      %v4459 = vpack.c.b16 %v4425, %v4424
      %v4460 = vpack.c.b16 %v4427, %v4426
      %v4461 = vpack.c.b16 %v4429, %v4428
      %v4465 = vunpack.c.l.b16 %v4299
      %v4466 = vunpack.c.l.b16 %v4300
      %v4467 = vunpack.c.l.b16 %v4301
      %v4468 = vpack.c.b16 %v4466, %v4465
      %v4469 = vpack.c.b16 %v4467, %v4467
      %v4472 = vsel %vm507, %v4430, 0
      %v4475 = vsel %vm507, %v4431, 0
      %v4478 = vsel %vm507, %v4432, 0
      %v4481 = vsel %vm507, %v4433, 0
      %v4484 = vsel %vm507, %v4434, 0
      %v4487 = vsel %vm507, %v4435, 0
      %v4490 = vsel %vm507, %v4436, 0
      %v4493 = vsel %vm507, %v4437, 0
      %v4496 = vsel %vm507, %v4438, 0
      %v4499 = vsel %vm507, %v4439, 0
      %v4502 = vsel %vm507, %v4440, 0
      %v4505 = vsel %vm507, %v4441, 0
      %v4508 = vsel %vm507, %v4442, 0
      %v4511 = vsel %vm507, %v4443, 0
      %v4514 = vsel %vm507, %v4444, 0
      %v4517 = vsel %vm507, %v4445, 0
      %v4520 = vsel %vm507, %v4446, 0
      %v4523 = vsel %vm507, %v4447, 0
      %v4526 = vsel %vm507, %v4448, 0
      %v4529 = vsel %vm507, %v4449, 0
      %v4532 = vsel %vm507, %v4450, 0
      %v4535 = vsel %vm507, %v4451, 0
      %v4538 = vsel %vm507, %v4452, 0
      %v4541 = vsel %vm507, %v4453, 0
      %v4544 = vsel %vm507, %v4454, 0
      %v4547 = vsel %vm507, %v4455, 0
      %v4550 = vsel %vm507, %v4456, 0
      %v4553 = vsel %vm507, %v4457, 0
      %v4556 = vsel %vm507, %v4458, 0
      %v4559 = vsel %vm507, %v4459, 0
      %v4562 = vsel %vm507, %v4460, 0
      %v4565 = vsel %vm507, %v4461, 0
      %v4568 = vand.u32 %v4469, %v607
      %4570 = vmatprep.subr.bf16.mxu0 0
      %4571 = vmatpush1.bf16.msra.mxu0 %v4468
      %4572 = vmatprep.subr.bf16.mxu0 0
      %4573 = vmatpush1.bf16.msra.mxu0 %v4568
      %4574 = vmatprep.subr.bf16.mxu0 0
      %4575 = vmatpush1.bf16.msra.mxu0 0
      %4576 = vmatprep.subr.bf16.mxu0 0
      %4577 = vmatpush1.bf16.msra.mxu0 0
      %4578 = vmatprep.subr.bf16.mxu0 0
      %4579 = vmatpush1.bf16.msra.mxu0 0
      %4580 = vmatprep.subr.bf16.mxu0 0
      %4581 = vmatpush1.bf16.msra.mxu0 0
      %4582 = vmatprep.subr.bf16.mxu0 0
      %4583 = vmatpush1.bf16.msra.mxu0 0
      %4584 = vmatprep.subr.bf16.mxu0 0
      %4585 = vmatpush1.bf16.msra.mxu0 0
      %4586 = vmatprep.subr.bf16.mxu0 0
      %4587 = vmatpush1.bf16.msra.mxu0 0
      %4588 = vmatprep.subr.bf16.mxu0 0
      %4589 = vmatpush1.bf16.msra.mxu0 0
      %4590 = vmatprep.subr.bf16.mxu0 0
      %4591 = vmatpush1.bf16.msra.mxu0 0
      %4592 = vmatprep.subr.bf16.mxu0 0
      %4593 = vmatpush1.bf16.msra.mxu0 0
      %4594 = vmatprep.subr.bf16.mxu0 0
      %4595 = vmatpush1.bf16.msra.mxu0 0
      %4596 = vmatprep.subr.bf16.mxu0 0
      %4597 = vmatpush1.bf16.msra.mxu0 0
      %4598 = vmatprep.subr.bf16.mxu0 0
      %4599 = vmatpush1.bf16.msra.mxu0 0
      %4600 = vmatprep.subr.bf16.mxu0 0
      %4601 = vmatpush1.bf16.msra.mxu0 0
      %4602 = vmatprep.mubr.bf16.mxu0 0
      %4603 = vmatmul.mubr.bf16.gmra.mrb[0].mxu0 %v4472
      %v4604 = vpop.f32.mrb[0].mxu0
      %v4605 = vadd.f32 0.0, %v4604
      %v4606 = vpop.f32.mrb[0].mxu0
      %v4607 = vpop.f32.mrb[0].mxu0
      %v4608 = vadd.f32 0.0, %v4607
      %v4609 = vpop.f32.mrb[0].mxu0
      %4610 = vmatprep.mubr.bf16.mxu0 0
      %4611 = vmatmul.mubr.bf16.gmra.mrb[0].mxu0 %v4475
      %v4612 = vpop.f32.mrb[0].mxu0
      %v4613 = vadd.f32 0.0, %v4612
      %v4614 = vpop.f32.mrb[0].mxu0
      %v4615 = vpop.f32.mrb[0].mxu0
      %v4616 = vadd.f32 0.0, %v4615
      %v4617 = vpop.f32.mrb[0].mxu0
      %4618 = vmatprep.mubr.bf16.mxu0 0
      %4619 = vmatmul.mubr.bf16.gmra.mrb[0].mxu0 %v4478
      %v4620 = vpop.f32.mrb[0].mxu0
      %v4621 = vadd.f32 0.0, %v4620
      %v4622 = vpop.f32.mrb[0].mxu0
      %v4623 = vpop.f32.mrb[0].mxu0
      %v4624 = vadd.f32 0.0, %v4623
      %v4625 = vpop.f32.mrb[0].mxu0
      %4626 = vmatprep.mubr.bf16.mxu0 0
      %4627 = vmatmul.mubr.bf16.gmra.mrb[0].mxu0 %v4481
      %v4628 = vpop.f32.mrb[0].mxu0
      %v4629 = vadd.f32 0.0, %v4628
      %v4630 = vpop.f32.mrb[0].mxu0
      %v4631 = vpop.f32.mrb[0].mxu0
      %v4632 = vadd.f32 0.0, %v4631
      %v4633 = vpop.f32.mrb[0].mxu0
      %4634 = vmatprep.mubr.bf16.mxu0 0
      %4635 = vmatmul.mubr.bf16.gmra.mrb[0].mxu0 %v4484
      %v4636 = vpop.f32.mrb[0].mxu0
      %v4637 = vadd.f32 0.0, %v4636
      %v4638 = vpop.f32.mrb[0].mxu0
      %v4639 = vpop.f32.mrb[0].mxu0
      %v4640 = vadd.f32 0.0, %v4639
      %v4641 = vpop.f32.mrb[0].mxu0
      %4642 = vmatprep.mubr.bf16.mxu0 0
      %4643 = vmatmul.mubr.bf16.gmra.mrb[0].mxu0 %v4487
      %v4644 = vpop.f32.mrb[0].mxu0
      %v4645 = vadd.f32 0.0, %v4644
      %v4646 = vpop.f32.mrb[0].mxu0
      %v4647 = vpop.f32.mrb[0].mxu0
      %v4648 = vadd.f32 0.0, %v4647
      %v4649 = vpop.f32.mrb[0].mxu0
      %4650 = vmatprep.mubr.bf16.mxu0 0
      %4651 = vmatmul.mubr.bf16.gmra.mrb[0].mxu0 %v4490
      %v4652 = vpop.f32.mrb[0].mxu0
      %v4653 = vadd.f32 0.0, %v4652
      %v4654 = vpop.f32.mrb[0].mxu0
      %v4655 = vpop.f32.mrb[0].mxu0
      %v4656 = vadd.f32 0.0, %v4655
      %v4657 = vpop.f32.mrb[0].mxu0
      %4658 = vmatprep.mubr.bf16.mxu0 0
      %4659 = vmatmul.mubr.bf16.gmra.mrb[0].mxu0 %v4493
      %v4660 = vpop.f32.mrb[0].mxu0
      %v4661 = vadd.f32 0.0, %v4660
      %v4662 = vpop.f32.mrb[0].mxu0
      %v4663 = vpop.f32.mrb[0].mxu0
      %v4664 = vadd.f32 0.0, %v4663
      %v4665 = vpop.f32.mrb[0].mxu0
      %4666 = vmatprep.mubr.bf16.mxu0 0
      %4667 = vmatmul.mubr.bf16.gmra.mrb[0].mxu0 %v4496
      %v4668 = vpop.f32.mrb[0].mxu0
      %v4669 = vadd.f32 0.0, %v4668
      %v4670 = vpop.f32.mrb[0].mxu0
      %v4671 = vpop.f32.mrb[0].mxu0
      %v4672 = vadd.f32 0.0, %v4671
      %v4673 = vpop.f32.mrb[0].mxu0
      %4674 = vmatprep.mubr.bf16.mxu0 0
      %4675 = vmatmul.mubr.bf16.gmra.mrb[0].mxu0 %v4499
      %v4676 = vpop.f32.mrb[0].mxu0
      %v4677 = vadd.f32 0.0, %v4676
      %v4678 = vpop.f32.mrb[0].mxu0
      %v4679 = vpop.f32.mrb[0].mxu0
      %v4680 = vadd.f32 0.0, %v4679
      %v4681 = vpop.f32.mrb[0].mxu0
      %4682 = vmatprep.mubr.bf16.mxu0 0
      %4683 = vmatmul.mubr.bf16.gmra.mrb[0].mxu0 %v4502
      %v4684 = vpop.f32.mrb[0].mxu0
      %v4685 = vadd.f32 0.0, %v4684
      %v4686 = vpop.f32.mrb[0].mxu0
      %v4687 = vpop.f32.mrb[0].mxu0
      %v4688 = vadd.f32 0.0, %v4687
      %v4689 = vpop.f32.mrb[0].mxu0
      %4690 = vmatprep.mubr.bf16.mxu0 0
      %4691 = vmatmul.mubr.bf16.gmra.mrb[0].mxu0 %v4505
      %v4692 = vpop.f32.mrb[0].mxu0
      %v4693 = vadd.f32 0.0, %v4692
      %v4694 = vpop.f32.mrb[0].mxu0
      %v4695 = vpop.f32.mrb[0].mxu0
      %v4696 = vadd.f32 0.0, %v4695
      %v4697 = vpop.f32.mrb[0].mxu0
      %4698 = vmatprep.mubr.bf16.mxu0 0
      %4699 = vmatmul.mubr.bf16.gmra.mrb[0].mxu0 %v4508
      %v4700 = vpop.f32.mrb[0].mxu0
      %v4701 = vadd.f32 0.0, %v4700
      %v4702 = vpop.f32.mrb[0].mxu0
      %v4703 = vpop.f32.mrb[0].mxu0
      %v4704 = vadd.f32 0.0, %v4703
      %v4705 = vpop.f32.mrb[0].mxu0
      %4706 = vmatprep.mubr.bf16.mxu0 0
      %4707 = vmatmul.mubr.bf16.gmra.mrb[0].mxu0 %v4511
      %v4708 = vpop.f32.mrb[0].mxu0
      %v4709 = vadd.f32 0.0, %v4708
      %v4710 = vpop.f32.mrb[0].mxu0
      %v4711 = vpop.f32.mrb[0].mxu0
      %v4712 = vadd.f32 0.0, %v4711
      %v4713 = vpop.f32.mrb[0].mxu0
      %4714 = vmatprep.mubr.bf16.mxu0 0
      %4715 = vmatmul.mubr.bf16.gmra.mrb[0].mxu0 %v4514
      %v4716 = vpop.f32.mrb[0].mxu0
      %v4717 = vadd.f32 0.0, %v4716
      %v4718 = vpop.f32.mrb[0].mxu0
      %v4719 = vpop.f32.mrb[0].mxu0
      %v4720 = vadd.f32 0.0, %v4719
      %v4721 = vpop.f32.mrb[0].mxu0
      %4722 = vmatprep.mubr.bf16.mxu0 0
      %4723 = vmatmul.mubr.bf16.gmra.mrb[0].mxu0 %v4517
      %v4724 = vpop.f32.mrb[0].mxu0
      %v4725 = vadd.f32 0.0, %v4724
      %v4726 = vpop.f32.mrb[0].mxu0
      %v4727 = vpop.f32.mrb[0].mxu0
      %v4728 = vadd.f32 0.0, %v4727
      %v4729 = vpop.f32.mrb[0].mxu0
      %4730 = vmatprep.mubr.bf16.mxu0 0
      %4731 = vmatmul.mubr.bf16.gmra.mrb[0].mxu0 %v4520
      %v4732 = vpop.f32.mrb[0].mxu0
      %v4733 = vadd.f32 0.0, %v4732
      %v4734 = vpop.f32.mrb[0].mxu0
      %v4735 = vpop.f32.mrb[0].mxu0
      %v4736 = vadd.f32 0.0, %v4735
      %v4737 = vpop.f32.mrb[0].mxu0
      %4738 = vmatprep.mubr.bf16.mxu0 0
      %4739 = vmatmul.mubr.bf16.gmra.mrb[0].mxu0 %v4523
      %v4740 = vpop.f32.mrb[0].mxu0
      %v4741 = vadd.f32 0.0, %v4740
      %v4742 = vpop.f32.mrb[0].mxu0
      %v4743 = vpop.f32.mrb[0].mxu0
      %v4744 = vadd.f32 0.0, %v4743
      %v4745 = vpop.f32.mrb[0].mxu0
      %4746 = vmatprep.mubr.bf16.mxu0 0
      %4747 = vmatmul.mubr.bf16.gmra.mrb[0].mxu0 %v4526
      %v4748 = vpop.f32.mrb[0].mxu0
      %v4749 = vadd.f32 0.0, %v4748
      %v4750 = vpop.f32.mrb[0].mxu0
      %v4751 = vpop.f32.mrb[0].mxu0
      %v4752 = vadd.f32 0.0, %v4751
      %v4753 = vpop.f32.mrb[0].mxu0
      %4754 = vmatprep.mubr.bf16.mxu0 0
      %4755 = vmatmul.mubr.bf16.gmra.mrb[0].mxu0 %v4529
      %v4756 = vpop.f32.mrb[0].mxu0
      %v4757 = vadd.f32 0.0, %v4756
      %v4758 = vpop.f32.mrb[0].mxu0
      %v4759 = vpop.f32.mrb[0].mxu0
      %v4760 = vadd.f32 0.0, %v4759
      %v4761 = vpop.f32.mrb[0].mxu0
      %4762 = vmatprep.mubr.bf16.mxu0 0
      %4763 = vmatmul.mubr.bf16.gmra.mrb[0].mxu0 %v4532
      %v4764 = vpop.f32.mrb[0].mxu0
      %v4765 = vadd.f32 0.0, %v4764
      %v4766 = vpop.f32.mrb[0].mxu0
      %v4767 = vpop.f32.mrb[0].mxu0
      %v4768 = vadd.f32 0.0, %v4767
      %v4769 = vpop.f32.mrb[0].mxu0
      %4770 = vmatprep.mubr.bf16.mxu0 0
      %4771 = vmatmul.mubr.bf16.gmra.mrb[0].mxu0 %v4535
      %v4772 = vpop.f32.mrb[0].mxu0
      %v4773 = vadd.f32 0.0, %v4772
      %v4774 = vpop.f32.mrb[0].mxu0
      %v4775 = vpop.f32.mrb[0].mxu0
      %v4776 = vadd.f32 0.0, %v4775
      %v4777 = vpop.f32.mrb[0].mxu0
      %4778 = vmatprep.mubr.bf16.mxu0 0
      %4779 = vmatmul.mubr.bf16.gmra.mrb[0].mxu0 %v4538
      %v4780 = vpop.f32.mrb[0].mxu0
      %v4781 = vadd.f32 0.0, %v4780
      %v4782 = vpop.f32.mrb[0].mxu0
      %v4783 = vpop.f32.mrb[0].mxu0
      %v4784 = vadd.f32 0.0, %v4783
      %v4785 = vpop.f32.mrb[0].mxu0
      %4786 = vmatprep.mubr.bf16.mxu0 0
      %4787 = vmatmul.mubr.bf16.gmra.mrb[0].mxu0 %v4541
      %v4788 = vpop.f32.mrb[0].mxu0
      %v4789 = vadd.f32 0.0, %v4788
      %v4790 = vpop.f32.mrb[0].mxu0
      %v4791 = vpop.f32.mrb[0].mxu0
      %v4792 = vadd.f32 0.0, %v4791
      %v4793 = vpop.f32.mrb[0].mxu0
      %4794 = vmatprep.mubr.bf16.mxu0 0
      %4795 = vmatmul.mubr.bf16.gmra.mrb[0].mxu0 %v4544
      %v4796 = vpop.f32.mrb[0].mxu0
      %v4797 = vadd.f32 0.0, %v4796
      %v4798 = vpop.f32.mrb[0].mxu0
      %v4799 = vpop.f32.mrb[0].mxu0
      %v4800 = vadd.f32 0.0, %v4799
      %v4801 = vpop.f32.mrb[0].mxu0
      %4802 = vmatprep.mubr.bf16.mxu0 0
      %4803 = vmatmul.mubr.bf16.gmra.mrb[0].mxu0 %v4547
      %v4804 = vpop.f32.mrb[0].mxu0
      %v4805 = vadd.f32 0.0, %v4804
      %v4806 = vpop.f32.mrb[0].mxu0
      %v4807 = vpop.f32.mrb[0].mxu0
      %v4808 = vadd.f32 0.0, %v4807
      %v4809 = vpop.f32.mrb[0].mxu0
      %4810 = vmatprep.mubr.bf16.mxu0 0
      %4811 = vmatmul.mubr.bf16.gmra.mrb[0].mxu0 %v4550
      %v4812 = vpop.f32.mrb[0].mxu0
      %v4813 = vadd.f32 0.0, %v4812
      %v4814 = vpop.f32.mrb[0].mxu0
      %v4815 = vpop.f32.mrb[0].mxu0
      %v4816 = vadd.f32 0.0, %v4815
      %v4817 = vpop.f32.mrb[0].mxu0
      %4818 = vmatprep.mubr.bf16.mxu0 0
      %4819 = vmatmul.mubr.bf16.gmra.mrb[0].mxu0 %v4553
      %v4820 = vpop.f32.mrb[0].mxu0
      %v4821 = vadd.f32 0.0, %v4820
      %v4822 = vpop.f32.mrb[0].mxu0
      %v4823 = vpop.f32.mrb[0].mxu0
      %v4824 = vadd.f32 0.0, %v4823
      %v4825 = vpop.f32.mrb[0].mxu0
      %4826 = vmatprep.mubr.bf16.mxu0 0
      %4827 = vmatmul.mubr.bf16.gmra.mrb[0].mxu0 %v4556
      %v4828 = vpop.f32.mrb[0].mxu0
      %v4829 = vadd.f32 0.0, %v4828
      %v4830 = vpop.f32.mrb[0].mxu0
      %v4831 = vpop.f32.mrb[0].mxu0
      %v4832 = vadd.f32 0.0, %v4831
      %v4833 = vpop.f32.mrb[0].mxu0
      %4834 = vmatprep.mubr.bf16.mxu0 0
      %4835 = vmatmul.mubr.bf16.gmra.mrb[0].mxu0 %v4559
      %v4836 = vpop.f32.mrb[0].mxu0
      %v4837 = vadd.f32 0.0, %v4836
      %v4838 = vpop.f32.mrb[0].mxu0
      %v4839 = vpop.f32.mrb[0].mxu0
      %v4840 = vadd.f32 0.0, %v4839
      %v4841 = vpop.f32.mrb[0].mxu0
      %4842 = vmatprep.mubr.bf16.mxu0 0
      %4843 = vmatmul.mubr.bf16.gmra.mrb[0].mxu0 %v4562
      %v4844 = vpop.f32.mrb[0].mxu0
      %v4845 = vadd.f32 0.0, %v4844
      %v4846 = vpop.f32.mrb[0].mxu0
      %v4847 = vpop.f32.mrb[0].mxu0
      %v4848 = vadd.f32 0.0, %v4847
      %v4849 = vpop.f32.mrb[0].mxu0
      %4850 = vmatprep.mubr.bf16.mxu0 0
      %4851 = vmatmul.mubr.bf16.gmra.mrb[0].mxu0 %v4565
      %v4852 = vpop.f32.mrb[0].mxu0
      %v4853 = vadd.f32 0.0, %v4852
      %v4854 = vpop.f32.mrb[0].mxu0
      %v4855 = vpop.f32.mrb[0].mxu0
      %v4856 = vadd.f32 0.0, %v4855
      %v4857 = vpop.f32.mrb[0].mxu0
      %4858 = vdwg.mxu0
      %v4859 = vadd.f32 %v4165, %v4605
      %v4860 = vadd.f32 %v4166, %v4608
      %v4861 = vadd.f32 %v4167, %v4613
      %v4862 = vadd.f32 %v4168, %v4616
      %v4863 = vadd.f32 %v4169, %v4621
      %v4864 = vadd.f32 %v4170, %v4624
      %v4865 = vadd.f32 %v4171, %v4629
      %v4866 = vadd.f32 %v4172, %v4632
      %v4867 = vadd.f32 %v4173, %v4637
      %v4868 = vadd.f32 %v4174, %v4640
      %v4869 = vadd.f32 %v4175, %v4645
      %v4870 = vadd.f32 %v4176, %v4648
      %v4871 = vadd.f32 %v4177, %v4653
      %v4872 = vadd.f32 %v4178, %v4656
      %v4873 = vadd.f32 %v4179, %v4661
      %v4874 = vadd.f32 %v4180, %v4664
      %v4875 = vadd.f32 %v4181, %v4669
      %v4876 = vadd.f32 %v4182, %v4672
      %v4877 = vadd.f32 %v4183, %v4677
      %v4878 = vadd.f32 %v4184, %v4680
      %v4879 = vadd.f32 %v4185, %v4685
      %v4880 = vadd.f32 %v4186, %v4688
      %v4881 = vadd.f32 %v4187, %v4693
      %v4882 = vadd.f32 %v4188, %v4696
      %v4883 = vadd.f32 %v4189, %v4701
      %v4884 = vadd.f32 %v4190, %v4704
      %v4885 = vadd.f32 %v4191, %v4709
      %v4886 = vadd.f32 %v4192, %v4712
      %v4887 = vadd.f32 %v4193, %v4717
      %v4888 = vadd.f32 %v4194, %v4720
      %v4889 = vadd.f32 %v4195, %v4725
      %v4890 = vadd.f32 %v4196, %v4728
      %v4891 = vadd.f32 %v4197, %v4733
      %v4892 = vadd.f32 %v4198, %v4736
      %v4893 = vadd.f32 %v4199, %v4741
      %v4894 = vadd.f32 %v4200, %v4744
      %v4895 = vadd.f32 %v4201, %v4749
      %v4896 = vadd.f32 %v4202, %v4752
      %v4897 = vadd.f32 %v4203, %v4757
      %v4898 = vadd.f32 %v4204, %v4760
      %v4899 = vadd.f32 %v4205, %v4765
      %v4900 = vadd.f32 %v4206, %v4768
      %v4901 = vadd.f32 %v4207, %v4773
      %v4902 = vadd.f32 %v4208, %v4776
      %v4903 = vadd.f32 %v4209, %v4781
      %v4904 = vadd.f32 %v4210, %v4784
      %v4905 = vadd.f32 %v4211, %v4789
      %v4906 = vadd.f32 %v4212, %v4792
      %v4907 = vadd.f32 %v4213, %v4797
      %v4908 = vadd.f32 %v4214, %v4800
      %v4909 = vadd.f32 %v4215, %v4805
      %v4910 = vadd.f32 %v4216, %v4808
      %v4911 = vadd.f32 %v4217, %v4813
      %v4912 = vadd.f32 %v4218, %v4816
      %v4913 = vadd.f32 %v4219, %v4821
      %v4914 = vadd.f32 %v4220, %v4824
      %v4915 = vadd.f32 %v4221, %v4829
      %v4916 = vadd.f32 %v4222, %v4832
      %v4917 = vadd.f32 %v4223, %v4837
      %v4918 = vadd.f32 %v4224, %v4840
      %v4919 = vadd.f32 %v4225, %v4845
      %v4920 = vadd.f32 %v4226, %v4848
      %v4921 = vadd.f32 %v4227, %v4853
      %v4922 = vadd.f32 %v4228, %v4856
      %v4923 = vld [vmem:[%s2] sm:$0x1]
      %v4925 = vlaneseq
      %v4926 = vshrl.u32 %v4925, 7
      %v4927 = vsub.s32 0, %v4926
      %v4928 = vrot.slane %v4923, %v4927
      %v4930 = vadd.f32 %v4859, %v4928
      %v4931 = vadd.f32 %v4860, %v4928
      %v4932 = vadd.f32 %v4861, %v4928
      %v4933 = vadd.f32 %v4862, %v4928
      %v4934 = vadd.f32 %v4863, %v4928
      %v4935 = vadd.f32 %v4864, %v4928
      %v4936 = vadd.f32 %v4865, %v4928
      %v4937 = vadd.f32 %v4866, %v4928
      %v4938 = vadd.f32 %v4867, %v4928
      %v4939 = vadd.f32 %v4868, %v4928
      %v4940 = vadd.f32 %v4869, %v4928
      %v4941 = vadd.f32 %v4870, %v4928
      %v4942 = vadd.f32 %v4871, %v4928
      %v4943 = vadd.f32 %v4872, %v4928
      %v4944 = vadd.f32 %v4873, %v4928
      %v4945 = vadd.f32 %v4874, %v4928
      %v4946 = vadd.f32 %v4875, %v4928
      %v4947 = vadd.f32 %v4876, %v4928
      %v4948 = vadd.f32 %v4877, %v4928
      %v4949 = vadd.f32 %v4878, %v4928
      %v4950 = vadd.f32 %v4879, %v4928
      %v4951 = vadd.f32 %v4880, %v4928
      %v4952 = vadd.f32 %v4881, %v4928
      %v4953 = vadd.f32 %v4882, %v4928
      %v4954 = vadd.f32 %v4883, %v4928
      %v4955 = vadd.f32 %v4884, %v4928
      %v4956 = vadd.f32 %v4885, %v4928
      %v4957 = vadd.f32 %v4886, %v4928
      %v4958 = vadd.f32 %v4887, %v4928
      %v4959 = vadd.f32 %v4888, %v4928
      %v4960 = vadd.f32 %v4889, %v4928
      %v4961 = vadd.f32 %v4890, %v4928
      %v4962 = vadd.f32 %v4891, %v4928
      %v4963 = vadd.f32 %v4892, %v4928
      %v4964 = vadd.f32 %v4893, %v4928
      %v4965 = vadd.f32 %v4894, %v4928
      %v4966 = vadd.f32 %v4895, %v4928
      %v4967 = vadd.f32 %v4896, %v4928
      %v4968 = vadd.f32 %v4897, %v4928
      %v4969 = vadd.f32 %v4898, %v4928
      %v4970 = vadd.f32 %v4899, %v4928
      %v4971 = vadd.f32 %v4900, %v4928
      %v4972 = vadd.f32 %v4901, %v4928
      %v4973 = vadd.f32 %v4902, %v4928
      %v4974 = vadd.f32 %v4903, %v4928
      %v4975 = vadd.f32 %v4904, %v4928
      %v4976 = vadd.f32 %v4905, %v4928
      %v4977 = vadd.f32 %v4906, %v4928
      %v4978 = vadd.f32 %v4907, %v4928
      %v4979 = vadd.f32 %v4908, %v4928
      %v4980 = vadd.f32 %v4909, %v4928
      %v4981 = vadd.f32 %v4910, %v4928
      %v4982 = vadd.f32 %v4911, %v4928
      %v4983 = vadd.f32 %v4912, %v4928
      %v4984 = vadd.f32 %v4913, %v4928
      %v4985 = vadd.f32 %v4914, %v4928
      %v4986 = vadd.f32 %v4915, %v4928
      %v4987 = vadd.f32 %v4916, %v4928
      %v4988 = vadd.f32 %v4917, %v4928
      %v4989 = vadd.f32 %v4918, %v4928
      %v4990 = vadd.f32 %v4919, %v4928
      %v4991 = vadd.f32 %v4920, %v4928
      %v4992 = vadd.f32 %v4921, %v4928
      %v4993 = vadd.f32 %v4922, %v4928
      %v4994 = vmax.f32 %v4930, 0.0
      %v4995 = vmax.f32 %v4931, 0.0
      %v4996 = vmax.f32 %v4932, 0.0
      %v4997 = vmax.f32 %v4933, 0.0
      %v4998 = vmax.f32 %v4934, 0.0
      %v4999 = vmax.f32 %v4935, 0.0
      %v5000 = vmax.f32 %v4936, 0.0
      %v5001 = vmax.f32 %v4937, 0.0
      %v5002 = vmax.f32 %v4938, 0.0
      %v5003 = vmax.f32 %v4939, 0.0
      %v5004 = vmax.f32 %v4940, 0.0
      %v5005 = vmax.f32 %v4941, 0.0
      %v5006 = vmax.f32 %v4942, 0.0
      %v5007 = vmax.f32 %v4943, 0.0
      %v5008 = vmax.f32 %v4944, 0.0
      %v5009 = vmax.f32 %v4945, 0.0
      %v5010 = vmax.f32 %v4946, 0.0
      %v5011 = vmax.f32 %v4947, 0.0
      %v5012 = vmax.f32 %v4948, 0.0
      %v5013 = vmax.f32 %v4949, 0.0
      %v5014 = vmax.f32 %v4950, 0.0
      %v5015 = vmax.f32 %v4951, 0.0
      %v5016 = vmax.f32 %v4952, 0.0
      %v5017 = vmax.f32 %v4953, 0.0
      %v5018 = vmax.f32 %v4954, 0.0
      %v5019 = vmax.f32 %v4955, 0.0
      %v5020 = vmax.f32 %v4956, 0.0
      %v5021 = vmax.f32 %v4957, 0.0
      %v5022 = vmax.f32 %v4958, 0.0
      %v5023 = vmax.f32 %v4959, 0.0
      %v5024 = vmax.f32 %v4960, 0.0
      %v5025 = vmax.f32 %v4961, 0.0
      %v5026 = vmax.f32 %v4962, 0.0
      %v5027 = vmax.f32 %v4963, 0.0
      %v5028 = vmax.f32 %v4964, 0.0
      %v5029 = vmax.f32 %v4965, 0.0
      %v5030 = vmax.f32 %v4966, 0.0
      %v5031 = vmax.f32 %v4967, 0.0
      %v5032 = vmax.f32 %v4968, 0.0
      %v5033 = vmax.f32 %v4969, 0.0
      %v5034 = vmax.f32 %v4970, 0.0
      %v5035 = vmax.f32 %v4971, 0.0
      %v5036 = vmax.f32 %v4972, 0.0
      %v5037 = vmax.f32 %v4973, 0.0
      %v5038 = vmax.f32 %v4974, 0.0
      %v5039 = vmax.f32 %v4975, 0.0
      %v5040 = vmax.f32 %v4976, 0.0
      %v5041 = vmax.f32 %v4977, 0.0
      %v5042 = vmax.f32 %v4978, 0.0
      %v5043 = vmax.f32 %v4979, 0.0
      %v5044 = vmax.f32 %v4980, 0.0
      %v5045 = vmax.f32 %v4981, 0.0
      %v5046 = vmax.f32 %v4982, 0.0
      %v5047 = vmax.f32 %v4983, 0.0
      %v5048 = vmax.f32 %v4984, 0.0
      %v5049 = vmax.f32 %v4985, 0.0
      %v5050 = vmax.f32 %v4986, 0.0
      %v5051 = vmax.f32 %v4987, 0.0
      %v5052 = vmax.f32 %v4988, 0.0
      %v5053 = vmax.f32 %v4989, 0.0
      %v5054 = vmax.f32 %v4990, 0.0
      %v5055 = vmax.f32 %v4991, 0.0
      %v5056 = vmax.f32 %v4992, 0.0
      %v5057 = vmax.f32 %v4993, 0.0
      %v5058 = vpack.c.bf16 %v4995, %v4994
      %v5059 = vpack.c.bf16 %v4997, %v4996
      %v5060 = vpack.c.bf16 %v4999, %v4998
      %v5061 = vpack.c.bf16 %v5001, %v5000
      %v5062 = vpack.c.bf16 %v5003, %v5002
      %v5063 = vpack.c.bf16 %v5005, %v5004
      %v5064 = vpack.c.bf16 %v5007, %v5006
      %v5065 = vpack.c.bf16 %v5009, %v5008
      %v5066 = vpack.c.bf16 %v5011, %v5010
      %v5067 = vpack.c.bf16 %v5013, %v5012
      %v5068 = vpack.c.bf16 %v5015, %v5014
      %v5069 = vpack.c.bf16 %v5017, %v5016
      %v5070 = vpack.c.bf16 %v5019, %v5018
      %v5071 = vpack.c.bf16 %v5021, %v5020
      %v5072 = vpack.c.bf16 %v5023, %v5022
      %v5073 = vpack.c.bf16 %v5025, %v5024
      %v5074 = vpack.c.bf16 %v5027, %v5026
      %v5075 = vpack.c.bf16 %v5029, %v5028
      %v5076 = vpack.c.bf16 %v5031, %v5030
      %v5077 = vpack.c.bf16 %v5033, %v5032
      %v5078 = vpack.c.bf16 %v5035, %v5034
      %v5079 = vpack.c.bf16 %v5037, %v5036
      %v5080 = vpack.c.bf16 %v5039, %v5038
      %v5081 = vpack.c.bf16 %v5041, %v5040
      %v5082 = vpack.c.bf16 %v5043, %v5042
      %v5083 = vpack.c.bf16 %v5045, %v5044
      %v5084 = vpack.c.bf16 %v5047, %v5046
      %v5085 = vpack.c.bf16 %v5049, %v5048
      %v5086 = vpack.c.bf16 %v5051, %v5050
      %v5087 = vpack.c.bf16 %v5053, %v5052
      %v5088 = vpack.c.bf16 %v5055, %v5054
      %v5089 = vpack.c.bf16 %v5057, %v5056
      %v5122 = vunpack.c.l.b16 %v5058
      %v5123 = vunpack.c.h.b16 %v5058
      %v5124 = vunpack.c.l.b16 %v5059
      %v5125 = vunpack.c.h.b16 %v5059
      %v5126 = vunpack.c.l.b16 %v5060
      %v5127 = vunpack.c.h.b16 %v5060
      %v5128 = vunpack.c.l.b16 %v5061
      %v5129 = vunpack.c.h.b16 %v5061
      %v5130 = vunpack.c.l.b16 %v5062
      %v5131 = vunpack.c.h.b16 %v5062
      %v5132 = vunpack.c.l.b16 %v5063
      %v5133 = vunpack.c.h.b16 %v5063
      %v5134 = vunpack.c.l.b16 %v5064
      %v5135 = vunpack.c.h.b16 %v5064
      %v5136 = vunpack.c.l.b16 %v5065
      %v5137 = vunpack.c.h.b16 %v5065
      %v5138 = vunpack.c.l.b16 %v5066
      %v5139 = vunpack.c.h.b16 %v5066
      %v5140 = vunpack.c.l.b16 %v5067
      %v5141 = vunpack.c.h.b16 %v5067
      %v5142 = vunpack.c.l.b16 %v5068
      %v5143 = vunpack.c.h.b16 %v5068
      %v5144 = vunpack.c.l.b16 %v5069
      %v5145 = vunpack.c.h.b16 %v5069
      %v5146 = vunpack.c.l.b16 %v5070
      %v5147 = vunpack.c.h.b16 %v5070
      %v5148 = vunpack.c.l.b16 %v5071
      %v5149 = vunpack.c.h.b16 %v5071
      %v5150 = vunpack.c.l.b16 %v5072
      %v5151 = vunpack.c.h.b16 %v5072
      %v5152 = vunpack.c.l.b16 %v5073
      %v5153 = vunpack.c.h.b16 %v5073
      %v5154 = vunpack.c.l.b16 %v5074
      %v5155 = vunpack.c.h.b16 %v5074
      %v5156 = vunpack.c.l.b16 %v5075
      %v5157 = vunpack.c.h.b16 %v5075
      %v5158 = vunpack.c.l.b16 %v5076
      %v5159 = vunpack.c.h.b16 %v5076
      %v5160 = vunpack.c.l.b16 %v5077
      %v5161 = vunpack.c.h.b16 %v5077
      %v5162 = vunpack.c.l.b16 %v5078
      %v5163 = vunpack.c.h.b16 %v5078
      %v5164 = vunpack.c.l.b16 %v5079
      %v5165 = vunpack.c.h.b16 %v5079
      %v5166 = vunpack.c.l.b16 %v5080
      %v5167 = vunpack.c.h.b16 %v5080
      %v5168 = vunpack.c.l.b16 %v5081
      %v5169 = vunpack.c.h.b16 %v5081
      %v5170 = vunpack.c.l.b16 %v5082
      %v5171 = vunpack.c.h.b16 %v5082
      %v5172 = vunpack.c.l.b16 %v5083
      %v5173 = vunpack.c.h.b16 %v5083
      %v5174 = vunpack.c.l.b16 %v5084
      %v5175 = vunpack.c.h.b16 %v5084
      %v5176 = vunpack.c.l.b16 %v5085
      %v5177 = vunpack.c.h.b16 %v5085
      %v5178 = vunpack.c.l.b16 %v5086
      %v5179 = vunpack.c.h.b16 %v5086
      %v5180 = vunpack.c.l.b16 %v5087
      %v5181 = vunpack.c.h.b16 %v5087
      %v5182 = vunpack.c.l.b16 %v5088
      %v5183 = vunpack.c.h.b16 %v5088
      %v5184 = vunpack.c.l.b16 %v5089
      %v5185 = vunpack.c.h.b16 %v5089
      %v5186 = vpack.c.b16 %v5122, %v5122
      %v5187 = vpack.c.b16 %v5123, %v5123
      %v5188 = vpack.c.b16 %v5124, %v5124
      %v5189 = vpack.c.b16 %v5125, %v5125
      %v5190 = vpack.c.b16 %v5126, %v5126
      %v5191 = vpack.c.b16 %v5127, %v5127
      %v5192 = vpack.c.b16 %v5128, %v5128
      %v5193 = vpack.c.b16 %v5129, %v5129
      %v5194 = vpack.c.b16 %v5130, %v5130
      %v5195 = vpack.c.b16 %v5131, %v5131
      %v5196 = vpack.c.b16 %v5132, %v5132
      %v5197 = vpack.c.b16 %v5133, %v5133
      %v5198 = vpack.c.b16 %v5134, %v5134
      %v5199 = vpack.c.b16 %v5135, %v5135
      %v5200 = vpack.c.b16 %v5136, %v5136
      %v5201 = vpack.c.b16 %v5137, %v5137
      %v5202 = vpack.c.b16 %v5138, %v5138
      %v5203 = vpack.c.b16 %v5139, %v5139
      %v5204 = vpack.c.b16 %v5140, %v5140
      %v5205 = vpack.c.b16 %v5141, %v5141
      %v5206 = vpack.c.b16 %v5142, %v5142
      %v5207 = vpack.c.b16 %v5143, %v5143
      %v5208 = vpack.c.b16 %v5144, %v5144
      %v5209 = vpack.c.b16 %v5145, %v5145
      %v5210 = vpack.c.b16 %v5146, %v5146
      %v5211 = vpack.c.b16 %v5147, %v5147
      %v5212 = vpack.c.b16 %v5148, %v5148
      %v5213 = vpack.c.b16 %v5149, %v5149
      %v5214 = vpack.c.b16 %v5150, %v5150
      %v5215 = vpack.c.b16 %v5151, %v5151
      %v5216 = vpack.c.b16 %v5152, %v5152
      %v5217 = vpack.c.b16 %v5153, %v5153
      %v5218 = vpack.c.b16 %v5154, %v5154
      %v5219 = vpack.c.b16 %v5155, %v5155
      %v5220 = vpack.c.b16 %v5156, %v5156
      %v5221 = vpack.c.b16 %v5157, %v5157
      %v5222 = vpack.c.b16 %v5158, %v5158
      %v5223 = vpack.c.b16 %v5159, %v5159
      %v5224 = vpack.c.b16 %v5160, %v5160
      %v5225 = vpack.c.b16 %v5161, %v5161
      %v5226 = vpack.c.b16 %v5162, %v5162
      %v5227 = vpack.c.b16 %v5163, %v5163
      %v5228 = vpack.c.b16 %v5164, %v5164
      %v5229 = vpack.c.b16 %v5165, %v5165
      %v5230 = vpack.c.b16 %v5166, %v5166
      %v5231 = vpack.c.b16 %v5167, %v5167
      %v5232 = vpack.c.b16 %v5168, %v5168
      %v5233 = vpack.c.b16 %v5169, %v5169
      %v5234 = vpack.c.b16 %v5170, %v5170
      %v5235 = vpack.c.b16 %v5171, %v5171
      %v5236 = vpack.c.b16 %v5172, %v5172
      %v5237 = vpack.c.b16 %v5173, %v5173
      %v5238 = vpack.c.b16 %v5174, %v5174
      %v5239 = vpack.c.b16 %v5175, %v5175
      %v5240 = vpack.c.b16 %v5176, %v5176
      %v5241 = vpack.c.b16 %v5177, %v5177
      %v5242 = vpack.c.b16 %v5178, %v5178
      %v5243 = vpack.c.b16 %v5179, %v5179
      %v5244 = vpack.c.b16 %v5180, %v5180
      %v5245 = vpack.c.b16 %v5181, %v5181
      %v5246 = vpack.c.b16 %v5182, %v5182
      %v5247 = vpack.c.b16 %v5183, %v5183
      %v5248 = vpack.c.b16 %v5184, %v5184
      %v5249 = vpack.c.b16 %v5185, %v5185
      %vm5314 = vcmask 519168
      %5315 = vst.msk [vmem:[%s192] sm:$0xf] %vm5314, %v5186
      %5316 = vst.msk [vmem:[%s192 + $0x4] sm:$0xf] %vm5314, %v5187
      %5317 = vst.msk [vmem:[%s192 + $0x8] sm:$0xf] %vm5314, %v5188
      %5318 = vst.msk [vmem:[%s192 + $0xc] sm:$0xf] %vm5314, %v5189
      %5319 = vst.msk [vmem:[%s192 + $0x10] sm:$0xf] %vm5314, %v5190
      %5320 = vst.msk [vmem:[%s192 + $0x14] sm:$0xf] %vm5314, %v5191
      %5321 = vst.msk [vmem:[%s192 + $0x18] sm:$0xf] %vm5314, %v5192
      %5322 = vst.msk [vmem:[%s192 + $0x1c] sm:$0xf] %vm5314, %v5193
      %5323 = vst.msk [vmem:[%s192 + $0x20] sm:$0xf] %vm5314, %v5194
      %5324 = vst.msk [vmem:[%s192 + $0x24] sm:$0xf] %vm5314, %v5195
      %5325 = vst.msk [vmem:[%s192 + $0x28] sm:$0xf] %vm5314, %v5196
      %5326 = vst.msk [vmem:[%s192 + $0x2c] sm:$0xf] %vm5314, %v5197
      %5327 = vst.msk [vmem:[%s192 + $0x30] sm:$0xf] %vm5314, %v5198
      %5328 = vst.msk [vmem:[%s192 + $0x34] sm:$0xf] %vm5314, %v5199
      %5329 = vst.msk [vmem:[%s192 + $0x38] sm:$0xf] %vm5314, %v5200
      %5330 = vst.msk [vmem:[%s192 + $0x3c] sm:$0xf] %vm5314, %v5201
      %5331 = vst.msk [vmem:[%s192 + $0x40] sm:$0xf] %vm5314, %v5202
      %5332 = vst.msk [vmem:[%s192 + $0x44] sm:$0xf] %vm5314, %v5203
      %5333 = vst.msk [vmem:[%s192 + $0x48] sm:$0xf] %vm5314, %v5204
      %5334 = vst.msk [vmem:[%s192 + $0x4c] sm:$0xf] %vm5314, %v5205
      %5335 = vst.msk [vmem:[%s192 + $0x50] sm:$0xf] %vm5314, %v5206
      %5336 = vst.msk [vmem:[%s192 + $0x54] sm:$0xf] %vm5314, %v5207
      %5337 = vst.msk [vmem:[%s192 + $0x58] sm:$0xf] %vm5314, %v5208
      %5338 = vst.msk [vmem:[%s192 + $0x5c] sm:$0xf] %vm5314, %v5209
      %5339 = vst.msk [vmem:[%s192 + $0x60] sm:$0xf] %vm5314, %v5210
      %5340 = vst.msk [vmem:[%s192 + $0x64] sm:$0xf] %vm5314, %v5211
      %5341 = vst.msk [vmem:[%s192 + $0x68] sm:$0xf] %vm5314, %v5212
      %5342 = vst.msk [vmem:[%s192 + $0x6c] sm:$0xf] %vm5314, %v5213
      %5343 = vst.msk [vmem:[%s192 + $0x70] sm:$0xf] %vm5314, %v5214
      %5344 = vst.msk [vmem:[%s192 + $0x74] sm:$0xf] %vm5314, %v5215
      %5345 = vst.msk [vmem:[%s192 + $0x78] sm:$0xf] %vm5314, %v5216
      %5346 = vst.msk [vmem:[%s192 + $0x7c] sm:$0xf] %vm5314, %v5217
      %5347 = vst.msk [vmem:[%s192 + $0x80] sm:$0xf] %vm5314, %v5218
      %5348 = vst.msk [vmem:[%s192 + $0x84] sm:$0xf] %vm5314, %v5219
      %5349 = vst.msk [vmem:[%s192 + $0x88] sm:$0xf] %vm5314, %v5220
      %5350 = vst.msk [vmem:[%s192 + $0x8c] sm:$0xf] %vm5314, %v5221
      %5351 = vst.msk [vmem:[%s192 + $0x90] sm:$0xf] %vm5314, %v5222
      %5352 = vst.msk [vmem:[%s192 + $0x94] sm:$0xf] %vm5314, %v5223
      %5353 = vst.msk [vmem:[%s192 + $0x98] sm:$0xf] %vm5314, %v5224
      %5354 = vst.msk [vmem:[%s192 + $0x9c] sm:$0xf] %vm5314, %v5225
      %5355 = vst.msk [vmem:[%s192 + $0xa0] sm:$0xf] %vm5314, %v5226
      %5356 = vst.msk [vmem:[%s192 + $0xa4] sm:$0xf] %vm5314, %v5227
      %5357 = vst.msk [vmem:[%s192 + $0xa8] sm:$0xf] %vm5314, %v5228
      %5358 = vst.msk [vmem:[%s192 + $0xac] sm:$0xf] %vm5314, %v5229
      %5359 = vst.msk [vmem:[%s192 + $0xb0] sm:$0xf] %vm5314, %v5230
      %5360 = vst.msk [vmem:[%s192 + $0xb4] sm:$0xf] %vm5314, %v5231
      %5361 = vst.msk [vmem:[%s192 + $0xb8] sm:$0xf] %vm5314, %v5232
      %5362 = vst.msk [vmem:[%s192 + $0xbc] sm:$0xf] %vm5314, %v5233
      %5363 = vst.msk [vmem:[%s192 + $0xc0] sm:$0xf] %vm5314, %v5234
      %5364 = vst.msk [vmem:[%s192 + $0xc4] sm:$0xf] %vm5314, %v5235
      %5365 = vst.msk [vmem:[%s192 + $0xc8] sm:$0xf] %vm5314, %v5236
      %5366 = vst.msk [vmem:[%s192 + $0xcc] sm:$0xf] %vm5314, %v5237
      %5367 = vst.msk [vmem:[%s192 + $0xd0] sm:$0xf] %vm5314, %v5238
      %5368 = vst.msk [vmem:[%s192 + $0xd4] sm:$0xf] %vm5314, %v5239
      %5369 = vst.msk [vmem:[%s192 + $0xd8] sm:$0xf] %vm5314, %v5240
      %5370 = vst.msk [vmem:[%s192 + $0xdc] sm:$0xf] %vm5314, %v5241
      %5371 = vst.msk [vmem:[%s192 + $0xe0] sm:$0xf] %vm5314, %v5242
      %5372 = vst.msk [vmem:[%s192 + $0xe4] sm:$0xf] %vm5314, %v5243
      %5373 = vst.msk [vmem:[%s192 + $0xe8] sm:$0xf] %vm5314, %v5244
      %5374 = vst.msk [vmem:[%s192 + $0xec] sm:$0xf] %vm5314, %v5245
      %5375 = vst.msk [vmem:[%s192 + $0xf0] sm:$0xf] %vm5314, %v5246
      %5376 = vst.msk [vmem:[%s192 + $0xf4] sm:$0xf] %vm5314, %v5247
      %5377 = vst.msk [vmem:[%s192 + $0xf8] sm:$0xf] %vm5314, %v5248
      %5378 = vst.msk [vmem:[%s192 + $0xfc] sm:$0xf] %vm5314, %v5249
      %s5379 = smul.u32 64, %s19
      %p5380 = scmp.lt.s32.totalorder %s18, 1
      %s5381 = scalar_select %p5380, %s18, 1
      %p5382 = scmp.lt.s32.totalorder %s5379, 127
      %s5383 = scalar_select %p5382, %s5379, 127
      %s5384 = smul.addr %s5381, 128
      %s5385 = sadd.s32 %s5383, %s5384
      %s5386 = smul.addr %s5385, 4
      %s5387 = scalar_lea.vmem %s3, %s5386
      // Predicated region
      $region33: #{tpu_custom_call.1} parent=31 // pred_check
        %p5388 = pneg %p114
      $region34: #{tpu_custom_call.1} parent=31 // pred_check_branch
        %5390 = sbr.rel (%p5388) target = $region36
      $region35: #{tpu_custom_call.1} parent=31 // pred_region
        %s5391 = smul.u32 64, %s19
      $region36: #{tpu_custom_call.1} parent=31 // pred_fallthru
        _
    $region32: #{tpu_custom_call.1} parent=5 // pred_fallthru
      _
    %p5392 = scmp.le.s32.totalorder 2, %s9
    // Predicated region
    $region37: #{tpu_custom_call.1} parent=5 // pred_check
      %p5393 = pneg %p5392
    $region38: #{tpu_custom_call.1} parent=5 // pred_check_branch
      %5395 = sbr.rel (%p5393) target = $region40
    $region39: #{tpu_custom_call.1} parent=5 // pred_region
      %s5396 = ssub.s32 %s9, 2
      // Predicated region
      $region41: #{tpu_custom_call.1} parent=39 // pred_check
        %p5397 = pneg %p120
      $region42: #{tpu_custom_call.1} parent=39 // pred_check_branch
        %5399 = sbr.rel (%p5397) target = $region44
      $region43: #{tpu_custom_call.1} parent=39 // pred_region
        %s5400 = smul.u32 64, %s21
        %p5401 = scmp.lt.s32.totalorder %s20, 1
        %s5402 = scalar_select %p5401, %s20, 1
        %p5403 = scmp.lt.s32.totalorder %s5400, 127
        %s5404 = scalar_select %p5403, %s5400, 127
        %s5405 = smul.addr %s5402, 128
        %s5406 = sadd.s32 %s5404, %s5405
        %s5407 = smul.addr %s5406, 4
        %s5408 = scalar_lea.vmem %s3, %s5407
      $region44: #{tpu_custom_call.1} parent=39 // pred_fallthru
        _
    $region40: #{tpu_custom_call.1} parent=5 // pred_fallthru
      _
  $region6: #{tpu_custom_call.1} parent=0 // loop_footer
    %s13 = sadd.s32 1, %s9
  $region7: #{tpu_custom_call.1} parent=0 // loop_footer_branch
    %8 = sbr.rel target = $region3
  $region8: #{tpu_custom_call.1} parent=0 // loop_exit
    _

</llo_original>
